<compile_context>
chip_gen: v7x
topology: tpu7x:2x2x1
jax: 0.10.0
libtpu: 0.0.40
codegen_flags: <defaults>
</compile_context>

<pallas_src>
import jax
import jax.numpy as jnp
from jax import lax
from jax.experimental import pallas as pl
from jax.experimental.pallas import tpu as pltpu


def _relu(v):
    return jnp.maximum(v, 0.0)


def _round_up(a, b):
    return ((a + b - 1) // b) * b


def _device_kind():
    try:
        return jax.devices()[0].device_kind.lower()
    except Exception:
        return ""


def _default_elementwise_dtype():
    kind = _device_kind()
    # v6e / v7x VPUs handle bf16 natively; v5e/v5p/v4 (and any non-TPU
    # fallback) keep elementwise math in f32.
    if ("v6" in kind) or ("v7" in kind):
        return jnp.bfloat16
    return jnp.float32


def _tensorcores_per_chip():
    kind = _device_kind()
    # v7x and the v4 / v5p megacore parts have 2 TensorCores per chip.
    if ("v7" in kind) or ("v4" in kind) or ("v5p" in kind):
        return 2
    return 1


def _make_ffnn_kernel(*, depth, block, use_norm, act_fn, compute_dtype,
                      ew_dtype, hidden, eps, max_unroll_depth):
    """Build the fused FFNN kernel for a fixed (static) architecture."""
    inv_h = 1.0 / float(hidden)

    def layer_norm(z, g, be):
        # One-pass LayerNorm: sum(z) and sum(z*z) are two independent XLU
        # reductions (overlap with VPU work); var = E[z^2] - mu^2 avoids a
        # full (tm, H) subtraction pass before squaring.  Stats stay in f32.
        s1 = jnp.sum(z, axis=-1, keepdims=True)
        s2 = jnp.sum(z * z, axis=-1, keepdims=True)
        mu = s1 * inv_h
        var = s2 * inv_h - mu * mu
        inv = lax.rsqrt(var + eps)
        return (z - mu) * (inv * g) + be

    def kernel(x_ref, w0_ref, b0_ref, g0_ref, be0_ref,
               wh_ref, bh_ref, gh_ref, beh_ref,
               wf_ref, bf_ref, o_ref):
        # ---- stem: Linear -> Dropout(identity, eval) -> act -> Norm ----
        z = jnp.dot(x_ref[...], w0_ref[...],
                    preferred_element_type=jnp.float32)
        z = act_fn(z + b0_ref[...])
        if use_norm:
            z = layer_norm(z, g0_ref[...], be0_ref[...])
        h = z.astype(ew_dtype)

        # ---- body: depth x (BasicBlock | Linear -> act -> Norm) ----
        # Works with both static python ints (unrolled) and traced ints
        # (lax.fori_loop) thanks to ref[idx] dynamic leading-axis indexing.
        def layer(l, h):
            if block:
                identity = h
                out = h
                for j in range(2):
                    idx = 2 * l + j
                    zz = jnp.dot(out.astype(compute_dtype), wh_ref[idx],
                                 preferred_element_type=jnp.float32)
                    zz = zz + bh_ref[idx]
                    if use_norm:
                        zz = layer_norm(zz, gh_ref[idx], beh_ref[idx])
                    out = act_fn(zz.astype(ew_dtype))
                return act_fn(out + identity)
            zz = jnp.dot(h.astype(compute_dtype), wh_ref[l],
                         preferred_element_type=jnp.float32)
            zz = act_fn(zz + bh_ref[l])
            if use_norm:
                zz = layer_norm(zz, gh_ref[l], beh_ref[l])
            return zz.astype(ew_dtype)

        if depth <= max_unroll_depth:
            for l in range(depth):                 # trace-time unroll
                h = layer(l, h)
        elif depth > 0:
            h = lax.fori_loop(0, depth, layer, h)  # bounded codegen for deep nets

        # ---- head: Linear(hidden, outputs_padded) -- lane-dense store ----
        y = jnp.dot(h.astype(compute_dtype), wf_ref[...],
                    preferred_element_type=jnp.float32)
        o_ref[...] = (y + bf_ref[...]).astype(o_ref.dtype)

    return kernel


def ffnn_forward(params, x, *, block=True, norm="layer", act_fn=None,
                 compute_dtype=jnp.bfloat16, ew_dtype=None, tm=None,
                 eps=1e-5, out_dtype=jnp.float32, max_unroll_depth=8,
                 single_buffer_weights=None):
    """FFNN forward.  x: (N, inputs).  Returns (N, outputs) in `out_dtype`.

    Dropout is identity (eval mode).  norm='layer' and the Identity
    (bn=False) path run in-kernel.
    """
    if act_fn is None:
        act_fn = _relu
    if norm not in ("layer", None, "none"):
        # TODO(synk): BatchNorm1d (batch / running statistics) not implemented.
        raise NotImplementedError(f"norm={norm!r} not supported in kernel")
    use_norm = (norm == "layer")
    if ew_dtype is None:
        ew_dtype = _default_elementwise_dtype()

    N, inputs_dim = x.shape
    hidden = params["w0"].shape[1]
    outputs_dim = params["wf"].shape[1]
    L = params["wh"].shape[0]
    lpb = 2 if block else 1
    depth = L // lpb

    # ---- row tile (generation-aware) ----
    n8 = _round_up(max(N, 1), 8)
    if tm is None:
        if _tensorcores_per_chip() >= 2:
            # megacore / v7x: >= 4 row tiles so both TensorCores get work.
            tm = min(512, max(8, _round_up(pl.cdiv(N, 4), 8)))
        else:
            # single TC (v5e/v6e): fewer, bigger tiles amortize the ~0.35us
            # fixed per-grid-step pipeline overhead.
            tm = min(1024, n8)
    tm = min(tm, n8)
    if tm < N and tm % 8 != 0:
        raise ValueError("row tile tm must be a multiple of 8 when tiling")

    # ---- lane-dense output: pad head to a multiple of 128 lanes ----
    out_pad = _round_up(outputs_dim, 128)
    wf = params["wf"]
    bf = params["bf"]
    if out_pad != outputs_dim:
        wf = jnp.pad(wf, ((0, 0), (0, out_pad - outputs_dim)))
        bf = jnp.pad(bf, ((0, 0), (0, out_pad - outputs_dim)))

    # bf16 (MXU-native) matmul operands; bias / norm params stay f32.
    x_c = x.astype(compute_dtype)
    w0 = params["w0"].astype(compute_dtype)
    wh = params["wh"].astype(compute_dtype)
    wf = wf.astype(compute_dtype)
    b0, g0, be0 = params["b0"], params["g0"], params["be0"]
    # Per-layer vectors stacked as (L, 1, H) so both static and dynamic
    # (fori_loop) indexing of layer `l` yields a (1, H) row.
    bh = params["bh"].reshape(L, 1, hidden)
    gh = params["gh"].reshape(L, 1, hidden)
    beh = params["beh"].reshape(L, 1, hidden)
    # NOTE: g*/be* are dead (tiny, resident) inputs when use_norm=False.
    operands = (x_c, w0, b0, g0, be0, wh, bh, gh, beh, wf, bf)

    # ---- explicit VMEM budget (default scoped limit is only 16/32 MiB) ----
    def _nbytes(a):
        return int(a.size) * a.dtype.itemsize

    const_bytes = sum(_nbytes(a) for a in operands[1:])
    if single_buffer_weights is None:
        # Single-buffer the constant (resident) weight specs only when they
        # are large enough for double-buffering to matter (v7x: 64 MiB VMEM).
        single_buffer_weights = const_bytes > (8 << 20)
    weight_bufs = 1 if single_buffer_weights else 2
    needed = (weight_bufs * const_bytes
              + 2 * tm * inputs_dim * x_c.dtype.itemsize
              + 2 * tm * out_pad * jnp.dtype(out_dtype).itemsize
              + 10 * tm * hidden * 4)          # live f32 intermediates headroom
    vmem_limit = int(min(max(2 * needed, 32 << 20), 64 << 20))

    kernel = _make_ffnn_kernel(depth=depth, block=block, use_norm=use_norm,
                               act_fn=act_fn, compute_dtype=compute_dtype,
                               ew_dtype=ew_dtype, hidden=hidden, eps=eps,
                               max_unroll_depth=max_unroll_depth)

    def const_spec(shape):
        ndim = len(shape)
        index_map = lambda i: (0,) * ndim
        if single_buffer_weights:
            # Constant block index: one buffer is enough; halves weight VMEM.
            return pl.BlockSpec(shape, index_map, pipeline_mode=pl.Buffered(1))
        return pl.BlockSpec(shape, index_map)

    grid = (pl.cdiv(N, tm),)
    in_specs = [
        pl.BlockSpec((tm, inputs_dim), lambda i: (i, 0)),       # x (row tiled)
        const_spec((inputs_dim, hidden)),                       # w0 (resident)
        const_spec((1, hidden)),                                # b0
        const_spec((1, hidden)),                                # g0
        const_spec((1, hidden)),                                # be0
        const_spec((L, hidden, hidden)),                        # wh (resident)
        const_spec((L, 1, hidden)),                             # bh
        const_spec((L, 1, hidden)),                             # gh
        const_spec((L, 1, hidden)),                             # beh
        const_spec((hidden, out_pad)),                          # wf (resident)
        const_spec((1, out_pad)),                               # bf
    ]
    out_specs = pl.BlockSpec((tm, out_pad), lambda i: (i, 0))

    flops = 2 * N * (inputs_dim * hidden + L * hidden * hidden
                     + hidden * out_pad)
    transcendentals = N * (1 + L) if use_norm else 0
    bytes_accessed = sum(_nbytes(a) for a in operands)
    bytes_accessed += N * out_pad * jnp.dtype(out_dtype).itemsize

    # NOTE on partial last tile (N % tm != 0): out-of-range rows hold
    # unspecified data, but every op (incl. LayerNorm, reducing over hidden
    # only) is row-independent and Pallas masks the output write.
    out_full = pl.pallas_call(
        kernel,
        out_shape=jax.ShapeDtypeStruct((N, out_pad), out_dtype),
        grid_spec=pl.GridSpec(grid=grid, in_specs=in_specs,
                              out_specs=out_specs),
        compiler_params=pltpu.CompilerParams(
            dimension_semantics=("parallel",),
            vmem_limit_bytes=vmem_limit),
        cost_estimate=pl.CostEstimate(flops=flops,
                                      transcendentals=transcendentals,
                                      bytes_accessed=bytes_accessed),
    )(*operands)

    if out_pad != outputs_dim:
        out_full = out_full[:, :outputs_dim]
    return out_full


def init_ffnn_params(key, inputs, depth, hidden, outputs, *, block=True):
    """Deterministic synthetic parameters (biases kept 2-D, hidden layers
    stacked so the wrapper never reshapes per call)."""
    lpb = 2 if block else 1
    L = depth * lpb
    k0, k1, k2 = jax.random.split(key, 3)
    return dict(
        w0=jax.random.normal(k0, (inputs, hidden), jnp.float32)
        / jnp.sqrt(float(inputs)),
        b0=jnp.full((1, hidden), 0.01, jnp.float32),
        g0=jnp.ones((1, hidden), jnp.float32),
        be0=jnp.zeros((1, hidden), jnp.float32),
        wh=jax.random.normal(k1, (L, hidden, hidden), jnp.float32)
        / jnp.sqrt(float(hidden)),
        bh=jnp.full((L, hidden), 0.01, jnp.float32),
        gh=jnp.ones((L, hidden), jnp.float32),
        beh=jnp.zeros((L, hidden), jnp.float32),
        wf=jax.random.normal(k2, (hidden, outputs), jnp.float32)
        / jnp.sqrt(float(hidden)),
        bf=jnp.full((1, outputs), 0.02, jnp.float32),
    )


def ffnn_reference(params, x, *, block=True, norm="layer", act_fn=None,
                   compute_dtype=jnp.bfloat16, ew_dtype=jnp.float32,
                   eps=1e-5):
    """Pure-JAX reference mirroring the kernel math (bf16 dots, f32 accum,
    one-pass LayerNorm, elementwise carry in ew_dtype)."""
    if act_fn is None:
        act_fn = _relu
    use_norm = (norm == "layer")
    hidden = params["w0"].shape[1]
    inv_h = 1.0 / float(hidden)

    def dot(a, w):
        return jnp.dot(a.astype(compute_dtype), w.astype(compute_dtype),
                       preferred_element_type=jnp.float32)

    def ln(z, g, be):
        s1 = jnp.sum(z, axis=-1, keepdims=True)
        s2 = jnp.sum(z * z, axis=-1, keepdims=True)
        mu = s1 * inv_h
        var = s2 * inv_h - mu * mu
        return (z - mu) * (lax.rsqrt(var + eps) * g) + be

    z = act_fn(dot(x, params["w0"]) + params["b0"])
    if use_norm:
        z = ln(z, params["g0"], params["be0"])
    h = z.astype(ew_dtype)

    L = params["wh"].shape[0]
    lpb = 2 if block else 1
    for l in range(L // lpb):
        if block:
            identity = h
            out = h
            for j in range(2):
                idx = 2 * l + j
                zz = dot(out, params["wh"][idx]) + params["bh"][idx][None, :]
                if use_norm:
                    zz = ln(zz, params["gh"][idx][None, :],
                            params["beh"][idx][None, :])
                out = act_fn(zz.astype(ew_dtype))
            h = act_fn(out + identity)
        else:
            zz = act_fn(dot(h, params["wh"][l]) + params["bh"][l][None, :])
            if use_norm:
                zz = ln(zz, params["gh"][l][None, :], params["beh"][l][None, :])
            h = zz.astype(ew_dtype)
    return dot(h, params["wf"]) + params["bf"]


if __name__ == "__main__":
    # Small config consistent with the module:
    #   inputs=16, depth=2, hidden=128, outputs=8, block=True, norm='layer'
    inputs_dim, depth, hidden, outputs_dim = 16, 2, 128, 8
    n_rows = 256

    key = jax.random.PRNGKey(0)
    kx, kp = jax.random.split(key)
    x = jax.random.normal(kx, (n_rows, inputs_dim), dtype=jnp.float32)

    ew = _default_elementwise_dtype()
    tol = dict(atol=3e-2, rtol=3e-2)

    # ---- config 1: BasicBlock body, LayerNorm, unrolled ----
    p1 = init_ffnn_params(kp, inputs_dim, depth, hidden, outputs_dim,
                          block=True)
    out1 = jax.block_until_ready(
        ffnn_forward(p1, x, block=True, norm="layer", ew_dtype=ew))
    ref1 = ffnn_reference(p1, x, block=True, norm="layer", ew_dtype=ew)
    assert out1.shape == (n_rows, outputs_dim)
    err1 = float(jnp.max(jnp.abs(out1 - ref1)))
    assert jnp.allclose(out1, ref1, **tol), f"config1 mismatch, max err {err1}"

    # ---- config 2: same net, forcing the lax.fori_loop (deep-config) body ----
    out2 = jax.block_until_ready(
        ffnn_forward(p1, x, block=True, norm="layer", ew_dtype=ew,
                     max_unroll_depth=0))
    err2 = float(jnp.max(jnp.abs(out2 - ref1)))
    assert jnp.allclose(out2, ref1, **tol), f"config2 mismatch, max err {err2}"

    # ---- config 3: plain Linear->act body, bn=False (Identity norm) ----
    p3 = init_ffnn_params(jax.random.PRNGKey(1), inputs_dim, 3, hidden,
                          outputs_dim, block=False)
    out3 = jax.block_until_ready(
        ffnn_forward(p3, x, block=False, norm="none", ew_dtype=ew))
    ref3 = ffnn_reference(p3, x, block=False, norm="none", ew_dtype=ew)
    err3 = float(jnp.max(jnp.abs(out3 - ref3)))
    assert jnp.allclose(out3, ref3, **tol), f"config3 mismatch, max err {err3}"

    print("KERNEL_OK")
</pallas_src>

<mosaic_0001>
module attributes {stable_mosaic.version = 11 : i64} {
  func.func @kernel(%arg0: i32, %arg1: memref<256x16xbf16, #tpu.memory_space<vmem>>, %arg2: memref<16x128xbf16, #tpu.memory_space<vmem>>, %arg3: memref<1x128xf32, #tpu.memory_space<vmem>>, %arg4: memref<1x128xf32, #tpu.memory_space<vmem>>, %arg5: memref<1x128xf32, #tpu.memory_space<vmem>>, %arg6: memref<4x128x128xbf16, #tpu.memory_space<vmem>>, %arg7: memref<4x1x128xf32, #tpu.memory_space<vmem>>, %arg8: memref<4x1x128xf32, #tpu.memory_space<vmem>>, %arg9: memref<4x1x128xf32, #tpu.memory_space<vmem>>, %arg10: memref<128x128xbf16, #tpu.memory_space<vmem>>, %arg11: memref<1x128xf32, #tpu.memory_space<vmem>>, %arg12: memref<256x128xf32, #tpu.memory_space<vmem>>) attributes {dimension_semantics = [#tpu.dimension_semantics<parallel>], iteration_bounds = array<i64: 1>, scalar_prefetch = 0 : i64, scratch_operands = 0 : i64, tpu.core_type = #tpu.core_type<tc>, window_params = [{transform_indices = @transform_0, window_bounds = array<i64: 256, 16>}, {pipeline_mode = #tpu.pipeline_mode<synchronous>, transform_indices = @transform_1, window_bounds = array<i64: 16, 128>}, {pipeline_mode = #tpu.pipeline_mode<synchronous>, transform_indices = @transform_2, window_bounds = array<i64: 1, 128>}, {pipeline_mode = #tpu.pipeline_mode<synchronous>, transform_indices = @transform_3, window_bounds = array<i64: 1, 128>}, {pipeline_mode = #tpu.pipeline_mode<synchronous>, transform_indices = @transform_4, window_bounds = array<i64: 1, 128>}, {pipeline_mode = #tpu.pipeline_mode<synchronous>, transform_indices = @transform_5, window_bounds = array<i64: 4, 128, 128>}, {pipeline_mode = #tpu.pipeline_mode<synchronous>, transform_indices = @transform_6, window_bounds = array<i64: 4, 1, 128>}, {pipeline_mode = #tpu.pipeline_mode<synchronous>, transform_indices = @transform_7, window_bounds = array<i64: 4, 1, 128>}, {pipeline_mode = #tpu.pipeline_mode<synchronous>, transform_indices = @transform_8, window_bounds = array<i64: 4, 1, 128>}, {pipeline_mode = #tpu.pipeline_mode<synchronous>, transform_indices = @transform_9, window_bounds = array<i64: 128, 128>}, {pipeline_mode = #tpu.pipeline_mode<synchronous>, transform_indices = @transform_10, window_bounds = array<i64: 1, 128>}, {transform_indices = @transform_11, window_bounds = array<i64: 256, 128>}]} {
    %c0 = arith.constant 0 : index
    %c0_0 = arith.constant 0 : index
    %0 = vector.load %arg1[%c0, %c0_0] : memref<256x16xbf16, #tpu.memory_space<vmem>>, vector<256x16xbf16>
    %c0_1 = arith.constant 0 : index
    %c0_2 = arith.constant 0 : index
    %1 = vector.load %arg2[%c0_1, %c0_2] : memref<16x128xbf16, #tpu.memory_space<vmem>>, vector<16x128xbf16>
    %cst = arith.constant dense<0.000000e+00> : vector<256x128xf32>
    %2 = tpu.matmul %0, %1, %cst {dimension_numbers = #tpu.dot_dimension_numbers<[1], [0], [0], [1], [0, 0, 1, 1], [], []>} : vector<256x16xbf16>, vector<16x128xbf16>, vector<256x128xf32> -> vector<256x128xf32>
    %c0_3 = arith.constant 0 : index
    %c0_4 = arith.constant 0 : index
    %3 = vector.load %arg3[%c0_3, %c0_4] : memref<1x128xf32, #tpu.memory_space<vmem>>, vector<1x128xf32>
    %4 = vector.broadcast %3 : vector<1x128xf32> to vector<256x128xf32>
    %5 = arith.addf %2, %4 : vector<256x128xf32>
    %cst_5 = arith.constant 0.000000e+00 : f32
    %6 = vector.broadcast %cst_5 : f32 to vector<256x128xf32>
    %7 = arith.maximumf %5, %6 : vector<256x128xf32>
    %c0_6 = arith.constant 0 : index
    %c0_7 = arith.constant 0 : index
    %8 = vector.load %arg4[%c0_6, %c0_7] : memref<1x128xf32, #tpu.memory_space<vmem>>, vector<1x128xf32>
    %c0_8 = arith.constant 0 : index
    %c0_9 = arith.constant 0 : index
    %9 = vector.load %arg5[%c0_8, %c0_9] : memref<1x128xf32, #tpu.memory_space<vmem>>, vector<1x128xf32>
    %cst_10 = arith.constant dense<0.000000e+00> : vector<256xf32>
    %10 = vector.multi_reduction <add>, %7, %cst_10 [1] : vector<256x128xf32> to vector<256xf32>
    %11 = vector.shape_cast %10 : vector<256xf32> to vector<256x1xf32>
    %12 = arith.mulf %7, %7 : vector<256x128xf32>
    %cst_11 = arith.constant dense<0.000000e+00> : vector<256xf32>
    %13 = vector.multi_reduction <add>, %12, %cst_11 [1] : vector<256x128xf32> to vector<256xf32>
    %14 = vector.shape_cast %13 : vector<256xf32> to vector<256x1xf32>
    %cst_12 = arith.constant 7.812500e-03 : f32
    %15 = vector.broadcast %cst_12 : f32 to vector<256x1xf32>
    %16 = arith.mulf %11, %15 : vector<256x1xf32>
    %cst_13 = arith.constant 7.812500e-03 : f32
    %17 = vector.broadcast %cst_13 : f32 to vector<256x1xf32>
    %18 = arith.mulf %14, %17 : vector<256x1xf32>
    %19 = arith.mulf %16, %16 : vector<256x1xf32>
    %20 = arith.subf %18, %19 : vector<256x1xf32>
    %cst_14 = arith.constant 9.99999974E-6 : f32
    %21 = vector.broadcast %cst_14 : f32 to vector<256x1xf32>
    %22 = arith.addf %20, %21 : vector<256x1xf32>
    %23 = math.rsqrt %22 : vector<256x1xf32>
    %24 = vector.broadcast %16 : vector<256x1xf32> to vector<256x128xf32>
    %25 = arith.subf %7, %24 : vector<256x128xf32>
    %26 = vector.broadcast %23 : vector<256x1xf32> to vector<256x128xf32>
    %27 = vector.broadcast %8 : vector<1x128xf32> to vector<256x128xf32>
    %28 = arith.mulf %26, %27 : vector<256x128xf32>
    %29 = arith.mulf %25, %28 : vector<256x128xf32>
    %30 = vector.broadcast %9 : vector<1x128xf32> to vector<256x128xf32>
    %31 = arith.addf %29, %30 : vector<256x128xf32>
    %32 = arith.truncf %31 : vector<256x128xf32> to vector<256x128xbf16>
    %c0_15 = arith.constant 0 : index
    %c0_16 = arith.constant 0 : index
    %c0_17 = arith.constant 0 : index
    %33 = vector.load %arg6[%c0_15, %c0_16, %c0_17] : memref<4x128x128xbf16, #tpu.memory_space<vmem>>, vector<1x128x128xbf16>
    %34 = vector.shape_cast %33 : vector<1x128x128xbf16> to vector<128x128xbf16>
    %cst_18 = arith.constant dense<0.000000e+00> : vector<256x128xf32>
    %35 = tpu.matmul %32, %34, %cst_18 {dimension_numbers = #tpu.dot_dimension_numbers<[1], [0], [0], [1], [0, 0, 1, 1], [], []>} : vector<256x128xbf16>, vector<128x128xbf16>, vector<256x128xf32> -> vector<256x128xf32>
    %c0_19 = arith.constant 0 : index
    %c0_20 = arith.constant 0 : index
    %c0_21 = arith.constant 0 : index
    %36 = vector.load %arg7[%c0_19, %c0_20, %c0_21] : memref<4x1x128xf32, #tpu.memory_space<vmem>>, vector<1x1x128xf32>
    %37 = vector.shape_cast %36 : vector<1x1x128xf32> to vector<1x128xf32>
    %38 = vector.broadcast %37 : vector<1x128xf32> to vector<256x128xf32>
    %39 = arith.addf %35, %38 : vector<256x128xf32>
    %c0_22 = arith.constant 0 : index
    %c0_23 = arith.constant 0 : index
    %c0_24 = arith.constant 0 : index
    %40 = vector.load %arg8[%c0_22, %c0_23, %c0_24] : memref<4x1x128xf32, #tpu.memory_space<vmem>>, vector<1x1x128xf32>
    %41 = vector.shape_cast %40 : vector<1x1x128xf32> to vector<1x128xf32>
    %c0_25 = arith.constant 0 : index
    %c0_26 = arith.constant 0 : index
    %c0_27 = arith.constant 0 : index
    %42 = vector.load %arg9[%c0_25, %c0_26, %c0_27] : memref<4x1x128xf32, #tpu.memory_space<vmem>>, vector<1x1x128xf32>
    %43 = vector.shape_cast %42 : vector<1x1x128xf32> to vector<1x128xf32>
    %cst_28 = arith.constant dense<0.000000e+00> : vector<256xf32>
    %44 = vector.multi_reduction <add>, %39, %cst_28 [1] : vector<256x128xf32> to vector<256xf32>
    %45 = vector.shape_cast %44 : vector<256xf32> to vector<256x1xf32>
    %46 = arith.mulf %39, %39 : vector<256x128xf32>
    %cst_29 = arith.constant dense<0.000000e+00> : vector<256xf32>
    %47 = vector.multi_reduction <add>, %46, %cst_29 [1] : vector<256x128xf32> to vector<256xf32>
    %48 = vector.shape_cast %47 : vector<256xf32> to vector<256x1xf32>
    %cst_30 = arith.constant 7.812500e-03 : f32
    %49 = vector.broadcast %cst_30 : f32 to vector<256x1xf32>
    %50 = arith.mulf %45, %49 : vector<256x1xf32>
    %cst_31 = arith.constant 7.812500e-03 : f32
    %51 = vector.broadcast %cst_31 : f32 to vector<256x1xf32>
    %52 = arith.mulf %48, %51 : vector<256x1xf32>
    %53 = arith.mulf %50, %50 : vector<256x1xf32>
    %54 = arith.subf %52, %53 : vector<256x1xf32>
    %cst_32 = arith.constant 9.99999974E-6 : f32
    %55 = vector.broadcast %cst_32 : f32 to vector<256x1xf32>
    %56 = arith.addf %54, %55 : vector<256x1xf32>
    %57 = math.rsqrt %56 : vector<256x1xf32>
    %58 = vector.broadcast %50 : vector<256x1xf32> to vector<256x128xf32>
    %59 = arith.subf %39, %58 : vector<256x128xf32>
    %60 = vector.broadcast %57 : vector<256x1xf32> to vector<256x128xf32>
    %61 = vector.broadcast %41 : vector<1x128xf32> to vector<256x128xf32>
    %62 = arith.mulf %60, %61 : vector<256x128xf32>
    %63 = arith.mulf %59, %62 : vector<256x128xf32>
    %64 = vector.broadcast %43 : vector<1x128xf32> to vector<256x128xf32>
    %65 = arith.addf %63, %64 : vector<256x128xf32>
    %cst_33 = arith.constant 0.000000e+00 : f32
    %66 = vector.broadcast %cst_33 : f32 to vector<256x128xf32>
    %67 = arith.maximumf %65, %66 : vector<256x128xf32>
    %68 = arith.truncf %67 : vector<256x128xf32> to vector<256x128xbf16>
    %c1 = arith.constant 1 : index
    %c0_34 = arith.constant 0 : index
    %c0_35 = arith.constant 0 : index
    %69 = vector.load %arg6[%c1, %c0_34, %c0_35] : memref<4x128x128xbf16, #tpu.memory_space<vmem>>, vector<1x128x128xbf16>
    %70 = vector.shape_cast %69 : vector<1x128x128xbf16> to vector<128x128xbf16>
    %cst_36 = arith.constant dense<0.000000e+00> : vector<256x128xf32>
    %71 = tpu.matmul %68, %70, %cst_36 {dimension_numbers = #tpu.dot_dimension_numbers<[1], [0], [0], [1], [0, 0, 1, 1], [], []>} : vector<256x128xbf16>, vector<128x128xbf16>, vector<256x128xf32> -> vector<256x128xf32>
    %c1_37 = arith.constant 1 : index
    %c0_38 = arith.constant 0 : index
    %c0_39 = arith.constant 0 : index
    %72 = vector.load %arg7[%c1_37, %c0_38, %c0_39] : memref<4x1x128xf32, #tpu.memory_space<vmem>>, vector<1x1x128xf32>
    %73 = vector.shape_cast %72 : vector<1x1x128xf32> to vector<1x128xf32>
    %74 = vector.broadcast %73 : vector<1x128xf32> to vector<256x128xf32>
    %75 = arith.addf %71, %74 : vector<256x128xf32>
    %c1_40 = arith.constant 1 : index
    %c0_41 = arith.constant 0 : index
    %c0_42 = arith.constant 0 : index
    %76 = vector.load %arg8[%c1_40, %c0_41, %c0_42] : memref<4x1x128xf32, #tpu.memory_space<vmem>>, vector<1x1x128xf32>
    %77 = vector.shape_cast %76 : vector<1x1x128xf32> to vector<1x128xf32>
    %c1_43 = arith.constant 1 : index
    %c0_44 = arith.constant 0 : index
    %c0_45 = arith.constant 0 : index
    %78 = vector.load %arg9[%c1_43, %c0_44, %c0_45] : memref<4x1x128xf32, #tpu.memory_space<vmem>>, vector<1x1x128xf32>
    %79 = vector.shape_cast %78 : vector<1x1x128xf32> to vector<1x128xf32>
    %cst_46 = arith.constant dense<0.000000e+00> : vector<256xf32>
    %80 = vector.multi_reduction <add>, %75, %cst_46 [1] : vector<256x128xf32> to vector<256xf32>
    %81 = vector.shape_cast %80 : vector<256xf32> to vector<256x1xf32>
    %82 = arith.mulf %75, %75 : vector<256x128xf32>
    %cst_47 = arith.constant dense<0.000000e+00> : vector<256xf32>
    %83 = vector.multi_reduction <add>, %82, %cst_47 [1] : vector<256x128xf32> to vector<256xf32>
    %84 = vector.shape_cast %83 : vector<256xf32> to vector<256x1xf32>
    %cst_48 = arith.constant 7.812500e-03 : f32
    %85 = vector.broadcast %cst_48 : f32 to vector<256x1xf32>
    %86 = arith.mulf %81, %85 : vector<256x1xf32>
    %cst_49 = arith.constant 7.812500e-03 : f32
    %87 = vector.broadcast %cst_49 : f32 to vector<256x1xf32>
    %88 = arith.mulf %84, %87 : vector<256x1xf32>
    %89 = arith.mulf %86, %86 : vector<256x1xf32>
    %90 = arith.subf %88, %89 : vector<256x1xf32>
    %cst_50 = arith.constant 9.99999974E-6 : f32
    %91 = vector.broadcast %cst_50 : f32 to vector<256x1xf32>
    %92 = arith.addf %90, %91 : vector<256x1xf32>
    %93 = math.rsqrt %92 : vector<256x1xf32>
    %94 = vector.broadcast %86 : vector<256x1xf32> to vector<256x128xf32>
    %95 = arith.subf %75, %94 : vector<256x128xf32>
    %96 = vector.broadcast %93 : vector<256x1xf32> to vector<256x128xf32>
    %97 = vector.broadcast %77 : vector<1x128xf32> to vector<256x128xf32>
    %98 = arith.mulf %96, %97 : vector<256x128xf32>
    %99 = arith.mulf %95, %98 : vector<256x128xf32>
    %100 = vector.broadcast %79 : vector<1x128xf32> to vector<256x128xf32>
    %101 = arith.addf %99, %100 : vector<256x128xf32>
    %cst_51 = arith.constant 0.000000e+00 : f32
    %102 = vector.broadcast %cst_51 : f32 to vector<256x128xf32>
    %103 = arith.maximumf %101, %102 : vector<256x128xf32>
    %104 = arith.addf %103, %31 : vector<256x128xf32>
    %cst_52 = arith.constant 0.000000e+00 : f32
    %105 = vector.broadcast %cst_52 : f32 to vector<256x128xf32>
    %106 = arith.maximumf %104, %105 : vector<256x128xf32>
    %107 = arith.truncf %106 : vector<256x128xf32> to vector<256x128xbf16>
    %c2 = arith.constant 2 : index
    %c0_53 = arith.constant 0 : index
    %c0_54 = arith.constant 0 : index
    %108 = vector.load %arg6[%c2, %c0_53, %c0_54] : memref<4x128x128xbf16, #tpu.memory_space<vmem>>, vector<1x128x128xbf16>
    %109 = vector.shape_cast %108 : vector<1x128x128xbf16> to vector<128x128xbf16>
    %cst_55 = arith.constant dense<0.000000e+00> : vector<256x128xf32>
    %110 = tpu.matmul %107, %109, %cst_55 {dimension_numbers = #tpu.dot_dimension_numbers<[1], [0], [0], [1], [0, 0, 1, 1], [], []>} : vector<256x128xbf16>, vector<128x128xbf16>, vector<256x128xf32> -> vector<256x128xf32>
    %c2_56 = arith.constant 2 : index
    %c0_57 = arith.constant 0 : index
    %c0_58 = arith.constant 0 : index
    %111 = vector.load %arg7[%c2_56, %c0_57, %c0_58] : memref<4x1x128xf32, #tpu.memory_space<vmem>>, vector<1x1x128xf32>
    %112 = vector.shape_cast %111 : vector<1x1x128xf32> to vector<1x128xf32>
    %113 = vector.broadcast %112 : vector<1x128xf32> to vector<256x128xf32>
    %114 = arith.addf %110, %113 : vector<256x128xf32>
    %c2_59 = arith.constant 2 : index
    %c0_60 = arith.constant 0 : index
    %c0_61 = arith.constant 0 : index
    %115 = vector.load %arg8[%c2_59, %c0_60, %c0_61] : memref<4x1x128xf32, #tpu.memory_space<vmem>>, vector<1x1x128xf32>
    %116 = vector.shape_cast %115 : vector<1x1x128xf32> to vector<1x128xf32>
    %c2_62 = arith.constant 2 : index
    %c0_63 = arith.constant 0 : index
    %c0_64 = arith.constant 0 : index
    %117 = vector.load %arg9[%c2_62, %c0_63, %c0_64] : memref<4x1x128xf32, #tpu.memory_space<vmem>>, vector<1x1x128xf32>
    %118 = vector.shape_cast %117 : vector<1x1x128xf32> to vector<1x128xf32>
    %cst_65 = arith.constant dense<0.000000e+00> : vector<256xf32>
    %119 = vector.multi_reduction <add>, %114, %cst_65 [1] : vector<256x128xf32> to vector<256xf32>
    %120 = vector.shape_cast %119 : vector<256xf32> to vector<256x1xf32>
    %121 = arith.mulf %114, %114 : vector<256x128xf32>
    %cst_66 = arith.constant dense<0.000000e+00> : vector<256xf32>
    %122 = vector.multi_reduction <add>, %121, %cst_66 [1] : vector<256x128xf32> to vector<256xf32>
    %123 = vector.shape_cast %122 : vector<256xf32> to vector<256x1xf32>
    %cst_67 = arith.constant 7.812500e-03 : f32
    %124 = vector.broadcast %cst_67 : f32 to vector<256x1xf32>
    %125 = arith.mulf %120, %124 : vector<256x1xf32>
    %cst_68 = arith.constant 7.812500e-03 : f32
    %126 = vector.broadcast %cst_68 : f32 to vector<256x1xf32>
    %127 = arith.mulf %123, %126 : vector<256x1xf32>
    %128 = arith.mulf %125, %125 : vector<256x1xf32>
    %129 = arith.subf %127, %128 : vector<256x1xf32>
    %cst_69 = arith.constant 9.99999974E-6 : f32
    %130 = vector.broadcast %cst_69 : f32 to vector<256x1xf32>
    %131 = arith.addf %129, %130 : vector<256x1xf32>
    %132 = math.rsqrt %131 : vector<256x1xf32>
    %133 = vector.broadcast %125 : vector<256x1xf32> to vector<256x128xf32>
    %134 = arith.subf %114, %133 : vector<256x128xf32>
    %135 = vector.broadcast %132 : vector<256x1xf32> to vector<256x128xf32>
    %136 = vector.broadcast %116 : vector<1x128xf32> to vector<256x128xf32>
    %137 = arith.mulf %135, %136 : vector<256x128xf32>
    %138 = arith.mulf %134, %137 : vector<256x128xf32>
    %139 = vector.broadcast %118 : vector<1x128xf32> to vector<256x128xf32>
    %140 = arith.addf %138, %139 : vector<256x128xf32>
    %cst_70 = arith.constant 0.000000e+00 : f32
    %141 = vector.broadcast %cst_70 : f32 to vector<256x128xf32>
    %142 = arith.maximumf %140, %141 : vector<256x128xf32>
    %143 = arith.truncf %142 : vector<256x128xf32> to vector<256x128xbf16>
    %c3 = arith.constant 3 : index
    %c0_71 = arith.constant 0 : index
    %c0_72 = arith.constant 0 : index
    %144 = vector.load %arg6[%c3, %c0_71, %c0_72] : memref<4x128x128xbf16, #tpu.memory_space<vmem>>, vector<1x128x128xbf16>
    %145 = vector.shape_cast %144 : vector<1x128x128xbf16> to vector<128x128xbf16>
    %cst_73 = arith.constant dense<0.000000e+00> : vector<256x128xf32>
    %146 = tpu.matmul %143, %145, %cst_73 {dimension_numbers = #tpu.dot_dimension_numbers<[1], [0], [0], [1], [0, 0, 1, 1], [], []>} : vector<256x128xbf16>, vector<128x128xbf16>, vector<256x128xf32> -> vector<256x128xf32>
    %c3_74 = arith.constant 3 : index
    %c0_75 = arith.constant 0 : index
    %c0_76 = arith.constant 0 : index
    %147 = vector.load %arg7[%c3_74, %c0_75, %c0_76] : memref<4x1x128xf32, #tpu.memory_space<vmem>>, vector<1x1x128xf32>
    %148 = vector.shape_cast %147 : vector<1x1x128xf32> to vector<1x128xf32>
    %149 = vector.broadcast %148 : vector<1x128xf32> to vector<256x128xf32>
    %150 = arith.addf %146, %149 : vector<256x128xf32>
    %c3_77 = arith.constant 3 : index
    %c0_78 = arith.constant 0 : index
    %c0_79 = arith.constant 0 : index
    %151 = vector.load %arg8[%c3_77, %c0_78, %c0_79] : memref<4x1x128xf32, #tpu.memory_space<vmem>>, vector<1x1x128xf32>
    %152 = vector.shape_cast %151 : vector<1x1x128xf32> to vector<1x128xf32>
    %c3_80 = arith.constant 3 : index
    %c0_81 = arith.constant 0 : index
    %c0_82 = arith.constant 0 : index
    %153 = vector.load %arg9[%c3_80, %c0_81, %c0_82] : memref<4x1x128xf32, #tpu.memory_space<vmem>>, vector<1x1x128xf32>
    %154 = vector.shape_cast %153 : vector<1x1x128xf32> to vector<1x128xf32>
    %cst_83 = arith.constant dense<0.000000e+00> : vector<256xf32>
    %155 = vector.multi_reduction <add>, %150, %cst_83 [1] : vector<256x128xf32> to vector<256xf32>
    %156 = vector.shape_cast %155 : vector<256xf32> to vector<256x1xf32>
    %157 = arith.mulf %150, %150 : vector<256x128xf32>
    %cst_84 = arith.constant dense<0.000000e+00> : vector<256xf32>
    %158 = vector.multi_reduction <add>, %157, %cst_84 [1] : vector<256x128xf32> to vector<256xf32>
    %159 = vector.shape_cast %158 : vector<256xf32> to vector<256x1xf32>
    %cst_85 = arith.constant 7.812500e-03 : f32
    %160 = vector.broadcast %cst_85 : f32 to vector<256x1xf32>
    %161 = arith.mulf %156, %160 : vector<256x1xf32>
    %cst_86 = arith.constant 7.812500e-03 : f32
    %162 = vector.broadcast %cst_86 : f32 to vector<256x1xf32>
    %163 = arith.mulf %159, %162 : vector<256x1xf32>
    %164 = arith.mulf %161, %161 : vector<256x1xf32>
    %165 = arith.subf %163, %164 : vector<256x1xf32>
    %cst_87 = arith.constant 9.99999974E-6 : f32
    %166 = vector.broadcast %cst_87 : f32 to vector<256x1xf32>
    %167 = arith.addf %165, %166 : vector<256x1xf32>
    %168 = math.rsqrt %167 : vector<256x1xf32>
    %169 = vector.broadcast %161 : vector<256x1xf32> to vector<256x128xf32>
    %170 = arith.subf %150, %169 : vector<256x128xf32>
    %171 = vector.broadcast %168 : vector<256x1xf32> to vector<256x128xf32>
    %172 = vector.broadcast %152 : vector<1x128xf32> to vector<256x128xf32>
    %173 = arith.mulf %171, %172 : vector<256x128xf32>
    %174 = arith.mulf %170, %173 : vector<256x128xf32>
    %175 = vector.broadcast %154 : vector<1x128xf32> to vector<256x128xf32>
    %176 = arith.addf %174, %175 : vector<256x128xf32>
    %cst_88 = arith.constant 0.000000e+00 : f32
    %177 = vector.broadcast %cst_88 : f32 to vector<256x128xf32>
    %178 = arith.maximumf %176, %177 : vector<256x128xf32>
    %179 = arith.addf %178, %106 : vector<256x128xf32>
    %cst_89 = arith.constant 0.000000e+00 : f32
    %180 = vector.broadcast %cst_89 : f32 to vector<256x128xf32>
    %181 = arith.maximumf %179, %180 : vector<256x128xf32>
    %182 = arith.truncf %181 : vector<256x128xf32> to vector<256x128xbf16>
    %c0_90 = arith.constant 0 : index
    %c0_91 = arith.constant 0 : index
    %183 = vector.load %arg10[%c0_90, %c0_91] : memref<128x128xbf16, #tpu.memory_space<vmem>>, vector<128x128xbf16>
    %cst_92 = arith.constant dense<0.000000e+00> : vector<256x128xf32>
    %184 = tpu.matmul %182, %183, %cst_92 {dimension_numbers = #tpu.dot_dimension_numbers<[1], [0], [0], [1], [0, 0, 1, 1], [], []>} : vector<256x128xbf16>, vector<128x128xbf16>, vector<256x128xf32> -> vector<256x128xf32>
    %c0_93 = arith.constant 0 : index
    %c0_94 = arith.constant 0 : index
    %185 = vector.load %arg11[%c0_93, %c0_94] : memref<1x128xf32, #tpu.memory_space<vmem>>, vector<1x128xf32>
    %186 = vector.broadcast %185 : vector<1x128xf32> to vector<256x128xf32>
    %187 = arith.addf %184, %186 : vector<256x128xf32>
    %c0_95 = arith.constant 0 : index
    %c0_96 = arith.constant 0 : index
    %188 = vector.load %arg12[%c0_95, %c0_96] : memref<256x128xf32, #tpu.memory_space<vmem>>, vector<256x128xf32>
    tpu.vector_store %arg12[%c0_95, %c0_96], %187 {strides = array<i32>} : memref<256x128xf32, #tpu.memory_space<vmem>>, vector<256x128xf32>,
    return
  }
  func.func @transform_0(%arg0: i32) -> (i32, i32) {
    %c0_i32 = arith.constant 0 : i32
    %c0_i32_0 = arith.constant 0 : i32
    return %arg0, %c0_i32 : i32, i32
  }
  func.func @transform_1(%arg0: i32) -> (i32, i32) {
    %c0_i32 = arith.constant 0 : i32
    %c0_i32_0 = arith.constant 0 : i32
    %c0_i32_1 = arith.constant 0 : i32
    return %c0_i32, %c0_i32_0 : i32, i32
  }
  func.func @transform_2(%arg0: i32) -> (i32, i32) {
    %c0_i32 = arith.constant 0 : i32
    %c0_i32_0 = arith.constant 0 : i32
    %c0_i32_1 = arith.constant 0 : i32
    return %c0_i32, %c0_i32_0 : i32, i32
  }
  func.func @transform_3(%arg0: i32) -> (i32, i32) {
    %c0_i32 = arith.constant 0 : i32
    %c0_i32_0 = arith.constant 0 : i32
    %c0_i32_1 = arith.constant 0 : i32
    return %c0_i32, %c0_i32_0 : i32, i32
  }
  func.func @transform_4(%arg0: i32) -> (i32, i32) {
    %c0_i32 = arith.constant 0 : i32
    %c0_i32_0 = arith.constant 0 : i32
    %c0_i32_1 = arith.constant 0 : i32
    return %c0_i32, %c0_i32_0 : i32, i32
  }
  func.func @transform_5(%arg0: i32) -> (i32, i32, i32) {
    %c0_i32 = arith.constant 0 : i32
    %c0_i32_0 = arith.constant 0 : i32
    %c0_i32_1 = arith.constant 0 : i32
    %c0_i32_2 = arith.constant 0 : i32
    return %c0_i32, %c0_i32_0, %c0_i32_1 : i32, i32, i32
  }
  func.func @transform_6(%arg0: i32) -> (i32, i32, i32) {
    %c0_i32 = arith.constant 0 : i32
    %c0_i32_0 = arith.constant 0 : i32
    %c0_i32_1 = arith.constant 0 : i32
    %c0_i32_2 = arith.constant 0 : i32
    return %c0_i32, %c0_i32_0, %c0_i32_1 : i32, i32, i32
  }
  func.func @transform_7(%arg0: i32) -> (i32, i32, i32) {
    %c0_i32 = arith.constant 0 : i32
    %c0_i32_0 = arith.constant 0 : i32
    %c0_i32_1 = arith.constant 0 : i32
    %c0_i32_2 = arith.constant 0 : i32
    return %c0_i32, %c0_i32_0, %c0_i32_1 : i32, i32, i32
  }
  func.func @transform_8(%arg0: i32) -> (i32, i32, i32) {
    %c0_i32 = arith.constant 0 : i32
    %c0_i32_0 = arith.constant 0 : i32
    %c0_i32_1 = arith.constant 0 : i32
    %c0_i32_2 = arith.constant 0 : i32
    return %c0_i32, %c0_i32_0, %c0_i32_1 : i32, i32, i32
  }
  func.func @transform_9(%arg0: i32) -> (i32, i32) {
    %c0_i32 = arith.constant 0 : i32
    %c0_i32_0 = arith.constant 0 : i32
    %c0_i32_1 = arith.constant 0 : i32
    return %c0_i32, %c0_i32_0 : i32, i32
  }
  func.func @transform_10(%arg0: i32) -> (i32, i32) {
    %c0_i32 = arith.constant 0 : i32
    %c0_i32_0 = arith.constant 0 : i32
    %c0_i32_1 = arith.constant 0 : i32
    return %c0_i32, %c0_i32_0 : i32, i32
  }
  func.func @transform_11(%arg0: i32) -> (i32, i32) {
    %c0_i32 = arith.constant 0 : i32
    %c0_i32_0 = arith.constant 0 : i32
    return %arg0, %c0_i32 : i32, i32
  }
}

</mosaic_0001>

<llo_original>
// kernel: tpu_custom_call.1
$region0: #{tpu_custom_call.1}
  #allocation0 [shape = 'u32[]', space=smem, size = 0x4, offset = 0x4, fixed_abs, tag = 'smem constant byte address 0x4 - core index']
  #allocation1 [shape = 'u32[144,128]{1,0:T(1,128)}', space=vmem, size = 0x12000, scoped, tag = 'internal scratch']
  %s0 = inlined_call_operand.vmem [shape: bf16[256,16], index: 0, kind: input, shape index: {}]
  %s1 = inlined_call_operand.vmem [shape: bf16[16,128], index: 1, kind: input, shape index: {}]
  %s2 = inlined_call_operand.vmem [shape: f32[1,128], index: 2, kind: input, shape index: {}]
  %s3 = inlined_call_operand.vmem [shape: f32[1,128], index: 3, kind: input, shape index: {}]
  %s4 = inlined_call_operand.vmem [shape: f32[1,128], index: 4, kind: input, shape index: {}]
  %s5 = inlined_call_operand.hbm [shape: bf16[4,128,128], index: 5, kind: input, shape index: {}]
  %s6 = inlined_call_operand.vmem [shape: f32[4,1,128], index: 6, kind: input, shape index: {}]
  %s7 = inlined_call_operand.vmem [shape: f32[4,1,128], index: 7, kind: input, shape index: {}]
  %s8 = inlined_call_operand.vmem [shape: f32[4,1,128], index: 8, kind: input, shape index: {}]
  %s9 = inlined_call_operand.vmem [shape: bf16[128,128], index: 9, kind: input, shape index: {}]
  %s10 = inlined_call_operand.vmem [shape: f32[1,128], index: 10, kind: input, shape index: {}]
  %s11 = inlined_call_operand.hbm [shape: f32[256,128], index: 11, kind: output, shape index: {}]
  %s12 = sld [smem:[#allocation0]]
  $region58: #{tpu_custom_call.1} parent=0
    _
  %s14 = ssub.s32 1, %s12
  %s15 = scalar_select 0, %s14, %s12
  $region1: #{tpu_custom_call.1} parent=0
    #allocation2 [shape = 'u8[131072]{0}', space=vmem, size = 0x20000, scoped, tag = 'input window, operand 5, single buffered']
    #allocation3 [shape = 's32[1]{0}', space=sflag, size = 0x4, scoped, tag = 'scoped memory for tpu_custom_call.1']
    #allocation4 [shape = 's32[1]{0}', space=sflag, size = 0x4, scoped, tag = 'scoped memory for tpu_custom_call.1']
    #allocation5 [shape = 'u8[131072]{0}', space=vmem, size = 0x20000, scoped, tag = 'output window, operand 0, single buffered']
    %16 = vsyncpa [#allocation3], 0
    %17 = vsyncpa [#allocation4], 0
    // Predicated region
    $region2: #{tpu_custom_call.1} parent=1 // pred_check
      _
    $region3: #{tpu_custom_call.1} parent=1 // pred_check_branch
      %19 = sbr.rel (0) target = $region5
    $region4: #{tpu_custom_call.1} parent=1 // pred_region
      _
    $region5: #{tpu_custom_call.1} parent=1 // pred_fallthru
      _
    // Predicated region
    $region6: #{tpu_custom_call.1} parent=1 // pred_check
      _
    $region7: #{tpu_custom_call.1} parent=1 // pred_check_branch
      %21 = sbr.rel (0) target = $region9
    $region8: #{tpu_custom_call.1} parent=1 // pred_region
      _
    $region9: #{tpu_custom_call.1} parent=1 // pred_fallthru
      _
    // Predicated region
    $region10: #{tpu_custom_call.1} parent=1 // pred_check
      _
    $region11: #{tpu_custom_call.1} parent=1 // pred_check_branch
      %23 = sbr.rel (0) target = $region13
    $region12: #{tpu_custom_call.1} parent=1 // pred_region
      _
    $region13: #{tpu_custom_call.1} parent=1 // pred_fallthru
      _
    // Predicated region
    $region14: #{tpu_custom_call.1} parent=1 // pred_check
      _
    $region15: #{tpu_custom_call.1} parent=1 // pred_check_branch
      %25 = sbr.rel (0) target = $region17
    $region16: #{tpu_custom_call.1} parent=1 // pred_region
      _
    $region17: #{tpu_custom_call.1} parent=1 // pred_fallthru
      _
    // Predicated region
    $region18: #{tpu_custom_call.1} parent=1 // pred_check
      _
    $region19: #{tpu_custom_call.1} parent=1 // pred_check_branch
      %27 = sbr.rel (0) target = $region21
    $region20: #{tpu_custom_call.1} parent=1 // pred_region
      _
    $region21: #{tpu_custom_call.1} parent=1 // pred_fallthru
      _
    // Predicated region
    $region22: #{tpu_custom_call.1} parent=1 // pred_check
      _
    $region23: #{tpu_custom_call.1} parent=1 // pred_check_branch
      %29 = sbr.rel (0) target = $region25
    $region24: #{tpu_custom_call.1} parent=1 // pred_region
      %s31 = ssub.s32 4096, 4096
      %32 = vsyncadd [#allocation3], %s31
      %s33 = sshll.u32 [#allocation2], 4
      %s34 = int_to_ptr.vmem [resolvable:$true] %s33
      %39 = dma.hbm_to_vmem [thread:$0]  %s5, 4096, %s34, [#allocation3], 64, 64, 4
    $region25: #{tpu_custom_call.1} parent=1 // pred_fallthru
      _
    // Predicated region
    $region26: #{tpu_custom_call.1} parent=1 // pred_check
      _
    $region27: #{tpu_custom_call.1} parent=1 // pred_check_branch
      %41 = sbr.rel (0) target = $region29
    $region28: #{tpu_custom_call.1} parent=1 // pred_region
      _
    $region29: #{tpu_custom_call.1} parent=1 // pred_fallthru
      _
    // Predicated region
    $region30: #{tpu_custom_call.1} parent=1 // pred_check
      _
    $region31: #{tpu_custom_call.1} parent=1 // pred_check_branch
      %43 = sbr.rel (0) target = $region33
    $region32: #{tpu_custom_call.1} parent=1 // pred_region
      _
    $region33: #{tpu_custom_call.1} parent=1 // pred_fallthru
      _
    // Predicated region
    $region34: #{tpu_custom_call.1} parent=1 // pred_check
      _
    $region35: #{tpu_custom_call.1} parent=1 // pred_check_branch
      %45 = sbr.rel (0) target = $region37
    $region36: #{tpu_custom_call.1} parent=1 // pred_region
      _
    $region37: #{tpu_custom_call.1} parent=1 // pred_fallthru
      _
    // Predicated region
    $region38: #{tpu_custom_call.1} parent=1 // pred_check
      _
    $region39: #{tpu_custom_call.1} parent=1 // pred_check_branch
      %47 = sbr.rel (0) target = $region41
    $region40: #{tpu_custom_call.1} parent=1 // pred_region
      _
    $region41: #{tpu_custom_call.1} parent=1 // pred_fallthru
      _
    // Predicated region
    $region42: #{tpu_custom_call.1} parent=1 // pred_check
      _
    $region43: #{tpu_custom_call.1} parent=1 // pred_check_branch
      %49 = sbr.rel (0) target = $region45
    $region44: #{tpu_custom_call.1} parent=1 // pred_region
      _
    $region45: #{tpu_custom_call.1} parent=1 // pred_fallthru
      _
    // Predicated region
    $region46: #{tpu_custom_call.1} parent=1 // pred_check
      _
    $region47: #{tpu_custom_call.1} parent=1 // pred_check_branch
      %51 = sbr.rel (0) target = $region49
    $region48: #{tpu_custom_call.1} parent=1 // pred_region
      %52 = dma.done [#allocation3], 4096
    $region49: #{tpu_custom_call.1} parent=1 // pred_fallthru
      _
    %v54 = vld [vmem:[%s0] sm:$0xf]
    %v55 = vld [vmem:[%s0 + $0x4] sm:$0xf]
    %v56 = vld [vmem:[%s0 + $0x8] sm:$0xf]
    %v57 = vld [vmem:[%s0 + $0xc] sm:$0xf]
    %v58 = vld [vmem:[%s0 + $0x10] sm:$0xf]
    %v59 = vld [vmem:[%s0 + $0x14] sm:$0xf]
    %v60 = vld [vmem:[%s0 + $0x18] sm:$0xf]
    %v61 = vld [vmem:[%s0 + $0x1c] sm:$0xf]
    %v62 = vld [vmem:[%s0 + $0x20] sm:$0xf]
    %v63 = vld [vmem:[%s0 + $0x24] sm:$0xf]
    %v64 = vld [vmem:[%s0 + $0x28] sm:$0xf]
    %v65 = vld [vmem:[%s0 + $0x2c] sm:$0xf]
    %v66 = vld [vmem:[%s0 + $0x30] sm:$0xf]
    %v67 = vld [vmem:[%s0 + $0x34] sm:$0xf]
    %v68 = vld [vmem:[%s0 + $0x38] sm:$0xf]
    %v69 = vld [vmem:[%s0 + $0x3c] sm:$0xf]
    %v70 = vld [vmem:[%s0 + $0x40] sm:$0xf]
    %v71 = vld [vmem:[%s0 + $0x44] sm:$0xf]
    %v72 = vld [vmem:[%s0 + $0x48] sm:$0xf]
    %v73 = vld [vmem:[%s0 + $0x4c] sm:$0xf]
    %v74 = vld [vmem:[%s0 + $0x50] sm:$0xf]
    %v75 = vld [vmem:[%s0 + $0x54] sm:$0xf]
    %v76 = vld [vmem:[%s0 + $0x58] sm:$0xf]
    %v77 = vld [vmem:[%s0 + $0x5c] sm:$0xf]
    %v78 = vld [vmem:[%s0 + $0x60] sm:$0xf]
    %v79 = vld [vmem:[%s0 + $0x64] sm:$0xf]
    %v80 = vld [vmem:[%s0 + $0x68] sm:$0xf]
    %v81 = vld [vmem:[%s0 + $0x6c] sm:$0xf]
    %v82 = vld [vmem:[%s0 + $0x70] sm:$0xf]
    %v83 = vld [vmem:[%s0 + $0x74] sm:$0xf]
    %v84 = vld [vmem:[%s0 + $0x78] sm:$0xf]
    %v85 = vld [vmem:[%s0 + $0x7c] sm:$0xf]
    %v86 = vld [vmem:[%s1] sm:$0xf]
    %v87 = vld [vmem:[%s1 + $0x4] sm:$0xf]
    %v88 = vld [vmem:[%s2] sm:$0x1]
    %v90 = vlaneseq
    %v91 = vshrl.u32 %v90, 7
    %v92 = vsub.s32 0, %v91
    %v93 = vrot.slane %v88, %v92
    %v127 = vunpack.c.l.b16 %v54
    %v128 = vunpack.c.l.b16 %v55
    %v129 = vunpack.c.l.b16 %v56
    %v130 = vunpack.c.l.b16 %v57
    %v131 = vunpack.c.l.b16 %v58
    %v132 = vunpack.c.l.b16 %v59
    %v133 = vunpack.c.l.b16 %v60
    %v134 = vunpack.c.l.b16 %v61
    %v135 = vunpack.c.l.b16 %v62
    %v136 = vunpack.c.l.b16 %v63
    %v137 = vunpack.c.l.b16 %v64
    %v138 = vunpack.c.l.b16 %v65
    %v139 = vunpack.c.l.b16 %v66
    %v140 = vunpack.c.l.b16 %v67
    %v141 = vunpack.c.l.b16 %v68
    %v142 = vunpack.c.l.b16 %v69
    %v143 = vunpack.c.l.b16 %v70
    %v144 = vunpack.c.l.b16 %v71
    %v145 = vunpack.c.l.b16 %v72
    %v146 = vunpack.c.l.b16 %v73
    %v147 = vunpack.c.l.b16 %v74
    %v148 = vunpack.c.l.b16 %v75
    %v149 = vunpack.c.l.b16 %v76
    %v150 = vunpack.c.l.b16 %v77
    %v151 = vunpack.c.l.b16 %v78
    %v152 = vunpack.c.l.b16 %v79
    %v153 = vunpack.c.l.b16 %v80
    %v154 = vunpack.c.l.b16 %v81
    %v155 = vunpack.c.l.b16 %v82
    %v156 = vunpack.c.l.b16 %v83
    %v157 = vunpack.c.l.b16 %v84
    %v158 = vunpack.c.l.b16 %v85
    %v159 = vpack.c.b16 %v128, %v127
    %v160 = vpack.c.b16 %v130, %v129
    %v161 = vpack.c.b16 %v132, %v131
    %v162 = vpack.c.b16 %v134, %v133
    %v163 = vpack.c.b16 %v136, %v135
    %v164 = vpack.c.b16 %v138, %v137
    %v165 = vpack.c.b16 %v140, %v139
    %v166 = vpack.c.b16 %v142, %v141
    %v167 = vpack.c.b16 %v144, %v143
    %v168 = vpack.c.b16 %v146, %v145
    %v169 = vpack.c.b16 %v148, %v147
    %v170 = vpack.c.b16 %v150, %v149
    %v171 = vpack.c.b16 %v152, %v151
    %v172 = vpack.c.b16 %v154, %v153
    %v173 = vpack.c.b16 %v156, %v155
    %v174 = vpack.c.b16 %v158, %v157
    %v177 = vunpack.c.l.b16 %v86
    %v178 = vunpack.c.l.b16 %v87
    %v179 = vpack.c.b16 %v178, %v177
    %vm181 = vcmask 130048
    %v183 = vsel %vm181, %v159, 0
    %v186 = vsel %vm181, %v160, 0
    %v189 = vsel %vm181, %v161, 0
    %v192 = vsel %vm181, %v162, 0
    %v195 = vsel %vm181, %v163, 0
    %v198 = vsel %vm181, %v164, 0
    %v201 = vsel %vm181, %v165, 0
    %v204 = vsel %vm181, %v166, 0
    %v207 = vsel %vm181, %v167, 0
    %v210 = vsel %vm181, %v168, 0
    %v213 = vsel %vm181, %v169, 0
    %v216 = vsel %vm181, %v170, 0
    %v219 = vsel %vm181, %v171, 0
    %v222 = vsel %vm181, %v172, 0
    %v225 = vsel %vm181, %v173, 0
    %v228 = vsel %vm181, %v174, 0
    %230 = vmatprep.subr.bf16.mxu0 0
    %231 = vmatpush1.bf16.msra.mxu0 %v179
    %232 = vmatprep.subr.bf16.mxu0 0
    %233 = vmatpush1.bf16.msra.mxu0 0
    %234 = vmatprep.subr.bf16.mxu0 0
    %235 = vmatpush1.bf16.msra.mxu0 0
    %236 = vmatprep.subr.bf16.mxu0 0
    %237 = vmatpush1.bf16.msra.mxu0 0
    %238 = vmatprep.subr.bf16.mxu0 0
    %239 = vmatpush1.bf16.msra.mxu0 0
    %240 = vmatprep.subr.bf16.mxu0 0
    %241 = vmatpush1.bf16.msra.mxu0 0
    %242 = vmatprep.subr.bf16.mxu0 0
    %243 = vmatpush1.bf16.msra.mxu0 0
    %244 = vmatprep.subr.bf16.mxu0 0
    %245 = vmatpush1.bf16.msra.mxu0 0
    %246 = vmatprep.subr.bf16.mxu0 0
    %247 = vmatpush1.bf16.msra.mxu0 0
    %248 = vmatprep.subr.bf16.mxu0 0
    %249 = vmatpush1.bf16.msra.mxu0 0
    %250 = vmatprep.subr.bf16.mxu0 0
    %251 = vmatpush1.bf16.msra.mxu0 0
    %252 = vmatprep.subr.bf16.mxu0 0
    %253 = vmatpush1.bf16.msra.mxu0 0
    %254 = vmatprep.subr.bf16.mxu0 0
    %255 = vmatpush1.bf16.msra.mxu0 0
    %256 = vmatprep.subr.bf16.mxu0 0
    %257 = vmatpush1.bf16.msra.mxu0 0
    %258 = vmatprep.subr.bf16.mxu0 0
    %259 = vmatpush1.bf16.msra.mxu0 0
    %260 = vmatprep.subr.bf16.mxu0 0
    %261 = vmatpush1.bf16.msra.mxu0 0
    %262 = vmatprep.mubr.bf16.mxu0 0
    %263 = vmatmul.mubr.bf16.gmra.mrb[0].mxu0 %v183
    %v264 = vpop.f32.mrb[0].mxu0
    %v265 = vadd.f32 %v93, %v264
    %v266 = vpop.f32.mrb[0].mxu0
    %v267 = vpop.f32.mrb[0].mxu0
    %v268 = vadd.f32 %v93, %v267
    %v269 = vpop.f32.mrb[0].mxu0
    %270 = vmatprep.mubr.bf16.mxu0 0
    %271 = vmatmul.mubr.bf16.gmra.mrb[0].mxu0 %v186
    %v272 = vpop.f32.mrb[0].mxu0
    %v273 = vadd.f32 %v93, %v272
    %v274 = vpop.f32.mrb[0].mxu0
    %v275 = vpop.f32.mrb[0].mxu0
    %v276 = vadd.f32 %v93, %v275
    %v277 = vpop.f32.mrb[0].mxu0
    %278 = vmatprep.mubr.bf16.mxu0 0
    %279 = vmatmul.mubr.bf16.gmra.mrb[0].mxu0 %v189
    %v280 = vpop.f32.mrb[0].mxu0
    %v281 = vadd.f32 %v93, %v280
    %v282 = vpop.f32.mrb[0].mxu0
    %v283 = vpop.f32.mrb[0].mxu0
    %v284 = vadd.f32 %v93, %v283
    %v285 = vpop.f32.mrb[0].mxu0
    %286 = vmatprep.mubr.bf16.mxu0 0
    %287 = vmatmul.mubr.bf16.gmra.mrb[0].mxu0 %v192
    %v288 = vpop.f32.mrb[0].mxu0
    %v289 = vadd.f32 %v93, %v288
    %v290 = vpop.f32.mrb[0].mxu0
    %v291 = vpop.f32.mrb[0].mxu0
    %v292 = vadd.f32 %v93, %v291
    %v293 = vpop.f32.mrb[0].mxu0
    %294 = vmatprep.mubr.bf16.mxu0 0
    %295 = vmatmul.mubr.bf16.gmra.mrb[0].mxu0 %v195
    %v296 = vpop.f32.mrb[0].mxu0
    %v297 = vadd.f32 %v93, %v296
    %v298 = vpop.f32.mrb[0].mxu0
    %v299 = vpop.f32.mrb[0].mxu0
    %v300 = vadd.f32 %v93, %v299
    %v301 = vpop.f32.mrb[0].mxu0
    %302 = vmatprep.mubr.bf16.mxu0 0
    %303 = vmatmul.mubr.bf16.gmra.mrb[0].mxu0 %v198
    %v304 = vpop.f32.mrb[0].mxu0
    %v305 = vadd.f32 %v93, %v304
    %v306 = vpop.f32.mrb[0].mxu0
    %v307 = vpop.f32.mrb[0].mxu0
    %v308 = vadd.f32 %v93, %v307
    %v309 = vpop.f32.mrb[0].mxu0
    %310 = vmatprep.mubr.bf16.mxu0 0
    %311 = vmatmul.mubr.bf16.gmra.mrb[0].mxu0 %v201
    %v312 = vpop.f32.mrb[0].mxu0
    %v313 = vadd.f32 %v93, %v312
    %v314 = vpop.f32.mrb[0].mxu0
    %v315 = vpop.f32.mrb[0].mxu0
    %v316 = vadd.f32 %v93, %v315
    %v317 = vpop.f32.mrb[0].mxu0
    %318 = vmatprep.mubr.bf16.mxu0 0
    %319 = vmatmul.mubr.bf16.gmra.mrb[0].mxu0 %v204
    %v320 = vpop.f32.mrb[0].mxu0
    %v321 = vadd.f32 %v93, %v320
    %v322 = vpop.f32.mrb[0].mxu0
    %v323 = vpop.f32.mrb[0].mxu0
    %v324 = vadd.f32 %v93, %v323
    %v325 = vpop.f32.mrb[0].mxu0
    %326 = vmatprep.mubr.bf16.mxu0 0
    %327 = vmatmul.mubr.bf16.gmra.mrb[0].mxu0 %v207
    %v328 = vpop.f32.mrb[0].mxu0
    %v329 = vadd.f32 %v93, %v328
    %v330 = vpop.f32.mrb[0].mxu0
    %v331 = vpop.f32.mrb[0].mxu0
    %v332 = vadd.f32 %v93, %v331
    %v333 = vpop.f32.mrb[0].mxu0
    %334 = vmatprep.mubr.bf16.mxu0 0
    %335 = vmatmul.mubr.bf16.gmra.mrb[0].mxu0 %v210
    %v336 = vpop.f32.mrb[0].mxu0
    %v337 = vadd.f32 %v93, %v336
    %v338 = vpop.f32.mrb[0].mxu0
    %v339 = vpop.f32.mrb[0].mxu0
    %v340 = vadd.f32 %v93, %v339
    %v341 = vpop.f32.mrb[0].mxu0
    %342 = vmatprep.mubr.bf16.mxu0 0
    %343 = vmatmul.mubr.bf16.gmra.mrb[0].mxu0 %v213
    %v344 = vpop.f32.mrb[0].mxu0
    %v345 = vadd.f32 %v93, %v344
    %v346 = vpop.f32.mrb[0].mxu0
    %v347 = vpop.f32.mrb[0].mxu0
    %v348 = vadd.f32 %v93, %v347
    %v349 = vpop.f32.mrb[0].mxu0
    %350 = vmatprep.mubr.bf16.mxu0 0
    %351 = vmatmul.mubr.bf16.gmra.mrb[0].mxu0 %v216
    %v352 = vpop.f32.mrb[0].mxu0
    %v353 = vadd.f32 %v93, %v352
    %v354 = vpop.f32.mrb[0].mxu0
    %v355 = vpop.f32.mrb[0].mxu0
    %v356 = vadd.f32 %v93, %v355
    %v357 = vpop.f32.mrb[0].mxu0
    %358 = vmatprep.mubr.bf16.mxu0 0
    %359 = vmatmul.mubr.bf16.gmra.mrb[0].mxu0 %v219
    %v360 = vpop.f32.mrb[0].mxu0
    %v361 = vadd.f32 %v93, %v360
    %v362 = vpop.f32.mrb[0].mxu0
    %v363 = vpop.f32.mrb[0].mxu0
    %v364 = vadd.f32 %v93, %v363
    %v365 = vpop.f32.mrb[0].mxu0
    %366 = vmatprep.mubr.bf16.mxu0 0
    %367 = vmatmul.mubr.bf16.gmra.mrb[0].mxu0 %v222
    %v368 = vpop.f32.mrb[0].mxu0
    %v369 = vadd.f32 %v93, %v368
    %v370 = vpop.f32.mrb[0].mxu0
    %v371 = vpop.f32.mrb[0].mxu0
    %v372 = vadd.f32 %v93, %v371
    %v373 = vpop.f32.mrb[0].mxu0
    %374 = vmatprep.mubr.bf16.mxu0 0
    %375 = vmatmul.mubr.bf16.gmra.mrb[0].mxu0 %v225
    %v376 = vpop.f32.mrb[0].mxu0
    %v377 = vadd.f32 %v93, %v376
    %v378 = vpop.f32.mrb[0].mxu0
    %v379 = vpop.f32.mrb[0].mxu0
    %v380 = vadd.f32 %v93, %v379
    %v381 = vpop.f32.mrb[0].mxu0
    %382 = vmatprep.mubr.bf16.mxu0 0
    %383 = vmatmul.mubr.bf16.gmra.mrb[0].mxu0 %v228
    %v384 = vpop.f32.mrb[0].mxu0
    %v385 = vadd.f32 %v93, %v384
    %v386 = vpop.f32.mrb[0].mxu0
    %v387 = vpop.f32.mrb[0].mxu0
    %v388 = vadd.f32 %v93, %v387
    %v389 = vpop.f32.mrb[0].mxu0
    %390 = vdwg.mxu0
    %v391 = vmax.f32 %v265, 0.0
    %v392 = vmax.f32 %v268, 0.0
    %v393 = vmax.f32 %v273, 0.0
    %v394 = vmax.f32 %v276, 0.0
    %v395 = vmax.f32 %v281, 0.0
    %v396 = vmax.f32 %v284, 0.0
    %v397 = vmax.f32 %v289, 0.0
    %v398 = vmax.f32 %v292, 0.0
    %v399 = vmax.f32 %v297, 0.0
    %v400 = vmax.f32 %v300, 0.0
    %v401 = vmax.f32 %v305, 0.0
    %v402 = vmax.f32 %v308, 0.0
    %v403 = vmax.f32 %v313, 0.0
    %v404 = vmax.f32 %v316, 0.0
    %v405 = vmax.f32 %v321, 0.0
    %v406 = vmax.f32 %v324, 0.0
    %v407 = vmax.f32 %v329, 0.0
    %v408 = vmax.f32 %v332, 0.0
    %v409 = vmax.f32 %v337, 0.0
    %v410 = vmax.f32 %v340, 0.0
    %v411 = vmax.f32 %v345, 0.0
    %v412 = vmax.f32 %v348, 0.0
    %v413 = vmax.f32 %v353, 0.0
    %v414 = vmax.f32 %v356, 0.0
    %v415 = vmax.f32 %v361, 0.0
    %v416 = vmax.f32 %v364, 0.0
    %v417 = vmax.f32 %v369, 0.0
    %v418 = vmax.f32 %v372, 0.0
    %v419 = vmax.f32 %v377, 0.0
    %v420 = vmax.f32 %v380, 0.0
    %v421 = vmax.f32 %v385, 0.0
    %v422 = vmax.f32 %v388, 0.0
    %v423 = vld [vmem:[%s3] sm:$0x1]
    %v424 = vld [vmem:[%s4] sm:$0x1]
    %425 = vadd.xlane.f32.xlu0 %v391
    %v426 = vpop.xlane.xlu0 %425
    %427 = vadd.xlane.f32.xlu0 %v392
    %v428 = vpop.xlane.xlu0 %427
    %429 = vadd.xlane.f32.xlu0 %v393
    %v430 = vpop.xlane.xlu0 %429
    %431 = vadd.xlane.f32.xlu0 %v394
    %v432 = vpop.xlane.xlu0 %431
    %433 = vadd.xlane.f32.xlu0 %v395
    %v434 = vpop.xlane.xlu0 %433
    %435 = vadd.xlane.f32.xlu0 %v396
    %v436 = vpop.xlane.xlu0 %435
    %437 = vadd.xlane.f32.xlu0 %v397
    %v438 = vpop.xlane.xlu0 %437
    %439 = vadd.xlane.f32.xlu0 %v398
    %v440 = vpop.xlane.xlu0 %439
    %441 = vadd.xlane.f32.xlu0 %v399
    %v442 = vpop.xlane.xlu0 %441
    %443 = vadd.xlane.f32.xlu0 %v400
    %v444 = vpop.xlane.xlu0 %443
    %445 = vadd.xlane.f32.xlu0 %v401
    %v446 = vpop.xlane.xlu0 %445
    %447 = vadd.xlane.f32.xlu0 %v402
    %v448 = vpop.xlane.xlu0 %447
    %449 = vadd.xlane.f32.xlu0 %v403
    %v450 = vpop.xlane.xlu0 %449
    %451 = vadd.xlane.f32.xlu0 %v404
    %v452 = vpop.xlane.xlu0 %451
    %453 = vadd.xlane.f32.xlu0 %v405
    %v454 = vpop.xlane.xlu0 %453
    %455 = vadd.xlane.f32.xlu0 %v406
    %v456 = vpop.xlane.xlu0 %455
    %457 = vadd.xlane.f32.xlu0 %v407
    %v458 = vpop.xlane.xlu0 %457
    %459 = vadd.xlane.f32.xlu0 %v408
    %v460 = vpop.xlane.xlu0 %459
    %461 = vadd.xlane.f32.xlu0 %v409
    %v462 = vpop.xlane.xlu0 %461
    %463 = vadd.xlane.f32.xlu0 %v410
    %v464 = vpop.xlane.xlu0 %463
    %465 = vadd.xlane.f32.xlu0 %v411
    %v466 = vpop.xlane.xlu0 %465
    %467 = vadd.xlane.f32.xlu0 %v412
    %v468 = vpop.xlane.xlu0 %467
    %469 = vadd.xlane.f32.xlu0 %v413
    %v470 = vpop.xlane.xlu0 %469
    %471 = vadd.xlane.f32.xlu0 %v414
    %v472 = vpop.xlane.xlu0 %471
    %473 = vadd.xlane.f32.xlu0 %v415
    %v474 = vpop.xlane.xlu0 %473
    %475 = vadd.xlane.f32.xlu0 %v416
    %v476 = vpop.xlane.xlu0 %475
    %477 = vadd.xlane.f32.xlu0 %v417
    %v478 = vpop.xlane.xlu0 %477
    %479 = vadd.xlane.f32.xlu0 %v418
    %v480 = vpop.xlane.xlu0 %479
    %481 = vadd.xlane.f32.xlu0 %v419
    %v482 = vpop.xlane.xlu0 %481
    %483 = vadd.xlane.f32.xlu0 %v420
    %v484 = vpop.xlane.xlu0 %483
    %485 = vadd.xlane.f32.xlu0 %v421
    %v486 = vpop.xlane.xlu0 %485
    %487 = vadd.xlane.f32.xlu0 %v422
    %v488 = vpop.xlane.xlu0 %487
    %v489 = vmul.f32 %v391, %v391
    %v490 = vmul.f32 %v392, %v392
    %v491 = vmul.f32 %v393, %v393
    %v492 = vmul.f32 %v394, %v394
    %v493 = vmul.f32 %v395, %v395
    %v494 = vmul.f32 %v396, %v396
    %v495 = vmul.f32 %v397, %v397
    %v496 = vmul.f32 %v398, %v398
    %v497 = vmul.f32 %v399, %v399
    %v498 = vmul.f32 %v400, %v400
    %v499 = vmul.f32 %v401, %v401
    %v500 = vmul.f32 %v402, %v402
    %v501 = vmul.f32 %v403, %v403
    %v502 = vmul.f32 %v404, %v404
    %v503 = vmul.f32 %v405, %v405
    %v504 = vmul.f32 %v406, %v406
    %v505 = vmul.f32 %v407, %v407
    %v506 = vmul.f32 %v408, %v408
    %v507 = vmul.f32 %v409, %v409
    %v508 = vmul.f32 %v410, %v410
    %v509 = vmul.f32 %v411, %v411
    %v510 = vmul.f32 %v412, %v412
    %v511 = vmul.f32 %v413, %v413
    %v512 = vmul.f32 %v414, %v414
    %v513 = vmul.f32 %v415, %v415
    %v514 = vmul.f32 %v416, %v416
    %v515 = vmul.f32 %v417, %v417
    %v516 = vmul.f32 %v418, %v418
    %v517 = vmul.f32 %v419, %v419
    %v518 = vmul.f32 %v420, %v420
    %v519 = vmul.f32 %v421, %v421
    %v520 = vmul.f32 %v422, %v422
    %521 = vadd.xlane.f32.xlu0 %v489
    %v522 = vpop.xlane.xlu0 %521
    %523 = vadd.xlane.f32.xlu0 %v490
    %v524 = vpop.xlane.xlu0 %523
    %525 = vadd.xlane.f32.xlu0 %v491
    %v526 = vpop.xlane.xlu0 %525
    %527 = vadd.xlane.f32.xlu0 %v492
    %v528 = vpop.xlane.xlu0 %527
    %529 = vadd.xlane.f32.xlu0 %v493
    %v530 = vpop.xlane.xlu0 %529
    %531 = vadd.xlane.f32.xlu0 %v494
    %v532 = vpop.xlane.xlu0 %531
    %533 = vadd.xlane.f32.xlu0 %v495
    %v534 = vpop.xlane.xlu0 %533
    %535 = vadd.xlane.f32.xlu0 %v496
    %v536 = vpop.xlane.xlu0 %535
    %537 = vadd.xlane.f32.xlu0 %v497
    %v538 = vpop.xlane.xlu0 %537
    %539 = vadd.xlane.f32.xlu0 %v498
    %v540 = vpop.xlane.xlu0 %539
    %541 = vadd.xlane.f32.xlu0 %v499
    %v542 = vpop.xlane.xlu0 %541
    %543 = vadd.xlane.f32.xlu0 %v500
    %v544 = vpop.xlane.xlu0 %543
    %545 = vadd.xlane.f32.xlu0 %v501
    %v546 = vpop.xlane.xlu0 %545
    %547 = vadd.xlane.f32.xlu0 %v502
    %v548 = vpop.xlane.xlu0 %547
    %549 = vadd.xlane.f32.xlu0 %v503
    %v550 = vpop.xlane.xlu0 %549
    %551 = vadd.xlane.f32.xlu0 %v504
    %v552 = vpop.xlane.xlu0 %551
    %553 = vadd.xlane.f32.xlu0 %v505
    %v554 = vpop.xlane.xlu0 %553
    %555 = vadd.xlane.f32.xlu0 %v506
    %v556 = vpop.xlane.xlu0 %555
    %557 = vadd.xlane.f32.xlu0 %v507
    %v558 = vpop.xlane.xlu0 %557
    %559 = vadd.xlane.f32.xlu0 %v508
    %v560 = vpop.xlane.xlu0 %559
    %561 = vadd.xlane.f32.xlu0 %v509
    %v562 = vpop.xlane.xlu0 %561
    %563 = vadd.xlane.f32.xlu0 %v510
    %v564 = vpop.xlane.xlu0 %563
    %565 = vadd.xlane.f32.xlu0 %v511
    %v566 = vpop.xlane.xlu0 %565
    %567 = vadd.xlane.f32.xlu0 %v512
    %v568 = vpop.xlane.xlu0 %567
    %569 = vadd.xlane.f32.xlu0 %v513
    %v570 = vpop.xlane.xlu0 %569
    %571 = vadd.xlane.f32.xlu0 %v514
    %v572 = vpop.xlane.xlu0 %571
    %573 = vadd.xlane.f32.xlu0 %v515
    %v574 = vpop.xlane.xlu0 %573
    %575 = vadd.xlane.f32.xlu0 %v516
    %v576 = vpop.xlane.xlu0 %575
    %577 = vadd.xlane.f32.xlu0 %v517
    %v578 = vpop.xlane.xlu0 %577
    %579 = vadd.xlane.f32.xlu0 %v518
    %v580 = vpop.xlane.xlu0 %579
    %581 = vadd.xlane.f32.xlu0 %v519
    %v582 = vpop.xlane.xlu0 %581
    %583 = vadd.xlane.f32.xlu0 %v520
    %v584 = vpop.xlane.xlu0 %583
    %v585 = vmul.f32 %v426, 0.0078125
    %v586 = vmul.f32 %v428, 0.0078125
    %v587 = vmul.f32 %v430, 0.0078125
    %v588 = vmul.f32 %v432, 0.0078125
    %v589 = vmul.f32 %v434, 0.0078125
    %v590 = vmul.f32 %v436, 0.0078125
    %v591 = vmul.f32 %v438, 0.0078125
    %v592 = vmul.f32 %v440, 0.0078125
    %v593 = vmul.f32 %v442, 0.0078125
    %v594 = vmul.f32 %v444, 0.0078125
    %v595 = vmul.f32 %v446, 0.0078125
    %v596 = vmul.f32 %v448, 0.0078125
    %v597 = vmul.f32 %v450, 0.0078125
    %v598 = vmul.f32 %v452, 0.0078125
    %v599 = vmul.f32 %v454, 0.0078125
    %v600 = vmul.f32 %v456, 0.0078125
    %v601 = vmul.f32 %v458, 0.0078125
    %v602 = vmul.f32 %v460, 0.0078125
    %v603 = vmul.f32 %v462, 0.0078125
    %v604 = vmul.f32 %v464, 0.0078125
    %v605 = vmul.f32 %v466, 0.0078125
    %v606 = vmul.f32 %v468, 0.0078125
    %v607 = vmul.f32 %v470, 0.0078125
    %v608 = vmul.f32 %v472, 0.0078125
    %v609 = vmul.f32 %v474, 0.0078125
    %v610 = vmul.f32 %v476, 0.0078125
    %v611 = vmul.f32 %v478, 0.0078125
    %v612 = vmul.f32 %v480, 0.0078125
    %v613 = vmul.f32 %v482, 0.0078125
    %v614 = vmul.f32 %v484, 0.0078125
    %v615 = vmul.f32 %v486, 0.0078125
    %v616 = vmul.f32 %v488, 0.0078125
    %v617 = vmul.f32 %v522, 0.0078125
    %v618 = vmul.f32 %v524, 0.0078125
    %v619 = vmul.f32 %v526, 0.0078125
    %v620 = vmul.f32 %v528, 0.0078125
    %v621 = vmul.f32 %v530, 0.0078125
    %v622 = vmul.f32 %v532, 0.0078125
    %v623 = vmul.f32 %v534, 0.0078125
    %v624 = vmul.f32 %v536, 0.0078125
    %v625 = vmul.f32 %v538, 0.0078125
    %v626 = vmul.f32 %v540, 0.0078125
    %v627 = vmul.f32 %v542, 0.0078125
    %v628 = vmul.f32 %v544, 0.0078125
    %v629 = vmul.f32 %v546, 0.0078125
    %v630 = vmul.f32 %v548, 0.0078125
    %v631 = vmul.f32 %v550, 0.0078125
    %v632 = vmul.f32 %v552, 0.0078125
    %v633 = vmul.f32 %v554, 0.0078125
    %v634 = vmul.f32 %v556, 0.0078125
    %v635 = vmul.f32 %v558, 0.0078125
    %v636 = vmul.f32 %v560, 0.0078125
    %v637 = vmul.f32 %v562, 0.0078125
    %v638 = vmul.f32 %v564, 0.0078125
    %v639 = vmul.f32 %v566, 0.0078125
    %v640 = vmul.f32 %v568, 0.0078125
    %v641 = vmul.f32 %v570, 0.0078125
    %v642 = vmul.f32 %v572, 0.0078125
    %v643 = vmul.f32 %v574, 0.0078125
    %v644 = vmul.f32 %v576, 0.0078125
    %v645 = vmul.f32 %v578, 0.0078125
    %v646 = vmul.f32 %v580, 0.0078125
    %v647 = vmul.f32 %v582, 0.0078125
    %v648 = vmul.f32 %v584, 0.0078125
    %v649 = vmul.f32 %v585, %v585
    %v650 = vmul.f32 %v586, %v586
    %v651 = vmul.f32 %v587, %v587
    %v652 = vmul.f32 %v588, %v588
    %v653 = vmul.f32 %v589, %v589
    %v654 = vmul.f32 %v590, %v590
    %v655 = vmul.f32 %v591, %v591
    %v656 = vmul.f32 %v592, %v592
    %v657 = vmul.f32 %v593, %v593
    %v658 = vmul.f32 %v594, %v594
    %v659 = vmul.f32 %v595, %v595
    %v660 = vmul.f32 %v596, %v596
    %v661 = vmul.f32 %v597, %v597
    %v662 = vmul.f32 %v598, %v598
    %v663 = vmul.f32 %v599, %v599
    %v664 = vmul.f32 %v600, %v600
    %v665 = vmul.f32 %v601, %v601
    %v666 = vmul.f32 %v602, %v602
    %v667 = vmul.f32 %v603, %v603
    %v668 = vmul.f32 %v604, %v604
    %v669 = vmul.f32 %v605, %v605
    %v670 = vmul.f32 %v606, %v606
    %v671 = vmul.f32 %v607, %v607
    %v672 = vmul.f32 %v608, %v608
    %v673 = vmul.f32 %v609, %v609
    %v674 = vmul.f32 %v610, %v610
    %v675 = vmul.f32 %v611, %v611
    %v676 = vmul.f32 %v612, %v612
    %v677 = vmul.f32 %v613, %v613
    %v678 = vmul.f32 %v614, %v614
    %v679 = vmul.f32 %v615, %v615
    %v680 = vmul.f32 %v616, %v616
    %v681 = vsub.f32 %v617, %v649
    %v682 = vsub.f32 %v618, %v650
    %v683 = vsub.f32 %v619, %v651
    %v684 = vsub.f32 %v620, %v652
    %v685 = vsub.f32 %v621, %v653
    %v686 = vsub.f32 %v622, %v654
    %v687 = vsub.f32 %v623, %v655
    %v688 = vsub.f32 %v624, %v656
    %v689 = vsub.f32 %v625, %v657
    %v690 = vsub.f32 %v626, %v658
    %v691 = vsub.f32 %v627, %v659
    %v692 = vsub.f32 %v628, %v660
    %v693 = vsub.f32 %v629, %v661
    %v694 = vsub.f32 %v630, %v662
    %v695 = vsub.f32 %v631, %v663
    %v696 = vsub.f32 %v632, %v664
    %v697 = vsub.f32 %v633, %v665
    %v698 = vsub.f32 %v634, %v666
    %v699 = vsub.f32 %v635, %v667
    %v700 = vsub.f32 %v636, %v668
    %v701 = vsub.f32 %v637, %v669
    %v702 = vsub.f32 %v638, %v670
    %v703 = vsub.f32 %v639, %v671
    %v704 = vsub.f32 %v640, %v672
    %v705 = vsub.f32 %v641, %v673
    %v706 = vsub.f32 %v642, %v674
    %v707 = vsub.f32 %v643, %v675
    %v708 = vsub.f32 %v644, %v676
    %v709 = vsub.f32 %v645, %v677
    %v710 = vsub.f32 %v646, %v678
    %v711 = vsub.f32 %v647, %v679
    %v712 = vsub.f32 %v648, %v680
    %v713 = vadd.f32 %v681, 1e-05
    %v714 = vadd.f32 %v682, 1e-05
    %v715 = vadd.f32 %v683, 1e-05
    %v716 = vadd.f32 %v684, 1e-05
    %v717 = vadd.f32 %v685, 1e-05
    %v718 = vadd.f32 %v686, 1e-05
    %v719 = vadd.f32 %v687, 1e-05
    %v720 = vadd.f32 %v688, 1e-05
    %v721 = vadd.f32 %v689, 1e-05
    %v722 = vadd.f32 %v690, 1e-05
    %v723 = vadd.f32 %v691, 1e-05
    %v724 = vadd.f32 %v692, 1e-05
    %v725 = vadd.f32 %v693, 1e-05
    %v726 = vadd.f32 %v694, 1e-05
    %v727 = vadd.f32 %v695, 1e-05
    %v728 = vadd.f32 %v696, 1e-05
    %v729 = vadd.f32 %v697, 1e-05
    %v730 = vadd.f32 %v698, 1e-05
    %v731 = vadd.f32 %v699, 1e-05
    %v732 = vadd.f32 %v700, 1e-05
    %v733 = vadd.f32 %v701, 1e-05
    %v734 = vadd.f32 %v702, 1e-05
    %v735 = vadd.f32 %v703, 1e-05
    %v736 = vadd.f32 %v704, 1e-05
    %v737 = vadd.f32 %v705, 1e-05
    %v738 = vadd.f32 %v706, 1e-05
    %v739 = vadd.f32 %v707, 1e-05
    %v740 = vadd.f32 %v708, 1e-05
    %v741 = vadd.f32 %v709, 1e-05
    %v742 = vadd.f32 %v710, 1e-05
    %v743 = vadd.f32 %v711, 1e-05
    %v744 = vadd.f32 %v712, 1e-05
    %v745 = vrsqrt.pop %v713
    %v746 = vrsqrt.pop %v714
    %v747 = vrsqrt.pop %v715
    %v748 = vrsqrt.pop %v716
    %v749 = vrsqrt.pop %v717
    %v750 = vrsqrt.pop %v718
    %v751 = vrsqrt.pop %v719
    %v752 = vrsqrt.pop %v720
    %v753 = vrsqrt.pop %v721
    %v754 = vrsqrt.pop %v722
    %v755 = vrsqrt.pop %v723
    %v756 = vrsqrt.pop %v724
    %v757 = vrsqrt.pop %v725
    %v758 = vrsqrt.pop %v726
    %v759 = vrsqrt.pop %v727
    %v760 = vrsqrt.pop %v728
    %v761 = vrsqrt.pop %v729
    %v762 = vrsqrt.pop %v730
    %v763 = vrsqrt.pop %v731
    %v764 = vrsqrt.pop %v732
    %v765 = vrsqrt.pop %v733
    %v766 = vrsqrt.pop %v734
    %v767 = vrsqrt.pop %v735
    %v768 = vrsqrt.pop %v736
    %v769 = vrsqrt.pop %v737
    %v770 = vrsqrt.pop %v738
    %v771 = vrsqrt.pop %v739
    %v772 = vrsqrt.pop %v740
    %v773 = vrsqrt.pop %v741
    %v774 = vrsqrt.pop %v742
    %v775 = vrsqrt.pop %v743
    %v776 = vrsqrt.pop %v744
    %v777 = vsub.f32 %v391, %v585
    %v778 = vsub.f32 %v392, %v586
    %v779 = vsub.f32 %v393, %v587
    %v780 = vsub.f32 %v394, %v588
    %v781 = vsub.f32 %v395, %v589
    %v782 = vsub.f32 %v396, %v590
    %v783 = vsub.f32 %v397, %v591
    %v784 = vsub.f32 %v398, %v592
    %v785 = vsub.f32 %v399, %v593
    %v786 = vsub.f32 %v400, %v594
    %v787 = vsub.f32 %v401, %v595
    %v788 = vsub.f32 %v402, %v596
    %v789 = vsub.f32 %v403, %v597
    %v790 = vsub.f32 %v404, %v598
    %v791 = vsub.f32 %v405, %v599
    %v792 = vsub.f32 %v406, %v600
    %v793 = vsub.f32 %v407, %v601
    %v794 = vsub.f32 %v408, %v602
    %v795 = vsub.f32 %v409, %v603
    %v796 = vsub.f32 %v410, %v604
    %v797 = vsub.f32 %v411, %v605
    %v798 = vsub.f32 %v412, %v606
    %v799 = vsub.f32 %v413, %v607
    %v800 = vsub.f32 %v414, %v608
    %v801 = vsub.f32 %v415, %v609
    %v802 = vsub.f32 %v416, %v610
    %v803 = vsub.f32 %v417, %v611
    %v804 = vsub.f32 %v418, %v612
    %v805 = vsub.f32 %v419, %v613
    %v806 = vsub.f32 %v420, %v614
    %v807 = vsub.f32 %v421, %v615
    %v808 = vsub.f32 %v422, %v616
    %v810 = vlaneseq
    %v811 = vshrl.u32 %v810, 7
    %v812 = vsub.s32 0, %v811
    %v813 = vrot.slane %v423, %v812
    %v815 = vmul.f32 %v745, %v813
    %v816 = vmul.f32 %v746, %v813
    %v817 = vmul.f32 %v747, %v813
    %v818 = vmul.f32 %v748, %v813
    %v819 = vmul.f32 %v749, %v813
    %v820 = vmul.f32 %v750, %v813
    %v821 = vmul.f32 %v751, %v813
    %v822 = vmul.f32 %v752, %v813
    %v823 = vmul.f32 %v753, %v813
    %v824 = vmul.f32 %v754, %v813
    %v825 = vmul.f32 %v755, %v813
    %v826 = vmul.f32 %v756, %v813
    %v827 = vmul.f32 %v757, %v813
    %v828 = vmul.f32 %v758, %v813
    %v829 = vmul.f32 %v759, %v813
    %v830 = vmul.f32 %v760, %v813
    %v831 = vmul.f32 %v761, %v813
    %v832 = vmul.f32 %v762, %v813
    %v833 = vmul.f32 %v763, %v813
    %v834 = vmul.f32 %v764, %v813
    %v835 = vmul.f32 %v765, %v813
    %v836 = vmul.f32 %v766, %v813
    %v837 = vmul.f32 %v767, %v813
    %v838 = vmul.f32 %v768, %v813
    %v839 = vmul.f32 %v769, %v813
    %v840 = vmul.f32 %v770, %v813
    %v841 = vmul.f32 %v771, %v813
    %v842 = vmul.f32 %v772, %v813
    %v843 = vmul.f32 %v773, %v813
    %v844 = vmul.f32 %v774, %v813
    %v845 = vmul.f32 %v775, %v813
    %v846 = vmul.f32 %v776, %v813
    %v847 = vmul.f32 %v777, %v815
    %v848 = vmul.f32 %v778, %v816
    %v849 = vmul.f32 %v779, %v817
    %v850 = vmul.f32 %v780, %v818
    %v851 = vmul.f32 %v781, %v819
    %v852 = vmul.f32 %v782, %v820
    %v853 = vmul.f32 %v783, %v821
    %v854 = vmul.f32 %v784, %v822
    %v855 = vmul.f32 %v785, %v823
    %v856 = vmul.f32 %v786, %v824
    %v857 = vmul.f32 %v787, %v825
    %v858 = vmul.f32 %v788, %v826
    %v859 = vmul.f32 %v789, %v827
    %v860 = vmul.f32 %v790, %v828
    %v861 = vmul.f32 %v791, %v829
    %v862 = vmul.f32 %v792, %v830
    %v863 = vmul.f32 %v793, %v831
    %v864 = vmul.f32 %v794, %v832
    %v865 = vmul.f32 %v795, %v833
    %v866 = vmul.f32 %v796, %v834
    %v867 = vmul.f32 %v797, %v835
    %v868 = vmul.f32 %v798, %v836
    %v869 = vmul.f32 %v799, %v837
    %v870 = vmul.f32 %v800, %v838
    %v871 = vmul.f32 %v801, %v839
    %v872 = vmul.f32 %v802, %v840
    %v873 = vmul.f32 %v803, %v841
    %v874 = vmul.f32 %v804, %v842
    %v875 = vmul.f32 %v805, %v843
    %v876 = vmul.f32 %v806, %v844
    %v877 = vmul.f32 %v807, %v845
    %v878 = vmul.f32 %v808, %v846
    %v880 = vlaneseq
    %v881 = vshrl.u32 %v880, 7
    %v882 = vsub.s32 0, %v881
    %v883 = vrot.slane %v424, %v882
    %v885 = vadd.f32 %v847, %v883
    %v886 = vadd.f32 %v848, %v883
    %v887 = vadd.f32 %v849, %v883
    %v888 = vadd.f32 %v850, %v883
    %v889 = vadd.f32 %v851, %v883
    %v890 = vadd.f32 %v852, %v883
    %v891 = vadd.f32 %v853, %v883
    %v892 = vadd.f32 %v854, %v883
    %v893 = vadd.f32 %v855, %v883
    %v894 = vadd.f32 %v856, %v883
    %v895 = vadd.f32 %v857, %v883
    %v896 = vadd.f32 %v858, %v883
    %v897 = vadd.f32 %v859, %v883
    %v898 = vadd.f32 %v860, %v883
    %v899 = vadd.f32 %v861, %v883
    %v900 = vadd.f32 %v862, %v883
    %v901 = vadd.f32 %v863, %v883
    %v902 = vadd.f32 %v864, %v883
    %v903 = vadd.f32 %v865, %v883
    %v904 = vadd.f32 %v866, %v883
    %v905 = vadd.f32 %v867, %v883
    %v906 = vadd.f32 %v868, %v883
    %v907 = vadd.f32 %v869, %v883
    %v908 = vadd.f32 %v870, %v883
    %v909 = vadd.f32 %v871, %v883
    %v910 = vadd.f32 %v872, %v883
    %v911 = vadd.f32 %v873, %v883
    %v912 = vadd.f32 %v874, %v883
    %v913 = vadd.f32 %v875, %v883
    %v914 = vadd.f32 %v876, %v883
    %v915 = vadd.f32 %v877, %v883
    %v916 = vadd.f32 %v878, %v883
    %v917 = vpack.c.bf16 %v886, %v885
    %v918 = vpack.c.bf16 %v888, %v887
    %v919 = vpack.c.bf16 %v890, %v889
    %v920 = vpack.c.bf16 %v892, %v891
    %v921 = vpack.c.bf16 %v894, %v893
    %v922 = vpack.c.bf16 %v896, %v895
    %v923 = vpack.c.bf16 %v898, %v897
    %v924 = vpack.c.bf16 %v900, %v899
    %v925 = vpack.c.bf16 %v902, %v901
    %v926 = vpack.c.bf16 %v904, %v903
    %v927 = vpack.c.bf16 %v906, %v905
    %v928 = vpack.c.bf16 %v908, %v907
    %v929 = vpack.c.bf16 %v910, %v909
    %v930 = vpack.c.bf16 %v912, %v911
    %v931 = vpack.c.bf16 %v914, %v913
    %v932 = vpack.c.bf16 %v916, %v915
    %v933 = vld [vmem:[#allocation2] sm:$0xf]
    %v934 = vld [vmem:[#allocation2 + $0x4] sm:$0xf]
    %v935 = vld [vmem:[#allocation2 + $0x8] sm:$0xf]
    %v936 = vld [vmem:[#allocation2 + $0xc] sm:$0xf]
    %v937 = vld [vmem:[#allocation2 + $0x10] sm:$0xf]
    %v938 = vld [vmem:[#allocation2 + $0x14] sm:$0xf]
    %v939 = vld [vmem:[#allocation2 + $0x18] sm:$0xf]
    %v940 = vld [vmem:[#allocation2 + $0x1c] sm:$0xf]
    %v941 = vld [vmem:[#allocation2 + $0x20] sm:$0xf]
    %v942 = vld [vmem:[#allocation2 + $0x24] sm:$0xf]
    %v943 = vld [vmem:[#allocation2 + $0x28] sm:$0xf]
    %v944 = vld [vmem:[#allocation2 + $0x2c] sm:$0xf]
    %v945 = vld [vmem:[#allocation2 + $0x30] sm:$0xf]
    %v946 = vld [vmem:[#allocation2 + $0x34] sm:$0xf]
    %v947 = vld [vmem:[#allocation2 + $0x38] sm:$0xf]
    %v948 = vld [vmem:[#allocation2 + $0x3c] sm:$0xf]
    %v949 = vld [vmem:[%s6] sm:$0x1]
    %v951 = vlaneseq
    %v952 = vshrl.u32 %v951, 7
    %v953 = vsub.s32 0, %v952
    %v954 = vrot.slane %v949, %v953
    %v972 = vunpack.c.l.b16 %v933
    %v973 = vunpack.c.l.b16 %v934
    %v974 = vunpack.c.l.b16 %v935
    %v975 = vunpack.c.l.b16 %v936
    %v976 = vunpack.c.l.b16 %v937
    %v977 = vunpack.c.l.b16 %v938
    %v978 = vunpack.c.l.b16 %v939
    %v979 = vunpack.c.l.b16 %v940
    %v980 = vunpack.c.l.b16 %v941
    %v981 = vunpack.c.l.b16 %v942
    %v982 = vunpack.c.l.b16 %v943
    %v983 = vunpack.c.l.b16 %v944
    %v984 = vunpack.c.l.b16 %v945
    %v985 = vunpack.c.l.b16 %v946
    %v986 = vunpack.c.l.b16 %v947
    %v987 = vunpack.c.l.b16 %v948
    %v988 = vpack.c.b16 %v973, %v972
    %v989 = vpack.c.b16 %v975, %v974
    %v990 = vpack.c.b16 %v977, %v976
    %v991 = vpack.c.b16 %v979, %v978
    %v992 = vpack.c.b16 %v981, %v980
    %v993 = vpack.c.b16 %v983, %v982
    %v994 = vpack.c.b16 %v985, %v984
    %v995 = vpack.c.b16 %v987, %v986
    %1004 = vmatprep.subr.bf16.mxu0 0
    %1005 = vmatpush1.bf16.msra.mxu0 %v988
    %1006 = vmatprep.subr.bf16.mxu0 0
    %1007 = vmatpush1.bf16.msra.mxu0 %v989
    %1008 = vmatprep.subr.bf16.mxu0 0
    %1009 = vmatpush1.bf16.msra.mxu0 %v990
    %1010 = vmatprep.subr.bf16.mxu0 0
    %1011 = vmatpush1.bf16.msra.mxu0 %v991
    %1012 = vmatprep.subr.bf16.mxu0 0
    %1013 = vmatpush1.bf16.msra.mxu0 %v992
    %1014 = vmatprep.subr.bf16.mxu0 0
    %1015 = vmatpush1.bf16.msra.mxu0 %v993
    %1016 = vmatprep.subr.bf16.mxu0 0
    %1017 = vmatpush1.bf16.msra.mxu0 %v994
    %1018 = vmatprep.subr.bf16.mxu0 0
    %1019 = vmatpush1.bf16.msra.mxu0 %v995
    %1020 = vmatprep.subr.bf16.mxu0 0
    %1021 = vmatpush1.bf16.msra.mxu0 0
    %1022 = vmatprep.subr.bf16.mxu0 0
    %1023 = vmatpush1.bf16.msra.mxu0 0
    %1024 = vmatprep.subr.bf16.mxu0 0
    %1025 = vmatpush1.bf16.msra.mxu0 0
    %1026 = vmatprep.subr.bf16.mxu0 0
    %1027 = vmatpush1.bf16.msra.mxu0 0
    %1028 = vmatprep.subr.bf16.mxu0 0
    %1029 = vmatpush1.bf16.msra.mxu0 0
    %1030 = vmatprep.subr.bf16.mxu0 0
    %1031 = vmatpush1.bf16.msra.mxu0 0
    %1032 = vmatprep.subr.bf16.mxu0 0
    %1033 = vmatpush1.bf16.msra.mxu0 0
    %1034 = vmatprep.subr.bf16.mxu0 0
    %1035 = vmatpush1.bf16.msra.mxu0 0
    %1036 = vmatprep.mubr.bf16.mxu0 0
    %1037 = vmatmul.mubr.bf16.gmra.mrb[0].mxu0 %v917
    %v1038 = vpop.f32.mrb[0].mxu0
    %v1039 = vadd.f32 %v954, %v1038
    %v1040 = vpop.f32.mrb[0].mxu0
    %v1041 = vpop.f32.mrb[0].mxu0
    %v1042 = vadd.f32 %v954, %v1041
    %v1043 = vpop.f32.mrb[0].mxu0
    %1044 = vmatprep.mubr.bf16.mxu0 0
    %1045 = vmatmul.mubr.bf16.gmra.mrb[0].mxu0 %v918
    %v1046 = vpop.f32.mrb[0].mxu0
    %v1047 = vadd.f32 %v954, %v1046
    %v1048 = vpop.f32.mrb[0].mxu0
    %v1049 = vpop.f32.mrb[0].mxu0
    %v1050 = vadd.f32 %v954, %v1049
    %v1051 = vpop.f32.mrb[0].mxu0
    %1052 = vmatprep.mubr.bf16.mxu0 0
    %1053 = vmatmul.mubr.bf16.gmra.mrb[0].mxu0 %v919
    %v1054 = vpop.f32.mrb[0].mxu0
    %v1055 = vadd.f32 %v954, %v1054
    %v1056 = vpop.f32.mrb[0].mxu0
    %v1057 = vpop.f32.mrb[0].mxu0
    %v1058 = vadd.f32 %v954, %v1057
    %v1059 = vpop.f32.mrb[0].mxu0
    %1060 = vmatprep.mubr.bf16.mxu0 0
    %1061 = vmatmul.mubr.bf16.gmra.mrb[0].mxu0 %v920
    %v1062 = vpop.f32.mrb[0].mxu0
    %v1063 = vadd.f32 %v954, %v1062
    %v1064 = vpop.f32.mrb[0].mxu0
    %v1065 = vpop.f32.mrb[0].mxu0
    %v1066 = vadd.f32 %v954, %v1065
    %v1067 = vpop.f32.mrb[0].mxu0
    %1068 = vmatprep.mubr.bf16.mxu0 0
    %1069 = vmatmul.mubr.bf16.gmra.mrb[0].mxu0 %v921
    %v1070 = vpop.f32.mrb[0].mxu0
    %v1071 = vadd.f32 %v954, %v1070
    %v1072 = vpop.f32.mrb[0].mxu0
    %v1073 = vpop.f32.mrb[0].mxu0
    %v1074 = vadd.f32 %v954, %v1073
    %v1075 = vpop.f32.mrb[0].mxu0
    %1076 = vmatprep.mubr.bf16.mxu0 0
    %1077 = vmatmul.mubr.bf16.gmra.mrb[0].mxu0 %v922
    %v1078 = vpop.f32.mrb[0].mxu0
    %v1079 = vadd.f32 %v954, %v1078
    %v1080 = vpop.f32.mrb[0].mxu0
    %v1081 = vpop.f32.mrb[0].mxu0
    %v1082 = vadd.f32 %v954, %v1081
    %v1083 = vpop.f32.mrb[0].mxu0
    %1084 = vmatprep.mubr.bf16.mxu0 0
    %1085 = vmatmul.mubr.bf16.gmra.mrb[0].mxu0 %v923
    %v1086 = vpop.f32.mrb[0].mxu0
    %v1087 = vadd.f32 %v954, %v1086
    %v1088 = vpop.f32.mrb[0].mxu0
    %v1089 = vpop.f32.mrb[0].mxu0
    %v1090 = vadd.f32 %v954, %v1089
    %v1091 = vpop.f32.mrb[0].mxu0
    %1092 = vmatprep.mubr.bf16.mxu0 0
    %1093 = vmatmul.mubr.bf16.gmra.mrb[0].mxu0 %v924
    %v1094 = vpop.f32.mrb[0].mxu0
    %v1095 = vadd.f32 %v954, %v1094
    %v1096 = vpop.f32.mrb[0].mxu0
    %v1097 = vpop.f32.mrb[0].mxu0
    %v1098 = vadd.f32 %v954, %v1097
    %v1099 = vpop.f32.mrb[0].mxu0
    %1100 = vmatprep.mubr.bf16.mxu0 0
    %1101 = vmatmul.mubr.bf16.gmra.mrb[0].mxu0 %v925
    %v1102 = vpop.f32.mrb[0].mxu0
    %v1103 = vadd.f32 %v954, %v1102
    %v1104 = vpop.f32.mrb[0].mxu0
    %v1105 = vpop.f32.mrb[0].mxu0
    %v1106 = vadd.f32 %v954, %v1105
    %v1107 = vpop.f32.mrb[0].mxu0
    %1108 = vmatprep.mubr.bf16.mxu0 0
    %1109 = vmatmul.mubr.bf16.gmra.mrb[0].mxu0 %v926
    %v1110 = vpop.f32.mrb[0].mxu0
    %v1111 = vadd.f32 %v954, %v1110
    %v1112 = vpop.f32.mrb[0].mxu0
    %v1113 = vpop.f32.mrb[0].mxu0
    %v1114 = vadd.f32 %v954, %v1113
    %v1115 = vpop.f32.mrb[0].mxu0
    %1116 = vmatprep.mubr.bf16.mxu0 0
    %1117 = vmatmul.mubr.bf16.gmra.mrb[0].mxu0 %v927
    %v1118 = vpop.f32.mrb[0].mxu0
    %v1119 = vadd.f32 %v954, %v1118
    %v1120 = vpop.f32.mrb[0].mxu0
    %v1121 = vpop.f32.mrb[0].mxu0
    %v1122 = vadd.f32 %v954, %v1121
    %v1123 = vpop.f32.mrb[0].mxu0
    %1124 = vmatprep.mubr.bf16.mxu0 0
    %1125 = vmatmul.mubr.bf16.gmra.mrb[0].mxu0 %v928
    %v1126 = vpop.f32.mrb[0].mxu0
    %v1127 = vadd.f32 %v954, %v1126
    %v1128 = vpop.f32.mrb[0].mxu0
    %v1129 = vpop.f32.mrb[0].mxu0
    %v1130 = vadd.f32 %v954, %v1129
    %v1131 = vpop.f32.mrb[0].mxu0
    %1132 = vmatprep.mubr.bf16.mxu0 0
    %1133 = vmatmul.mubr.bf16.gmra.mrb[0].mxu0 %v929
    %v1134 = vpop.f32.mrb[0].mxu0
    %v1135 = vadd.f32 %v954, %v1134
    %v1136 = vpop.f32.mrb[0].mxu0
    %v1137 = vpop.f32.mrb[0].mxu0
    %v1138 = vadd.f32 %v954, %v1137
    %v1139 = vpop.f32.mrb[0].mxu0
    %1140 = vmatprep.mubr.bf16.mxu0 0
    %1141 = vmatmul.mubr.bf16.gmra.mrb[0].mxu0 %v930
    %v1142 = vpop.f32.mrb[0].mxu0
    %v1143 = vadd.f32 %v954, %v1142
    %v1144 = vpop.f32.mrb[0].mxu0
    %v1145 = vpop.f32.mrb[0].mxu0
    %v1146 = vadd.f32 %v954, %v1145
    %v1147 = vpop.f32.mrb[0].mxu0
    %1148 = vmatprep.mubr.bf16.mxu0 0
    %1149 = vmatmul.mubr.bf16.gmra.mrb[0].mxu0 %v931
    %v1150 = vpop.f32.mrb[0].mxu0
    %v1151 = vadd.f32 %v954, %v1150
    %v1152 = vpop.f32.mrb[0].mxu0
    %v1153 = vpop.f32.mrb[0].mxu0
    %v1154 = vadd.f32 %v954, %v1153
    %v1155 = vpop.f32.mrb[0].mxu0
    %1156 = vmatprep.mubr.bf16.mxu0 0
    %1157 = vmatmul.mubr.bf16.gmra.mrb[0].mxu0 %v932
    %v1158 = vpop.f32.mrb[0].mxu0
    %v1159 = vadd.f32 %v954, %v1158
    %v1160 = vpop.f32.mrb[0].mxu0
    %v1161 = vpop.f32.mrb[0].mxu0
    %v1162 = vadd.f32 %v954, %v1161
    %v1163 = vpop.f32.mrb[0].mxu0
    %1164 = vdwg.mxu0
    %v1165 = vld [vmem:[%s7] sm:$0x1]
    %v1166 = vld [vmem:[%s8] sm:$0x1]
    %1167 = vadd.xlane.f32.xlu0 %v1039
    %v1168 = vpop.xlane.xlu0 %1167
    %1169 = vadd.xlane.f32.xlu0 %v1042
    %v1170 = vpop.xlane.xlu0 %1169
    %1171 = vadd.xlane.f32.xlu0 %v1047
    %v1172 = vpop.xlane.xlu0 %1171
    %1173 = vadd.xlane.f32.xlu0 %v1050
    %v1174 = vpop.xlane.xlu0 %1173
    %1175 = vadd.xlane.f32.xlu0 %v1055
    %v1176 = vpop.xlane.xlu0 %1175
    %1177 = vadd.xlane.f32.xlu0 %v1058
    %v1178 = vpop.xlane.xlu0 %1177
    %1179 = vadd.xlane.f32.xlu0 %v1063
    %v1180 = vpop.xlane.xlu0 %1179
    %1181 = vadd.xlane.f32.xlu0 %v1066
    %v1182 = vpop.xlane.xlu0 %1181
    %1183 = vadd.xlane.f32.xlu0 %v1071
    %v1184 = vpop.xlane.xlu0 %1183
    %1185 = vadd.xlane.f32.xlu0 %v1074
    %v1186 = vpop.xlane.xlu0 %1185
    %1187 = vadd.xlane.f32.xlu0 %v1079
    %v1188 = vpop.xlane.xlu0 %1187
    %1189 = vadd.xlane.f32.xlu0 %v1082
    %v1190 = vpop.xlane.xlu0 %1189
    %1191 = vadd.xlane.f32.xlu0 %v1087
    %v1192 = vpop.xlane.xlu0 %1191
    %1193 = vadd.xlane.f32.xlu0 %v1090
    %v1194 = vpop.xlane.xlu0 %1193
    %1195 = vadd.xlane.f32.xlu0 %v1095
    %v1196 = vpop.xlane.xlu0 %1195
    %1197 = vadd.xlane.f32.xlu0 %v1098
    %v1198 = vpop.xlane.xlu0 %1197
    %1199 = vadd.xlane.f32.xlu0 %v1103
    %v1200 = vpop.xlane.xlu0 %1199
    %1201 = vadd.xlane.f32.xlu0 %v1106
    %v1202 = vpop.xlane.xlu0 %1201
    %1203 = vadd.xlane.f32.xlu0 %v1111
    %v1204 = vpop.xlane.xlu0 %1203
    %1205 = vadd.xlane.f32.xlu0 %v1114
    %v1206 = vpop.xlane.xlu0 %1205
    %1207 = vadd.xlane.f32.xlu0 %v1119
    %v1208 = vpop.xlane.xlu0 %1207
    %1209 = vadd.xlane.f32.xlu0 %v1122
    %v1210 = vpop.xlane.xlu0 %1209
    %1211 = vadd.xlane.f32.xlu0 %v1127
    %v1212 = vpop.xlane.xlu0 %1211
    %1213 = vadd.xlane.f32.xlu0 %v1130
    %v1214 = vpop.xlane.xlu0 %1213
    %1215 = vadd.xlane.f32.xlu0 %v1135
    %v1216 = vpop.xlane.xlu0 %1215
    %1217 = vadd.xlane.f32.xlu0 %v1138
    %v1218 = vpop.xlane.xlu0 %1217
    %1219 = vadd.xlane.f32.xlu0 %v1143
    %v1220 = vpop.xlane.xlu0 %1219
    %1221 = vadd.xlane.f32.xlu0 %v1146
    %v1222 = vpop.xlane.xlu0 %1221
    %1223 = vadd.xlane.f32.xlu0 %v1151
    %v1224 = vpop.xlane.xlu0 %1223
    %1225 = vadd.xlane.f32.xlu0 %v1154
    %v1226 = vpop.xlane.xlu0 %1225
    %1227 = vadd.xlane.f32.xlu0 %v1159
    %v1228 = vpop.xlane.xlu0 %1227
    %1229 = vadd.xlane.f32.xlu0 %v1162
    %v1230 = vpop.xlane.xlu0 %1229
    %v1231 = vmul.f32 %v1039, %v1039
    %v1232 = vmul.f32 %v1042, %v1042
    %v1233 = vmul.f32 %v1047, %v1047
    %v1234 = vmul.f32 %v1050, %v1050
    %v1235 = vmul.f32 %v1055, %v1055
    %v1236 = vmul.f32 %v1058, %v1058
    %v1237 = vmul.f32 %v1063, %v1063
    %v1238 = vmul.f32 %v1066, %v1066
    %v1239 = vmul.f32 %v1071, %v1071
    %v1240 = vmul.f32 %v1074, %v1074
    %v1241 = vmul.f32 %v1079, %v1079
    %v1242 = vmul.f32 %v1082, %v1082
    %v1243 = vmul.f32 %v1087, %v1087
    %v1244 = vmul.f32 %v1090, %v1090
    %v1245 = vmul.f32 %v1095, %v1095
    %v1246 = vmul.f32 %v1098, %v1098
    %v1247 = vmul.f32 %v1103, %v1103
    %v1248 = vmul.f32 %v1106, %v1106
    %v1249 = vmul.f32 %v1111, %v1111
    %v1250 = vmul.f32 %v1114, %v1114
    %v1251 = vmul.f32 %v1119, %v1119
    %v1252 = vmul.f32 %v1122, %v1122
    %v1253 = vmul.f32 %v1127, %v1127
    %v1254 = vmul.f32 %v1130, %v1130
    %v1255 = vmul.f32 %v1135, %v1135
    %v1256 = vmul.f32 %v1138, %v1138
    %v1257 = vmul.f32 %v1143, %v1143
    %v1258 = vmul.f32 %v1146, %v1146
    %v1259 = vmul.f32 %v1151, %v1151
    %v1260 = vmul.f32 %v1154, %v1154
    %v1261 = vmul.f32 %v1159, %v1159
    %v1262 = vmul.f32 %v1162, %v1162
    %1263 = vadd.xlane.f32.xlu0 %v1231
    %v1264 = vpop.xlane.xlu0 %1263
    %1265 = vadd.xlane.f32.xlu0 %v1232
    %v1266 = vpop.xlane.xlu0 %1265
    %1267 = vadd.xlane.f32.xlu0 %v1233
    %v1268 = vpop.xlane.xlu0 %1267
    %1269 = vadd.xlane.f32.xlu0 %v1234
    %v1270 = vpop.xlane.xlu0 %1269
    %1271 = vadd.xlane.f32.xlu0 %v1235
    %v1272 = vpop.xlane.xlu0 %1271
    %1273 = vadd.xlane.f32.xlu0 %v1236
    %v1274 = vpop.xlane.xlu0 %1273
    %1275 = vadd.xlane.f32.xlu0 %v1237
    %v1276 = vpop.xlane.xlu0 %1275
    %1277 = vadd.xlane.f32.xlu0 %v1238
    %v1278 = vpop.xlane.xlu0 %1277
    %1279 = vadd.xlane.f32.xlu0 %v1239
    %v1280 = vpop.xlane.xlu0 %1279
    %1281 = vadd.xlane.f32.xlu0 %v1240
    %v1282 = vpop.xlane.xlu0 %1281
    %1283 = vadd.xlane.f32.xlu0 %v1241
    %v1284 = vpop.xlane.xlu0 %1283
    %1285 = vadd.xlane.f32.xlu0 %v1242
    %v1286 = vpop.xlane.xlu0 %1285
    %1287 = vadd.xlane.f32.xlu0 %v1243
    %v1288 = vpop.xlane.xlu0 %1287
    %1289 = vadd.xlane.f32.xlu0 %v1244
    %v1290 = vpop.xlane.xlu0 %1289
    %1291 = vadd.xlane.f32.xlu0 %v1245
    %v1292 = vpop.xlane.xlu0 %1291
    %1293 = vadd.xlane.f32.xlu0 %v1246
    %v1294 = vpop.xlane.xlu0 %1293
    %1295 = vadd.xlane.f32.xlu0 %v1247
    %v1296 = vpop.xlane.xlu0 %1295
    %1297 = vadd.xlane.f32.xlu0 %v1248
    %v1298 = vpop.xlane.xlu0 %1297
    %1299 = vadd.xlane.f32.xlu0 %v1249
    %v1300 = vpop.xlane.xlu0 %1299
    %1301 = vadd.xlane.f32.xlu0 %v1250
    %v1302 = vpop.xlane.xlu0 %1301
    %1303 = vadd.xlane.f32.xlu0 %v1251
    %v1304 = vpop.xlane.xlu0 %1303
    %1305 = vadd.xlane.f32.xlu0 %v1252
    %v1306 = vpop.xlane.xlu0 %1305
    %1307 = vadd.xlane.f32.xlu0 %v1253
    %v1308 = vpop.xlane.xlu0 %1307
    %1309 = vadd.xlane.f32.xlu0 %v1254
    %v1310 = vpop.xlane.xlu0 %1309
    %1311 = vadd.xlane.f32.xlu0 %v1255
    %v1312 = vpop.xlane.xlu0 %1311
    %1313 = vadd.xlane.f32.xlu0 %v1256
    %v1314 = vpop.xlane.xlu0 %1313
    %1315 = vadd.xlane.f32.xlu0 %v1257
    %v1316 = vpop.xlane.xlu0 %1315
    %1317 = vadd.xlane.f32.xlu0 %v1258
    %v1318 = vpop.xlane.xlu0 %1317
    %1319 = vadd.xlane.f32.xlu0 %v1259
    %v1320 = vpop.xlane.xlu0 %1319
    %1321 = vadd.xlane.f32.xlu0 %v1260
    %v1322 = vpop.xlane.xlu0 %1321
    %1323 = vadd.xlane.f32.xlu0 %v1261
    %v1324 = vpop.xlane.xlu0 %1323
    %1325 = vadd.xlane.f32.xlu0 %v1262
    %v1326 = vpop.xlane.xlu0 %1325
    %v1327 = vmul.f32 %v1168, 0.0078125
    %v1328 = vmul.f32 %v1170, 0.0078125
    %v1329 = vmul.f32 %v1172, 0.0078125
    %v1330 = vmul.f32 %v1174, 0.0078125
    %v1331 = vmul.f32 %v1176, 0.0078125
    %v1332 = vmul.f32 %v1178, 0.0078125
    %v1333 = vmul.f32 %v1180, 0.0078125
    %v1334 = vmul.f32 %v1182, 0.0078125
    %v1335 = vmul.f32 %v1184, 0.0078125
    %v1336 = vmul.f32 %v1186, 0.0078125
    %v1337 = vmul.f32 %v1188, 0.0078125
    %v1338 = vmul.f32 %v1190, 0.0078125
    %v1339 = vmul.f32 %v1192, 0.0078125
    %v1340 = vmul.f32 %v1194, 0.0078125
    %v1341 = vmul.f32 %v1196, 0.0078125
    %v1342 = vmul.f32 %v1198, 0.0078125
    %v1343 = vmul.f32 %v1200, 0.0078125
    %v1344 = vmul.f32 %v1202, 0.0078125
    %v1345 = vmul.f32 %v1204, 0.0078125
    %v1346 = vmul.f32 %v1206, 0.0078125
    %v1347 = vmul.f32 %v1208, 0.0078125
    %v1348 = vmul.f32 %v1210, 0.0078125
    %v1349 = vmul.f32 %v1212, 0.0078125
    %v1350 = vmul.f32 %v1214, 0.0078125
    %v1351 = vmul.f32 %v1216, 0.0078125
    %v1352 = vmul.f32 %v1218, 0.0078125
    %v1353 = vmul.f32 %v1220, 0.0078125
    %v1354 = vmul.f32 %v1222, 0.0078125
    %v1355 = vmul.f32 %v1224, 0.0078125
    %v1356 = vmul.f32 %v1226, 0.0078125
    %v1357 = vmul.f32 %v1228, 0.0078125
    %v1358 = vmul.f32 %v1230, 0.0078125
    %v1359 = vmul.f32 %v1264, 0.0078125
    %v1360 = vmul.f32 %v1266, 0.0078125
    %v1361 = vmul.f32 %v1268, 0.0078125
    %v1362 = vmul.f32 %v1270, 0.0078125
    %v1363 = vmul.f32 %v1272, 0.0078125
    %v1364 = vmul.f32 %v1274, 0.0078125
    %v1365 = vmul.f32 %v1276, 0.0078125
    %v1366 = vmul.f32 %v1278, 0.0078125
    %v1367 = vmul.f32 %v1280, 0.0078125
    %v1368 = vmul.f32 %v1282, 0.0078125
    %v1369 = vmul.f32 %v1284, 0.0078125
    %v1370 = vmul.f32 %v1286, 0.0078125
    %v1371 = vmul.f32 %v1288, 0.0078125
    %v1372 = vmul.f32 %v1290, 0.0078125
    %v1373 = vmul.f32 %v1292, 0.0078125
    %v1374 = vmul.f32 %v1294, 0.0078125
    %v1375 = vmul.f32 %v1296, 0.0078125
    %v1376 = vmul.f32 %v1298, 0.0078125
    %v1377 = vmul.f32 %v1300, 0.0078125
    %v1378 = vmul.f32 %v1302, 0.0078125
    %v1379 = vmul.f32 %v1304, 0.0078125
    %v1380 = vmul.f32 %v1306, 0.0078125
    %v1381 = vmul.f32 %v1308, 0.0078125
    %v1382 = vmul.f32 %v1310, 0.0078125
    %v1383 = vmul.f32 %v1312, 0.0078125
    %v1384 = vmul.f32 %v1314, 0.0078125
    %v1385 = vmul.f32 %v1316, 0.0078125
    %v1386 = vmul.f32 %v1318, 0.0078125
    %v1387 = vmul.f32 %v1320, 0.0078125
    %v1388 = vmul.f32 %v1322, 0.0078125
    %v1389 = vmul.f32 %v1324, 0.0078125
    %v1390 = vmul.f32 %v1326, 0.0078125
    %v1391 = vmul.f32 %v1327, %v1327
    %v1392 = vmul.f32 %v1328, %v1328
    %v1393 = vmul.f32 %v1329, %v1329
    %v1394 = vmul.f32 %v1330, %v1330
    %v1395 = vmul.f32 %v1331, %v1331
    %v1396 = vmul.f32 %v1332, %v1332
    %v1397 = vmul.f32 %v1333, %v1333
    %v1398 = vmul.f32 %v1334, %v1334
    %v1399 = vmul.f32 %v1335, %v1335
    %v1400 = vmul.f32 %v1336, %v1336
    %v1401 = vmul.f32 %v1337, %v1337
    %v1402 = vmul.f32 %v1338, %v1338
    %v1403 = vmul.f32 %v1339, %v1339
    %v1404 = vmul.f32 %v1340, %v1340
    %v1405 = vmul.f32 %v1341, %v1341
    %v1406 = vmul.f32 %v1342, %v1342
    %v1407 = vmul.f32 %v1343, %v1343
    %v1408 = vmul.f32 %v1344, %v1344
    %v1409 = vmul.f32 %v1345, %v1345
    %v1410 = vmul.f32 %v1346, %v1346
    %v1411 = vmul.f32 %v1347, %v1347
    %v1412 = vmul.f32 %v1348, %v1348
    %v1413 = vmul.f32 %v1349, %v1349
    %v1414 = vmul.f32 %v1350, %v1350
    %v1415 = vmul.f32 %v1351, %v1351
    %v1416 = vmul.f32 %v1352, %v1352
    %v1417 = vmul.f32 %v1353, %v1353
    %v1418 = vmul.f32 %v1354, %v1354
    %v1419 = vmul.f32 %v1355, %v1355
    %v1420 = vmul.f32 %v1356, %v1356
    %v1421 = vmul.f32 %v1357, %v1357
    %v1422 = vmul.f32 %v1358, %v1358
    %v1423 = vsub.f32 %v1359, %v1391
    %v1424 = vsub.f32 %v1360, %v1392
    %v1425 = vsub.f32 %v1361, %v1393
    %v1426 = vsub.f32 %v1362, %v1394
    %v1427 = vsub.f32 %v1363, %v1395
    %v1428 = vsub.f32 %v1364, %v1396
    %v1429 = vsub.f32 %v1365, %v1397
    %v1430 = vsub.f32 %v1366, %v1398
    %v1431 = vsub.f32 %v1367, %v1399
    %v1432 = vsub.f32 %v1368, %v1400
    %v1433 = vsub.f32 %v1369, %v1401
    %v1434 = vsub.f32 %v1370, %v1402
    %v1435 = vsub.f32 %v1371, %v1403
    %v1436 = vsub.f32 %v1372, %v1404
    %v1437 = vsub.f32 %v1373, %v1405
    %v1438 = vsub.f32 %v1374, %v1406
    %v1439 = vsub.f32 %v1375, %v1407
    %v1440 = vsub.f32 %v1376, %v1408
    %v1441 = vsub.f32 %v1377, %v1409
    %v1442 = vsub.f32 %v1378, %v1410
    %v1443 = vsub.f32 %v1379, %v1411
    %v1444 = vsub.f32 %v1380, %v1412
    %v1445 = vsub.f32 %v1381, %v1413
    %v1446 = vsub.f32 %v1382, %v1414
    %v1447 = vsub.f32 %v1383, %v1415
    %v1448 = vsub.f32 %v1384, %v1416
    %v1449 = vsub.f32 %v1385, %v1417
    %v1450 = vsub.f32 %v1386, %v1418
    %v1451 = vsub.f32 %v1387, %v1419
    %v1452 = vsub.f32 %v1388, %v1420
    %v1453 = vsub.f32 %v1389, %v1421
    %v1454 = vsub.f32 %v1390, %v1422
    %v1455 = vadd.f32 %v1423, 1e-05
    %v1456 = vadd.f32 %v1424, 1e-05
    %v1457 = vadd.f32 %v1425, 1e-05
    %v1458 = vadd.f32 %v1426, 1e-05
    %v1459 = vadd.f32 %v1427, 1e-05
    %v1460 = vadd.f32 %v1428, 1e-05
    %v1461 = vadd.f32 %v1429, 1e-05
    %v1462 = vadd.f32 %v1430, 1e-05
    %v1463 = vadd.f32 %v1431, 1e-05
    %v1464 = vadd.f32 %v1432, 1e-05
    %v1465 = vadd.f32 %v1433, 1e-05
    %v1466 = vadd.f32 %v1434, 1e-05
    %v1467 = vadd.f32 %v1435, 1e-05
    %v1468 = vadd.f32 %v1436, 1e-05
    %v1469 = vadd.f32 %v1437, 1e-05
    %v1470 = vadd.f32 %v1438, 1e-05
    %v1471 = vadd.f32 %v1439, 1e-05
    %v1472 = vadd.f32 %v1440, 1e-05
    %v1473 = vadd.f32 %v1441, 1e-05
    %v1474 = vadd.f32 %v1442, 1e-05
    %v1475 = vadd.f32 %v1443, 1e-05
    %v1476 = vadd.f32 %v1444, 1e-05
    %v1477 = vadd.f32 %v1445, 1e-05
    %v1478 = vadd.f32 %v1446, 1e-05
    %v1479 = vadd.f32 %v1447, 1e-05
    %v1480 = vadd.f32 %v1448, 1e-05
    %v1481 = vadd.f32 %v1449, 1e-05
    %v1482 = vadd.f32 %v1450, 1e-05
    %v1483 = vadd.f32 %v1451, 1e-05
    %v1484 = vadd.f32 %v1452, 1e-05
    %v1485 = vadd.f32 %v1453, 1e-05
    %v1486 = vadd.f32 %v1454, 1e-05
    %v1487 = vrsqrt.pop %v1455
    %v1488 = vrsqrt.pop %v1456
    %v1489 = vrsqrt.pop %v1457
    %v1490 = vrsqrt.pop %v1458
    %v1491 = vrsqrt.pop %v1459
    %v1492 = vrsqrt.pop %v1460
    %v1493 = vrsqrt.pop %v1461
    %v1494 = vrsqrt.pop %v1462
    %v1495 = vrsqrt.pop %v1463
    %v1496 = vrsqrt.pop %v1464
    %v1497 = vrsqrt.pop %v1465
    %v1498 = vrsqrt.pop %v1466
    %v1499 = vrsqrt.pop %v1467
    %v1500 = vrsqrt.pop %v1468
    %v1501 = vrsqrt.pop %v1469
    %v1502 = vrsqrt.pop %v1470
    %v1503 = vrsqrt.pop %v1471
    %v1504 = vrsqrt.pop %v1472
    %v1505 = vrsqrt.pop %v1473
    %v1506 = vrsqrt.pop %v1474
    %v1507 = vrsqrt.pop %v1475
    %v1508 = vrsqrt.pop %v1476
    %v1509 = vrsqrt.pop %v1477
    %v1510 = vrsqrt.pop %v1478
    %v1511 = vrsqrt.pop %v1479
    %v1512 = vrsqrt.pop %v1480
    %v1513 = vrsqrt.pop %v1481
    %v1514 = vrsqrt.pop %v1482
    %v1515 = vrsqrt.pop %v1483
    %v1516 = vrsqrt.pop %v1484
    %v1517 = vrsqrt.pop %v1485
    %v1518 = vrsqrt.pop %v1486
    %v1519 = vsub.f32 %v1039, %v1327
    %v1520 = vsub.f32 %v1042, %v1328
    %v1521 = vsub.f32 %v1047, %v1329
    %v1522 = vsub.f32 %v1050, %v1330
    %v1523 = vsub.f32 %v1055, %v1331
    %v1524 = vsub.f32 %v1058, %v1332
    %v1525 = vsub.f32 %v1063, %v1333
    %v1526 = vsub.f32 %v1066, %v1334
    %v1527 = vsub.f32 %v1071, %v1335
    %v1528 = vsub.f32 %v1074, %v1336
    %v1529 = vsub.f32 %v1079, %v1337
    %v1530 = vsub.f32 %v1082, %v1338
    %v1531 = vsub.f32 %v1087, %v1339
    %v1532 = vsub.f32 %v1090, %v1340
    %v1533 = vsub.f32 %v1095, %v1341
    %v1534 = vsub.f32 %v1098, %v1342
    %v1535 = vsub.f32 %v1103, %v1343
    %v1536 = vsub.f32 %v1106, %v1344
    %v1537 = vsub.f32 %v1111, %v1345
    %v1538 = vsub.f32 %v1114, %v1346
    %v1539 = vsub.f32 %v1119, %v1347
    %v1540 = vsub.f32 %v1122, %v1348
    %v1541 = vsub.f32 %v1127, %v1349
    %v1542 = vsub.f32 %v1130, %v1350
    %v1543 = vsub.f32 %v1135, %v1351
    %v1544 = vsub.f32 %v1138, %v1352
    %v1545 = vsub.f32 %v1143, %v1353
    %v1546 = vsub.f32 %v1146, %v1354
    %v1547 = vsub.f32 %v1151, %v1355
    %v1548 = vsub.f32 %v1154, %v1356
    %v1549 = vsub.f32 %v1159, %v1357
    %v1550 = vsub.f32 %v1162, %v1358
    %v1552 = vlaneseq
    %v1553 = vshrl.u32 %v1552, 7
    %v1554 = vsub.s32 0, %v1553
    %v1555 = vrot.slane %v1165, %v1554
    %v1557 = vmul.f32 %v1487, %v1555
    %v1558 = vmul.f32 %v1488, %v1555
    %v1559 = vmul.f32 %v1489, %v1555
    %v1560 = vmul.f32 %v1490, %v1555
    %v1561 = vmul.f32 %v1491, %v1555
    %v1562 = vmul.f32 %v1492, %v1555
    %v1563 = vmul.f32 %v1493, %v1555
    %v1564 = vmul.f32 %v1494, %v1555
    %v1565 = vmul.f32 %v1495, %v1555
    %v1566 = vmul.f32 %v1496, %v1555
    %v1567 = vmul.f32 %v1497, %v1555
    %v1568 = vmul.f32 %v1498, %v1555
    %v1569 = vmul.f32 %v1499, %v1555
    %v1570 = vmul.f32 %v1500, %v1555
    %v1571 = vmul.f32 %v1501, %v1555
    %v1572 = vmul.f32 %v1502, %v1555
    %v1573 = vmul.f32 %v1503, %v1555
    %v1574 = vmul.f32 %v1504, %v1555
    %v1575 = vmul.f32 %v1505, %v1555
    %v1576 = vmul.f32 %v1506, %v1555
    %v1577 = vmul.f32 %v1507, %v1555
    %v1578 = vmul.f32 %v1508, %v1555
    %v1579 = vmul.f32 %v1509, %v1555
    %v1580 = vmul.f32 %v1510, %v1555
    %v1581 = vmul.f32 %v1511, %v1555
    %v1582 = vmul.f32 %v1512, %v1555
    %v1583 = vmul.f32 %v1513, %v1555
    %v1584 = vmul.f32 %v1514, %v1555
    %v1585 = vmul.f32 %v1515, %v1555
    %v1586 = vmul.f32 %v1516, %v1555
    %v1587 = vmul.f32 %v1517, %v1555
    %v1588 = vmul.f32 %v1518, %v1555
    %v1589 = vmul.f32 %v1519, %v1557
    %v1590 = vmul.f32 %v1520, %v1558
    %v1591 = vmul.f32 %v1521, %v1559
    %v1592 = vmul.f32 %v1522, %v1560
    %v1593 = vmul.f32 %v1523, %v1561
    %v1594 = vmul.f32 %v1524, %v1562
    %v1595 = vmul.f32 %v1525, %v1563
    %v1596 = vmul.f32 %v1526, %v1564
    %v1597 = vmul.f32 %v1527, %v1565
    %v1598 = vmul.f32 %v1528, %v1566
    %v1599 = vmul.f32 %v1529, %v1567
    %v1600 = vmul.f32 %v1530, %v1568
    %v1601 = vmul.f32 %v1531, %v1569
    %v1602 = vmul.f32 %v1532, %v1570
    %v1603 = vmul.f32 %v1533, %v1571
    %v1604 = vmul.f32 %v1534, %v1572
    %v1605 = vmul.f32 %v1535, %v1573
    %v1606 = vmul.f32 %v1536, %v1574
    %v1607 = vmul.f32 %v1537, %v1575
    %v1608 = vmul.f32 %v1538, %v1576
    %v1609 = vmul.f32 %v1539, %v1577
    %v1610 = vmul.f32 %v1540, %v1578
    %v1611 = vmul.f32 %v1541, %v1579
    %v1612 = vmul.f32 %v1542, %v1580
    %v1613 = vmul.f32 %v1543, %v1581
    %v1614 = vmul.f32 %v1544, %v1582
    %v1615 = vmul.f32 %v1545, %v1583
    %v1616 = vmul.f32 %v1546, %v1584
    %v1617 = vmul.f32 %v1547, %v1585
    %v1618 = vmul.f32 %v1548, %v1586
    %v1619 = vmul.f32 %v1549, %v1587
    %v1620 = vmul.f32 %v1550, %v1588
    %v1622 = vlaneseq
    %v1623 = vshrl.u32 %v1622, 7
    %v1624 = vsub.s32 0, %v1623
    %v1625 = vrot.slane %v1166, %v1624
    %v1627 = vadd.f32 %v1589, %v1625
    %v1628 = vadd.f32 %v1590, %v1625
    %v1629 = vadd.f32 %v1591, %v1625
    %v1630 = vadd.f32 %v1592, %v1625
    %v1631 = vadd.f32 %v1593, %v1625
    %v1632 = vadd.f32 %v1594, %v1625
    %v1633 = vadd.f32 %v1595, %v1625
    %v1634 = vadd.f32 %v1596, %v1625
    %v1635 = vadd.f32 %v1597, %v1625
    %v1636 = vadd.f32 %v1598, %v1625
    %v1637 = vadd.f32 %v1599, %v1625
    %v1638 = vadd.f32 %v1600, %v1625
    %v1639 = vadd.f32 %v1601, %v1625
    %v1640 = vadd.f32 %v1602, %v1625
    %v1641 = vadd.f32 %v1603, %v1625
    %v1642 = vadd.f32 %v1604, %v1625
    %v1643 = vadd.f32 %v1605, %v1625
    %v1644 = vadd.f32 %v1606, %v1625
    %v1645 = vadd.f32 %v1607, %v1625
    %v1646 = vadd.f32 %v1608, %v1625
    %v1647 = vadd.f32 %v1609, %v1625
    %v1648 = vadd.f32 %v1610, %v1625
    %v1649 = vadd.f32 %v1611, %v1625
    %v1650 = vadd.f32 %v1612, %v1625
    %v1651 = vadd.f32 %v1613, %v1625
    %v1652 = vadd.f32 %v1614, %v1625
    %v1653 = vadd.f32 %v1615, %v1625
    %v1654 = vadd.f32 %v1616, %v1625
    %v1655 = vadd.f32 %v1617, %v1625
    %v1656 = vadd.f32 %v1618, %v1625
    %v1657 = vadd.f32 %v1619, %v1625
    %v1658 = vadd.f32 %v1620, %v1625
    %v1659 = vmax.f32 %v1627, 0.0
    %v1660 = vmax.f32 %v1628, 0.0
    %v1661 = vmax.f32 %v1629, 0.0
    %v1662 = vmax.f32 %v1630, 0.0
    %v1663 = vmax.f32 %v1631, 0.0
    %v1664 = vmax.f32 %v1632, 0.0
    %v1665 = vmax.f32 %v1633, 0.0
    %v1666 = vmax.f32 %v1634, 0.0
    %v1667 = vmax.f32 %v1635, 0.0
    %v1668 = vmax.f32 %v1636, 0.0
    %v1669 = vmax.f32 %v1637, 0.0
    %v1670 = vmax.f32 %v1638, 0.0
    %v1671 = vmax.f32 %v1639, 0.0
    %v1672 = vmax.f32 %v1640, 0.0
    %v1673 = vmax.f32 %v1641, 0.0
    %v1674 = vmax.f32 %v1642, 0.0
    %v1675 = vmax.f32 %v1643, 0.0
    %v1676 = vmax.f32 %v1644, 0.0
    %v1677 = vmax.f32 %v1645, 0.0
    %v1678 = vmax.f32 %v1646, 0.0
    %v1679 = vmax.f32 %v1647, 0.0
    %v1680 = vmax.f32 %v1648, 0.0
    %v1681 = vmax.f32 %v1649, 0.0
    %v1682 = vmax.f32 %v1650, 0.0
    %v1683 = vmax.f32 %v1651, 0.0
    %v1684 = vmax.f32 %v1652, 0.0
    %v1685 = vmax.f32 %v1653, 0.0
    %v1686 = vmax.f32 %v1654, 0.0
    %v1687 = vmax.f32 %v1655, 0.0
    %v1688 = vmax.f32 %v1656, 0.0
    %v1689 = vmax.f32 %v1657, 0.0
    %v1690 = vmax.f32 %v1658, 0.0
    %v1691 = vpack.c.bf16 %v1660, %v1659
    %v1692 = vpack.c.bf16 %v1662, %v1661
    %v1693 = vpack.c.bf16 %v1664, %v1663
    %v1694 = vpack.c.bf16 %v1666, %v1665
    %v1695 = vpack.c.bf16 %v1668, %v1667
    %v1696 = vpack.c.bf16 %v1670, %v1669
    %v1697 = vpack.c.bf16 %v1672, %v1671
    %v1698 = vpack.c.bf16 %v1674, %v1673
    %v1699 = vpack.c.bf16 %v1676, %v1675
    %v1700 = vpack.c.bf16 %v1678, %v1677
    %v1701 = vpack.c.bf16 %v1680, %v1679
    %v1702 = vpack.c.bf16 %v1682, %v1681
    %v1703 = vpack.c.bf16 %v1684, %v1683
    %v1704 = vpack.c.bf16 %v1686, %v1685
    %v1705 = vpack.c.bf16 %v1688, %v1687
    %v1706 = vpack.c.bf16 %v1690, %v1689
    %s1707 = scalar_lea.vmem [#allocation2], 64
    %v1708 = vld [vmem:[%s1707] sm:$0xf]
    %v1709 = vld [vmem:[%s1707 + $0x4] sm:$0xf]
    %v1710 = vld [vmem:[%s1707 + $0x8] sm:$0xf]
    %v1711 = vld [vmem:[%s1707 + $0xc] sm:$0xf]
    %v1712 = vld [vmem:[%s1707 + $0x10] sm:$0xf]
    %v1713 = vld [vmem:[%s1707 + $0x14] sm:$0xf]
    %v1714 = vld [vmem:[%s1707 + $0x18] sm:$0xf]
    %v1715 = vld [vmem:[%s1707 + $0x1c] sm:$0xf]
    %v1716 = vld [vmem:[%s1707 + $0x20] sm:$0xf]
    %v1717 = vld [vmem:[%s1707 + $0x24] sm:$0xf]
    %v1718 = vld [vmem:[%s1707 + $0x28] sm:$0xf]
    %v1719 = vld [vmem:[%s1707 + $0x2c] sm:$0xf]
    %v1720 = vld [vmem:[%s1707 + $0x30] sm:$0xf]
    %v1721 = vld [vmem:[%s1707 + $0x34] sm:$0xf]
    %v1722 = vld [vmem:[%s1707 + $0x38] sm:$0xf]
    %v1723 = vld [vmem:[%s1707 + $0x3c] sm:$0xf]
    %s1724 = scalar_lea.vmem %s6, 1
    %v1725 = vld [vmem:[%s1724] sm:$0x1]
    %v1727 = vlaneseq
    %v1728 = vshrl.u32 %v1727, 7
    %v1729 = vsub.s32 0, %v1728
    %v1730 = vrot.slane %v1725, %v1729
    %v1748 = vunpack.c.l.b16 %v1708
    %v1749 = vunpack.c.l.b16 %v1709
    %v1750 = vunpack.c.l.b16 %v1710
    %v1751 = vunpack.c.l.b16 %v1711
    %v1752 = vunpack.c.l.b16 %v1712
    %v1753 = vunpack.c.l.b16 %v1713
    %v1754 = vunpack.c.l.b16 %v1714
    %v1755 = vunpack.c.l.b16 %v1715
    %v1756 = vunpack.c.l.b16 %v1716
    %v1757 = vunpack.c.l.b16 %v1717
    %v1758 = vunpack.c.l.b16 %v1718
    %v1759 = vunpack.c.l.b16 %v1719
    %v1760 = vunpack.c.l.b16 %v1720
    %v1761 = vunpack.c.l.b16 %v1721
    %v1762 = vunpack.c.l.b16 %v1722
    %v1763 = vunpack.c.l.b16 %v1723
    %v1764 = vpack.c.b16 %v1749, %v1748
    %v1765 = vpack.c.b16 %v1751, %v1750
    %v1766 = vpack.c.b16 %v1753, %v1752
    %v1767 = vpack.c.b16 %v1755, %v1754
    %v1768 = vpack.c.b16 %v1757, %v1756
    %v1769 = vpack.c.b16 %v1759, %v1758
    %v1770 = vpack.c.b16 %v1761, %v1760
    %v1771 = vpack.c.b16 %v1763, %v1762
    %1780 = vmatprep.subr.bf16.mxu0 0
    %1781 = vmatpush1.bf16.msra.mxu0 %v1764
    %1782 = vmatprep.subr.bf16.mxu0 0
    %1783 = vmatpush1.bf16.msra.mxu0 %v1765
    %1784 = vmatprep.subr.bf16.mxu0 0
    %1785 = vmatpush1.bf16.msra.mxu0 %v1766
    %1786 = vmatprep.subr.bf16.mxu0 0
    %1787 = vmatpush1.bf16.msra.mxu0 %v1767
    %1788 = vmatprep.subr.bf16.mxu0 0
    %1789 = vmatpush1.bf16.msra.mxu0 %v1768
    %1790 = vmatprep.subr.bf16.mxu0 0
    %1791 = vmatpush1.bf16.msra.mxu0 %v1769
    %1792 = vmatprep.subr.bf16.mxu0 0
    %1793 = vmatpush1.bf16.msra.mxu0 %v1770
    %1794 = vmatprep.subr.bf16.mxu0 0
    %1795 = vmatpush1.bf16.msra.mxu0 %v1771
    %1796 = vmatprep.subr.bf16.mxu0 0
    %1797 = vmatpush1.bf16.msra.mxu0 0
    %1798 = vmatprep.subr.bf16.mxu0 0
    %1799 = vmatpush1.bf16.msra.mxu0 0
    %1800 = vmatprep.subr.bf16.mxu0 0
    %1801 = vmatpush1.bf16.msra.mxu0 0
    %1802 = vmatprep.subr.bf16.mxu0 0
    %1803 = vmatpush1.bf16.msra.mxu0 0
    %1804 = vmatprep.subr.bf16.mxu0 0
    %1805 = vmatpush1.bf16.msra.mxu0 0
    %1806 = vmatprep.subr.bf16.mxu0 0
    %1807 = vmatpush1.bf16.msra.mxu0 0
    %1808 = vmatprep.subr.bf16.mxu0 0
    %1809 = vmatpush1.bf16.msra.mxu0 0
    %1810 = vmatprep.subr.bf16.mxu0 0
    %1811 = vmatpush1.bf16.msra.mxu0 0
    %1812 = vmatprep.mubr.bf16.mxu0 0
    %1813 = vmatmul.mubr.bf16.gmra.mrb[0].mxu0 %v1691
    %v1814 = vpop.f32.mrb[0].mxu0
    %v1815 = vadd.f32 %v1730, %v1814
    %v1816 = vpop.f32.mrb[0].mxu0
    %v1817 = vpop.f32.mrb[0].mxu0
    %v1818 = vadd.f32 %v1730, %v1817
    %v1819 = vpop.f32.mrb[0].mxu0
    %1820 = vmatprep.mubr.bf16.mxu0 0
    %1821 = vmatmul.mubr.bf16.gmra.mrb[0].mxu0 %v1692
    %v1822 = vpop.f32.mrb[0].mxu0
    %v1823 = vadd.f32 %v1730, %v1822
    %v1824 = vpop.f32.mrb[0].mxu0
    %v1825 = vpop.f32.mrb[0].mxu0
    %v1826 = vadd.f32 %v1730, %v1825
    %v1827 = vpop.f32.mrb[0].mxu0
    %1828 = vmatprep.mubr.bf16.mxu0 0
    %1829 = vmatmul.mubr.bf16.gmra.mrb[0].mxu0 %v1693
    %v1830 = vpop.f32.mrb[0].mxu0
    %v1831 = vadd.f32 %v1730, %v1830
    %v1832 = vpop.f32.mrb[0].mxu0
    %v1833 = vpop.f32.mrb[0].mxu0
    %v1834 = vadd.f32 %v1730, %v1833
    %v1835 = vpop.f32.mrb[0].mxu0
    %1836 = vmatprep.mubr.bf16.mxu0 0
    %1837 = vmatmul.mubr.bf16.gmra.mrb[0].mxu0 %v1694
    %v1838 = vpop.f32.mrb[0].mxu0
    %v1839 = vadd.f32 %v1730, %v1838
    %v1840 = vpop.f32.mrb[0].mxu0
    %v1841 = vpop.f32.mrb[0].mxu0
    %v1842 = vadd.f32 %v1730, %v1841
    %v1843 = vpop.f32.mrb[0].mxu0
    %1844 = vmatprep.mubr.bf16.mxu0 0
    %1845 = vmatmul.mubr.bf16.gmra.mrb[0].mxu0 %v1695
    %v1846 = vpop.f32.mrb[0].mxu0
    %v1847 = vadd.f32 %v1730, %v1846
    %v1848 = vpop.f32.mrb[0].mxu0
    %v1849 = vpop.f32.mrb[0].mxu0
    %v1850 = vadd.f32 %v1730, %v1849
    %v1851 = vpop.f32.mrb[0].mxu0
    %1852 = vmatprep.mubr.bf16.mxu0 0
    %1853 = vmatmul.mubr.bf16.gmra.mrb[0].mxu0 %v1696
    %v1854 = vpop.f32.mrb[0].mxu0
    %v1855 = vadd.f32 %v1730, %v1854
    %v1856 = vpop.f32.mrb[0].mxu0
    %v1857 = vpop.f32.mrb[0].mxu0
    %v1858 = vadd.f32 %v1730, %v1857
    %v1859 = vpop.f32.mrb[0].mxu0
    %1860 = vmatprep.mubr.bf16.mxu0 0
    %1861 = vmatmul.mubr.bf16.gmra.mrb[0].mxu0 %v1697
    %v1862 = vpop.f32.mrb[0].mxu0
    %v1863 = vadd.f32 %v1730, %v1862
    %v1864 = vpop.f32.mrb[0].mxu0
    %v1865 = vpop.f32.mrb[0].mxu0
    %v1866 = vadd.f32 %v1730, %v1865
    %v1867 = vpop.f32.mrb[0].mxu0
    %1868 = vmatprep.mubr.bf16.mxu0 0
    %1869 = vmatmul.mubr.bf16.gmra.mrb[0].mxu0 %v1698
    %v1870 = vpop.f32.mrb[0].mxu0
    %v1871 = vadd.f32 %v1730, %v1870
    %v1872 = vpop.f32.mrb[0].mxu0
    %v1873 = vpop.f32.mrb[0].mxu0
    %v1874 = vadd.f32 %v1730, %v1873
    %v1875 = vpop.f32.mrb[0].mxu0
    %1876 = vmatprep.mubr.bf16.mxu0 0
    %1877 = vmatmul.mubr.bf16.gmra.mrb[0].mxu0 %v1699
    %v1878 = vpop.f32.mrb[0].mxu0
    %v1879 = vadd.f32 %v1730, %v1878
    %v1880 = vpop.f32.mrb[0].mxu0
    %v1881 = vpop.f32.mrb[0].mxu0
    %v1882 = vadd.f32 %v1730, %v1881
    %v1883 = vpop.f32.mrb[0].mxu0
    %1884 = vmatprep.mubr.bf16.mxu0 0
    %1885 = vmatmul.mubr.bf16.gmra.mrb[0].mxu0 %v1700
    %v1886 = vpop.f32.mrb[0].mxu0
    %v1887 = vadd.f32 %v1730, %v1886
    %v1888 = vpop.f32.mrb[0].mxu0
    %v1889 = vpop.f32.mrb[0].mxu0
    %v1890 = vadd.f32 %v1730, %v1889
    %v1891 = vpop.f32.mrb[0].mxu0
    %1892 = vmatprep.mubr.bf16.mxu0 0
    %1893 = vmatmul.mubr.bf16.gmra.mrb[0].mxu0 %v1701
    %v1894 = vpop.f32.mrb[0].mxu0
    %v1895 = vadd.f32 %v1730, %v1894
    %v1896 = vpop.f32.mrb[0].mxu0
    %v1897 = vpop.f32.mrb[0].mxu0
    %v1898 = vadd.f32 %v1730, %v1897
    %v1899 = vpop.f32.mrb[0].mxu0
    %1900 = vmatprep.mubr.bf16.mxu0 0
    %1901 = vmatmul.mubr.bf16.gmra.mrb[0].mxu0 %v1702
    %v1902 = vpop.f32.mrb[0].mxu0
    %v1903 = vadd.f32 %v1730, %v1902
    %v1904 = vpop.f32.mrb[0].mxu0
    %v1905 = vpop.f32.mrb[0].mxu0
    %v1906 = vadd.f32 %v1730, %v1905
    %v1907 = vpop.f32.mrb[0].mxu0
    %1908 = vmatprep.mubr.bf16.mxu0 0
    %1909 = vmatmul.mubr.bf16.gmra.mrb[0].mxu0 %v1703
    %v1910 = vpop.f32.mrb[0].mxu0
    %v1911 = vadd.f32 %v1730, %v1910
    %v1912 = vpop.f32.mrb[0].mxu0
    %v1913 = vpop.f32.mrb[0].mxu0
    %v1914 = vadd.f32 %v1730, %v1913
    %v1915 = vpop.f32.mrb[0].mxu0
    %1916 = vmatprep.mubr.bf16.mxu0 0
    %1917 = vmatmul.mubr.bf16.gmra.mrb[0].mxu0 %v1704
    %v1918 = vpop.f32.mrb[0].mxu0
    %v1919 = vadd.f32 %v1730, %v1918
    %v1920 = vpop.f32.mrb[0].mxu0
    %v1921 = vpop.f32.mrb[0].mxu0
    %v1922 = vadd.f32 %v1730, %v1921
    %v1923 = vpop.f32.mrb[0].mxu0
    %1924 = vmatprep.mubr.bf16.mxu0 0
    %1925 = vmatmul.mubr.bf16.gmra.mrb[0].mxu0 %v1705
    %v1926 = vpop.f32.mrb[0].mxu0
    %v1927 = vadd.f32 %v1730, %v1926
    %v1928 = vpop.f32.mrb[0].mxu0
    %v1929 = vpop.f32.mrb[0].mxu0
    %v1930 = vadd.f32 %v1730, %v1929
    %v1931 = vpop.f32.mrb[0].mxu0
    %1932 = vmatprep.mubr.bf16.mxu0 0
    %1933 = vmatmul.mubr.bf16.gmra.mrb[0].mxu0 %v1706
    %v1934 = vpop.f32.mrb[0].mxu0
    %v1935 = vadd.f32 %v1730, %v1934
    %v1936 = vpop.f32.mrb[0].mxu0
    %v1937 = vpop.f32.mrb[0].mxu0
    %v1938 = vadd.f32 %v1730, %v1937
    %v1939 = vpop.f32.mrb[0].mxu0
    %1940 = vdwg.mxu0
    %s1941 = scalar_lea.vmem %s7, 1
    %v1942 = vld [vmem:[%s1941] sm:$0x1]
    %s1943 = scalar_lea.vmem %s8, 1
    %v1944 = vld [vmem:[%s1943] sm:$0x1]
    %1945 = vadd.xlane.f32.xlu0 %v1815
    %v1946 = vpop.xlane.xlu0 %1945
    %1947 = vadd.xlane.f32.xlu0 %v1818
    %v1948 = vpop.xlane.xlu0 %1947
    %1949 = vadd.xlane.f32.xlu0 %v1823
    %v1950 = vpop.xlane.xlu0 %1949
    %1951 = vadd.xlane.f32.xlu0 %v1826
    %v1952 = vpop.xlane.xlu0 %1951
    %1953 = vadd.xlane.f32.xlu0 %v1831
    %v1954 = vpop.xlane.xlu0 %1953
    %1955 = vadd.xlane.f32.xlu0 %v1834
    %v1956 = vpop.xlane.xlu0 %1955
    %1957 = vadd.xlane.f32.xlu0 %v1839
    %v1958 = vpop.xlane.xlu0 %1957
    %1959 = vadd.xlane.f32.xlu0 %v1842
    %v1960 = vpop.xlane.xlu0 %1959
    %1961 = vadd.xlane.f32.xlu0 %v1847
    %v1962 = vpop.xlane.xlu0 %1961
    %1963 = vadd.xlane.f32.xlu0 %v1850
    %v1964 = vpop.xlane.xlu0 %1963
    %1965 = vadd.xlane.f32.xlu0 %v1855
    %v1966 = vpop.xlane.xlu0 %1965
    %1967 = vadd.xlane.f32.xlu0 %v1858
    %v1968 = vpop.xlane.xlu0 %1967
    %1969 = vadd.xlane.f32.xlu0 %v1863
    %v1970 = vpop.xlane.xlu0 %1969
    %1971 = vadd.xlane.f32.xlu0 %v1866
    %v1972 = vpop.xlane.xlu0 %1971
    %1973 = vadd.xlane.f32.xlu0 %v1871
    %v1974 = vpop.xlane.xlu0 %1973
    %1975 = vadd.xlane.f32.xlu0 %v1874
    %v1976 = vpop.xlane.xlu0 %1975
    %1977 = vadd.xlane.f32.xlu0 %v1879
    %v1978 = vpop.xlane.xlu0 %1977
    %1979 = vadd.xlane.f32.xlu0 %v1882
    %v1980 = vpop.xlane.xlu0 %1979
    %1981 = vadd.xlane.f32.xlu0 %v1887
    %v1982 = vpop.xlane.xlu0 %1981
    %1983 = vadd.xlane.f32.xlu0 %v1890
    %v1984 = vpop.xlane.xlu0 %1983
    %1985 = vadd.xlane.f32.xlu0 %v1895
    %v1986 = vpop.xlane.xlu0 %1985
    %1987 = vadd.xlane.f32.xlu0 %v1898
    %v1988 = vpop.xlane.xlu0 %1987
    %1989 = vadd.xlane.f32.xlu0 %v1903
    %v1990 = vpop.xlane.xlu0 %1989
    %1991 = vadd.xlane.f32.xlu0 %v1906
    %v1992 = vpop.xlane.xlu0 %1991
    %1993 = vadd.xlane.f32.xlu0 %v1911
    %v1994 = vpop.xlane.xlu0 %1993
    %1995 = vadd.xlane.f32.xlu0 %v1914
    %v1996 = vpop.xlane.xlu0 %1995
    %1997 = vadd.xlane.f32.xlu0 %v1919
    %v1998 = vpop.xlane.xlu0 %1997
    %1999 = vadd.xlane.f32.xlu0 %v1922
    %v2000 = vpop.xlane.xlu0 %1999
    %2001 = vadd.xlane.f32.xlu0 %v1927
    %v2002 = vpop.xlane.xlu0 %2001
    %2003 = vadd.xlane.f32.xlu0 %v1930
    %v2004 = vpop.xlane.xlu0 %2003
    %2005 = vadd.xlane.f32.xlu0 %v1935
    %v2006 = vpop.xlane.xlu0 %2005
    %2007 = vadd.xlane.f32.xlu0 %v1938
    %v2008 = vpop.xlane.xlu0 %2007
    %v2009 = vmul.f32 %v1815, %v1815
    %v2010 = vmul.f32 %v1818, %v1818
    %v2011 = vmul.f32 %v1823, %v1823
    %v2012 = vmul.f32 %v1826, %v1826
    %v2013 = vmul.f32 %v1831, %v1831
    %v2014 = vmul.f32 %v1834, %v1834
    %v2015 = vmul.f32 %v1839, %v1839
    %v2016 = vmul.f32 %v1842, %v1842
    %v2017 = vmul.f32 %v1847, %v1847
    %v2018 = vmul.f32 %v1850, %v1850
    %v2019 = vmul.f32 %v1855, %v1855
    %v2020 = vmul.f32 %v1858, %v1858
    %v2021 = vmul.f32 %v1863, %v1863
    %v2022 = vmul.f32 %v1866, %v1866
    %v2023 = vmul.f32 %v1871, %v1871
    %v2024 = vmul.f32 %v1874, %v1874
    %v2025 = vmul.f32 %v1879, %v1879
    %v2026 = vmul.f32 %v1882, %v1882
    %v2027 = vmul.f32 %v1887, %v1887
    %v2028 = vmul.f32 %v1890, %v1890
    %v2029 = vmul.f32 %v1895, %v1895
    %v2030 = vmul.f32 %v1898, %v1898
    %v2031 = vmul.f32 %v1903, %v1903
    %v2032 = vmul.f32 %v1906, %v1906
    %v2033 = vmul.f32 %v1911, %v1911
    %v2034 = vmul.f32 %v1914, %v1914
    %v2035 = vmul.f32 %v1919, %v1919
    %v2036 = vmul.f32 %v1922, %v1922
    %v2037 = vmul.f32 %v1927, %v1927
    %v2038 = vmul.f32 %v1930, %v1930
    %v2039 = vmul.f32 %v1935, %v1935
    %v2040 = vmul.f32 %v1938, %v1938
    %2041 = vadd.xlane.f32.xlu0 %v2009
    %v2042 = vpop.xlane.xlu0 %2041
    %2043 = vadd.xlane.f32.xlu0 %v2010
    %v2044 = vpop.xlane.xlu0 %2043
    %2045 = vadd.xlane.f32.xlu0 %v2011
    %v2046 = vpop.xlane.xlu0 %2045
    %2047 = vadd.xlane.f32.xlu0 %v2012
    %v2048 = vpop.xlane.xlu0 %2047
    %2049 = vadd.xlane.f32.xlu0 %v2013
    %v2050 = vpop.xlane.xlu0 %2049
    %2051 = vadd.xlane.f32.xlu0 %v2014
    %v2052 = vpop.xlane.xlu0 %2051
    %2053 = vadd.xlane.f32.xlu0 %v2015
    %v2054 = vpop.xlane.xlu0 %2053
    %2055 = vadd.xlane.f32.xlu0 %v2016
    %v2056 = vpop.xlane.xlu0 %2055
    %2057 = vadd.xlane.f32.xlu0 %v2017
    %v2058 = vpop.xlane.xlu0 %2057
    %2059 = vadd.xlane.f32.xlu0 %v2018
    %v2060 = vpop.xlane.xlu0 %2059
    %2061 = vadd.xlane.f32.xlu0 %v2019
    %v2062 = vpop.xlane.xlu0 %2061
    %2063 = vadd.xlane.f32.xlu0 %v2020
    %v2064 = vpop.xlane.xlu0 %2063
    %2065 = vadd.xlane.f32.xlu0 %v2021
    %v2066 = vpop.xlane.xlu0 %2065
    %2067 = vadd.xlane.f32.xlu0 %v2022
    %v2068 = vpop.xlane.xlu0 %2067
    %2069 = vadd.xlane.f32.xlu0 %v2023
    %v2070 = vpop.xlane.xlu0 %2069
    %2071 = vadd.xlane.f32.xlu0 %v2024
    %v2072 = vpop.xlane.xlu0 %2071
    %2073 = vadd.xlane.f32.xlu0 %v2025
    %v2074 = vpop.xlane.xlu0 %2073
    %2075 = vadd.xlane.f32.xlu0 %v2026
    %v2076 = vpop.xlane.xlu0 %2075
    %2077 = vadd.xlane.f32.xlu0 %v2027
    %v2078 = vpop.xlane.xlu0 %2077
    %2079 = vadd.xlane.f32.xlu0 %v2028
    %v2080 = vpop.xlane.xlu0 %2079
    %2081 = vadd.xlane.f32.xlu0 %v2029
    %v2082 = vpop.xlane.xlu0 %2081
    %2083 = vadd.xlane.f32.xlu0 %v2030
    %v2084 = vpop.xlane.xlu0 %2083
    %2085 = vadd.xlane.f32.xlu0 %v2031
    %v2086 = vpop.xlane.xlu0 %2085
    %2087 = vadd.xlane.f32.xlu0 %v2032
    %v2088 = vpop.xlane.xlu0 %2087
    %2089 = vadd.xlane.f32.xlu0 %v2033
    %v2090 = vpop.xlane.xlu0 %2089
    %2091 = vadd.xlane.f32.xlu0 %v2034
    %v2092 = vpop.xlane.xlu0 %2091
    %2093 = vadd.xlane.f32.xlu0 %v2035
    %v2094 = vpop.xlane.xlu0 %2093
    %2095 = vadd.xlane.f32.xlu0 %v2036
    %v2096 = vpop.xlane.xlu0 %2095
    %2097 = vadd.xlane.f32.xlu0 %v2037
    %v2098 = vpop.xlane.xlu0 %2097
    %2099 = vadd.xlane.f32.xlu0 %v2038
    %v2100 = vpop.xlane.xlu0 %2099
    %2101 = vadd.xlane.f32.xlu0 %v2039
    %v2102 = vpop.xlane.xlu0 %2101
    %2103 = vadd.xlane.f32.xlu0 %v2040
    %v2104 = vpop.xlane.xlu0 %2103
    %v2105 = vmul.f32 %v1946, 0.0078125
    %v2106 = vmul.f32 %v1948, 0.0078125
    %v2107 = vmul.f32 %v1950, 0.0078125
    %v2108 = vmul.f32 %v1952, 0.0078125
    %v2109 = vmul.f32 %v1954, 0.0078125
    %v2110 = vmul.f32 %v1956, 0.0078125
    %v2111 = vmul.f32 %v1958, 0.0078125
    %v2112 = vmul.f32 %v1960, 0.0078125
    %v2113 = vmul.f32 %v1962, 0.0078125
    %v2114 = vmul.f32 %v1964, 0.0078125
    %v2115 = vmul.f32 %v1966, 0.0078125
    %v2116 = vmul.f32 %v1968, 0.0078125
    %v2117 = vmul.f32 %v1970, 0.0078125
    %v2118 = vmul.f32 %v1972, 0.0078125
    %v2119 = vmul.f32 %v1974, 0.0078125
    %v2120 = vmul.f32 %v1976, 0.0078125
    %v2121 = vmul.f32 %v1978, 0.0078125
    %v2122 = vmul.f32 %v1980, 0.0078125
    %v2123 = vmul.f32 %v1982, 0.0078125
    %v2124 = vmul.f32 %v1984, 0.0078125
    %v2125 = vmul.f32 %v1986, 0.0078125
    %v2126 = vmul.f32 %v1988, 0.0078125
    %v2127 = vmul.f32 %v1990, 0.0078125
    %v2128 = vmul.f32 %v1992, 0.0078125
    %v2129 = vmul.f32 %v1994, 0.0078125
    %v2130 = vmul.f32 %v1996, 0.0078125
    %v2131 = vmul.f32 %v1998, 0.0078125
    %v2132 = vmul.f32 %v2000, 0.0078125
    %v2133 = vmul.f32 %v2002, 0.0078125
    %v2134 = vmul.f32 %v2004, 0.0078125
    %v2135 = vmul.f32 %v2006, 0.0078125
    %v2136 = vmul.f32 %v2008, 0.0078125
    %v2137 = vmul.f32 %v2042, 0.0078125
    %v2138 = vmul.f32 %v2044, 0.0078125
    %v2139 = vmul.f32 %v2046, 0.0078125
    %v2140 = vmul.f32 %v2048, 0.0078125
    %v2141 = vmul.f32 %v2050, 0.0078125
    %v2142 = vmul.f32 %v2052, 0.0078125
    %v2143 = vmul.f32 %v2054, 0.0078125
    %v2144 = vmul.f32 %v2056, 0.0078125
    %v2145 = vmul.f32 %v2058, 0.0078125
    %v2146 = vmul.f32 %v2060, 0.0078125
    %v2147 = vmul.f32 %v2062, 0.0078125
    %v2148 = vmul.f32 %v2064, 0.0078125
    %v2149 = vmul.f32 %v2066, 0.0078125
    %v2150 = vmul.f32 %v2068, 0.0078125
    %v2151 = vmul.f32 %v2070, 0.0078125
    %v2152 = vmul.f32 %v2072, 0.0078125
    %v2153 = vmul.f32 %v2074, 0.0078125
    %v2154 = vmul.f32 %v2076, 0.0078125
    %v2155 = vmul.f32 %v2078, 0.0078125
    %v2156 = vmul.f32 %v2080, 0.0078125
    %v2157 = vmul.f32 %v2082, 0.0078125
    %v2158 = vmul.f32 %v2084, 0.0078125
    %v2159 = vmul.f32 %v2086, 0.0078125
    %v2160 = vmul.f32 %v2088, 0.0078125
    %v2161 = vmul.f32 %v2090, 0.0078125
    %v2162 = vmul.f32 %v2092, 0.0078125
    %v2163 = vmul.f32 %v2094, 0.0078125
    %v2164 = vmul.f32 %v2096, 0.0078125
    %v2165 = vmul.f32 %v2098, 0.0078125
    %v2166 = vmul.f32 %v2100, 0.0078125
    %v2167 = vmul.f32 %v2102, 0.0078125
    %v2168 = vmul.f32 %v2104, 0.0078125
    %v2169 = vmul.f32 %v2105, %v2105
    %v2170 = vmul.f32 %v2106, %v2106
    %v2171 = vmul.f32 %v2107, %v2107
    %v2172 = vmul.f32 %v2108, %v2108
    %v2173 = vmul.f32 %v2109, %v2109
    %v2174 = vmul.f32 %v2110, %v2110
    %v2175 = vmul.f32 %v2111, %v2111
    %v2176 = vmul.f32 %v2112, %v2112
    %v2177 = vmul.f32 %v2113, %v2113
    %v2178 = vmul.f32 %v2114, %v2114
    %v2179 = vmul.f32 %v2115, %v2115
    %v2180 = vmul.f32 %v2116, %v2116
    %v2181 = vmul.f32 %v2117, %v2117
    %v2182 = vmul.f32 %v2118, %v2118
    %v2183 = vmul.f32 %v2119, %v2119
    %v2184 = vmul.f32 %v2120, %v2120
    %v2185 = vmul.f32 %v2121, %v2121
    %v2186 = vmul.f32 %v2122, %v2122
    %v2187 = vmul.f32 %v2123, %v2123
    %v2188 = vmul.f32 %v2124, %v2124
    %v2189 = vmul.f32 %v2125, %v2125
    %v2190 = vmul.f32 %v2126, %v2126
    %v2191 = vmul.f32 %v2127, %v2127
    %v2192 = vmul.f32 %v2128, %v2128
    %v2193 = vmul.f32 %v2129, %v2129
    %v2194 = vmul.f32 %v2130, %v2130
    %v2195 = vmul.f32 %v2131, %v2131
    %v2196 = vmul.f32 %v2132, %v2132
    %v2197 = vmul.f32 %v2133, %v2133
    %v2198 = vmul.f32 %v2134, %v2134
    %v2199 = vmul.f32 %v2135, %v2135
    %v2200 = vmul.f32 %v2136, %v2136
    %v2201 = vsub.f32 %v2137, %v2169
    %v2202 = vsub.f32 %v2138, %v2170
    %v2203 = vsub.f32 %v2139, %v2171
    %v2204 = vsub.f32 %v2140, %v2172
    %v2205 = vsub.f32 %v2141, %v2173
    %v2206 = vsub.f32 %v2142, %v2174
    %v2207 = vsub.f32 %v2143, %v2175
    %v2208 = vsub.f32 %v2144, %v2176
    %v2209 = vsub.f32 %v2145, %v2177
    %v2210 = vsub.f32 %v2146, %v2178
    %v2211 = vsub.f32 %v2147, %v2179
    %v2212 = vsub.f32 %v2148, %v2180
    %v2213 = vsub.f32 %v2149, %v2181
    %v2214 = vsub.f32 %v2150, %v2182
    %v2215 = vsub.f32 %v2151, %v2183
    %v2216 = vsub.f32 %v2152, %v2184
    %v2217 = vsub.f32 %v2153, %v2185
    %v2218 = vsub.f32 %v2154, %v2186
    %v2219 = vsub.f32 %v2155, %v2187
    %v2220 = vsub.f32 %v2156, %v2188
    %v2221 = vsub.f32 %v2157, %v2189
    %v2222 = vsub.f32 %v2158, %v2190
    %v2223 = vsub.f32 %v2159, %v2191
    %v2224 = vsub.f32 %v2160, %v2192
    %v2225 = vsub.f32 %v2161, %v2193
    %v2226 = vsub.f32 %v2162, %v2194
    %v2227 = vsub.f32 %v2163, %v2195
    %v2228 = vsub.f32 %v2164, %v2196
    %v2229 = vsub.f32 %v2165, %v2197
    %v2230 = vsub.f32 %v2166, %v2198
    %v2231 = vsub.f32 %v2167, %v2199
    %v2232 = vsub.f32 %v2168, %v2200
    %v2233 = vadd.f32 %v2201, 1e-05
    %v2234 = vadd.f32 %v2202, 1e-05
    %v2235 = vadd.f32 %v2203, 1e-05
    %v2236 = vadd.f32 %v2204, 1e-05
    %v2237 = vadd.f32 %v2205, 1e-05
    %v2238 = vadd.f32 %v2206, 1e-05
    %v2239 = vadd.f32 %v2207, 1e-05
    %v2240 = vadd.f32 %v2208, 1e-05
    %v2241 = vadd.f32 %v2209, 1e-05
    %v2242 = vadd.f32 %v2210, 1e-05
    %v2243 = vadd.f32 %v2211, 1e-05
    %v2244 = vadd.f32 %v2212, 1e-05
    %v2245 = vadd.f32 %v2213, 1e-05
    %v2246 = vadd.f32 %v2214, 1e-05
    %v2247 = vadd.f32 %v2215, 1e-05
    %v2248 = vadd.f32 %v2216, 1e-05
    %v2249 = vadd.f32 %v2217, 1e-05
    %v2250 = vadd.f32 %v2218, 1e-05
    %v2251 = vadd.f32 %v2219, 1e-05
    %v2252 = vadd.f32 %v2220, 1e-05
    %v2253 = vadd.f32 %v2221, 1e-05
    %v2254 = vadd.f32 %v2222, 1e-05
    %v2255 = vadd.f32 %v2223, 1e-05
    %v2256 = vadd.f32 %v2224, 1e-05
    %v2257 = vadd.f32 %v2225, 1e-05
    %v2258 = vadd.f32 %v2226, 1e-05
    %v2259 = vadd.f32 %v2227, 1e-05
    %v2260 = vadd.f32 %v2228, 1e-05
    %v2261 = vadd.f32 %v2229, 1e-05
    %v2262 = vadd.f32 %v2230, 1e-05
    %v2263 = vadd.f32 %v2231, 1e-05
    %v2264 = vadd.f32 %v2232, 1e-05
    %v2265 = vrsqrt.pop %v2233
    %v2266 = vrsqrt.pop %v2234
    %v2267 = vrsqrt.pop %v2235
    %v2268 = vrsqrt.pop %v2236
    %v2269 = vrsqrt.pop %v2237
    %v2270 = vrsqrt.pop %v2238
    %v2271 = vrsqrt.pop %v2239
    %v2272 = vrsqrt.pop %v2240
    %v2273 = vrsqrt.pop %v2241
    %v2274 = vrsqrt.pop %v2242
    %v2275 = vrsqrt.pop %v2243
    %v2276 = vrsqrt.pop %v2244
    %v2277 = vrsqrt.pop %v2245
    %v2278 = vrsqrt.pop %v2246
    %v2279 = vrsqrt.pop %v2247
    %v2280 = vrsqrt.pop %v2248
    %v2281 = vrsqrt.pop %v2249
    %v2282 = vrsqrt.pop %v2250
    %v2283 = vrsqrt.pop %v2251
    %v2284 = vrsqrt.pop %v2252
    %v2285 = vrsqrt.pop %v2253
    %v2286 = vrsqrt.pop %v2254
    %v2287 = vrsqrt.pop %v2255
    %v2288 = vrsqrt.pop %v2256
    %v2289 = vrsqrt.pop %v2257
    %v2290 = vrsqrt.pop %v2258
    %v2291 = vrsqrt.pop %v2259
    %v2292 = vrsqrt.pop %v2260
    %v2293 = vrsqrt.pop %v2261
    %v2294 = vrsqrt.pop %v2262
    %v2295 = vrsqrt.pop %v2263
    %v2296 = vrsqrt.pop %v2264
    %v2297 = vsub.f32 %v1815, %v2105
    %v2298 = vsub.f32 %v1818, %v2106
    %v2299 = vsub.f32 %v1823, %v2107
    %v2300 = vsub.f32 %v1826, %v2108
    %v2301 = vsub.f32 %v1831, %v2109
    %v2302 = vsub.f32 %v1834, %v2110
    %v2303 = vsub.f32 %v1839, %v2111
    %v2304 = vsub.f32 %v1842, %v2112
    %v2305 = vsub.f32 %v1847, %v2113
    %v2306 = vsub.f32 %v1850, %v2114
    %v2307 = vsub.f32 %v1855, %v2115
    %v2308 = vsub.f32 %v1858, %v2116
    %v2309 = vsub.f32 %v1863, %v2117
    %v2310 = vsub.f32 %v1866, %v2118
    %v2311 = vsub.f32 %v1871, %v2119
    %v2312 = vsub.f32 %v1874, %v2120
    %v2313 = vsub.f32 %v1879, %v2121
    %v2314 = vsub.f32 %v1882, %v2122
    %v2315 = vsub.f32 %v1887, %v2123
    %v2316 = vsub.f32 %v1890, %v2124
    %v2317 = vsub.f32 %v1895, %v2125
    %v2318 = vsub.f32 %v1898, %v2126
    %v2319 = vsub.f32 %v1903, %v2127
    %v2320 = vsub.f32 %v1906, %v2128
    %v2321 = vsub.f32 %v1911, %v2129
    %v2322 = vsub.f32 %v1914, %v2130
    %v2323 = vsub.f32 %v1919, %v2131
    %v2324 = vsub.f32 %v1922, %v2132
    %v2325 = vsub.f32 %v1927, %v2133
    %v2326 = vsub.f32 %v1930, %v2134
    %v2327 = vsub.f32 %v1935, %v2135
    %v2328 = vsub.f32 %v1938, %v2136
    %v2330 = vlaneseq
    %v2331 = vshrl.u32 %v2330, 7
    %v2332 = vsub.s32 0, %v2331
    %v2333 = vrot.slane %v1942, %v2332
    %v2335 = vmul.f32 %v2265, %v2333
    %v2336 = vmul.f32 %v2266, %v2333
    %v2337 = vmul.f32 %v2267, %v2333
    %v2338 = vmul.f32 %v2268, %v2333
    %v2339 = vmul.f32 %v2269, %v2333
    %v2340 = vmul.f32 %v2270, %v2333
    %v2341 = vmul.f32 %v2271, %v2333
    %v2342 = vmul.f32 %v2272, %v2333
    %v2343 = vmul.f32 %v2273, %v2333
    %v2344 = vmul.f32 %v2274, %v2333
    %v2345 = vmul.f32 %v2275, %v2333
    %v2346 = vmul.f32 %v2276, %v2333
    %v2347 = vmul.f32 %v2277, %v2333
    %v2348 = vmul.f32 %v2278, %v2333
    %v2349 = vmul.f32 %v2279, %v2333
    %v2350 = vmul.f32 %v2280, %v2333
    %v2351 = vmul.f32 %v2281, %v2333
    %v2352 = vmul.f32 %v2282, %v2333
    %v2353 = vmul.f32 %v2283, %v2333
    %v2354 = vmul.f32 %v2284, %v2333
    %v2355 = vmul.f32 %v2285, %v2333
    %v2356 = vmul.f32 %v2286, %v2333
    %v2357 = vmul.f32 %v2287, %v2333
    %v2358 = vmul.f32 %v2288, %v2333
    %v2359 = vmul.f32 %v2289, %v2333
    %v2360 = vmul.f32 %v2290, %v2333
    %v2361 = vmul.f32 %v2291, %v2333
    %v2362 = vmul.f32 %v2292, %v2333
    %v2363 = vmul.f32 %v2293, %v2333
    %v2364 = vmul.f32 %v2294, %v2333
    %v2365 = vmul.f32 %v2295, %v2333
    %v2366 = vmul.f32 %v2296, %v2333
    %v2367 = vmul.f32 %v2297, %v2335
    %v2368 = vmul.f32 %v2298, %v2336
    %v2369 = vmul.f32 %v2299, %v2337
    %v2370 = vmul.f32 %v2300, %v2338
    %v2371 = vmul.f32 %v2301, %v2339
    %v2372 = vmul.f32 %v2302, %v2340
    %v2373 = vmul.f32 %v2303, %v2341
    %v2374 = vmul.f32 %v2304, %v2342
    %v2375 = vmul.f32 %v2305, %v2343
    %v2376 = vmul.f32 %v2306, %v2344
    %v2377 = vmul.f32 %v2307, %v2345
    %v2378 = vmul.f32 %v2308, %v2346
    %v2379 = vmul.f32 %v2309, %v2347
    %v2380 = vmul.f32 %v2310, %v2348
    %v2381 = vmul.f32 %v2311, %v2349
    %v2382 = vmul.f32 %v2312, %v2350
    %v2383 = vmul.f32 %v2313, %v2351
    %v2384 = vmul.f32 %v2314, %v2352
    %v2385 = vmul.f32 %v2315, %v2353
    %v2386 = vmul.f32 %v2316, %v2354
    %v2387 = vmul.f32 %v2317, %v2355
    %v2388 = vmul.f32 %v2318, %v2356
    %v2389 = vmul.f32 %v2319, %v2357
    %v2390 = vmul.f32 %v2320, %v2358
    %v2391 = vmul.f32 %v2321, %v2359
    %v2392 = vmul.f32 %v2322, %v2360
    %v2393 = vmul.f32 %v2323, %v2361
    %v2394 = vmul.f32 %v2324, %v2362
    %v2395 = vmul.f32 %v2325, %v2363
    %v2396 = vmul.f32 %v2326, %v2364
    %v2397 = vmul.f32 %v2327, %v2365
    %v2398 = vmul.f32 %v2328, %v2366
    %v2400 = vlaneseq
    %v2401 = vshrl.u32 %v2400, 7
    %v2402 = vsub.s32 0, %v2401
    %v2403 = vrot.slane %v1944, %v2402
    %v2405 = vadd.f32 %v2367, %v2403
    %v2406 = vadd.f32 %v2368, %v2403
    %v2407 = vadd.f32 %v2369, %v2403
    %v2408 = vadd.f32 %v2370, %v2403
    %v2409 = vadd.f32 %v2371, %v2403
    %v2410 = vadd.f32 %v2372, %v2403
    %v2411 = vadd.f32 %v2373, %v2403
    %v2412 = vadd.f32 %v2374, %v2403
    %v2413 = vadd.f32 %v2375, %v2403
    %v2414 = vadd.f32 %v2376, %v2403
    %v2415 = vadd.f32 %v2377, %v2403
    %v2416 = vadd.f32 %v2378, %v2403
    %v2417 = vadd.f32 %v2379, %v2403
    %v2418 = vadd.f32 %v2380, %v2403
    %v2419 = vadd.f32 %v2381, %v2403
    %v2420 = vadd.f32 %v2382, %v2403
    %v2421 = vadd.f32 %v2383, %v2403
    %v2422 = vadd.f32 %v2384, %v2403
    %v2423 = vadd.f32 %v2385, %v2403
    %v2424 = vadd.f32 %v2386, %v2403
    %v2425 = vadd.f32 %v2387, %v2403
    %v2426 = vadd.f32 %v2388, %v2403
    %v2427 = vadd.f32 %v2389, %v2403
    %v2428 = vadd.f32 %v2390, %v2403
    %v2429 = vadd.f32 %v2391, %v2403
    %v2430 = vadd.f32 %v2392, %v2403
    %v2431 = vadd.f32 %v2393, %v2403
    %v2432 = vadd.f32 %v2394, %v2403
    %v2433 = vadd.f32 %v2395, %v2403
    %v2434 = vadd.f32 %v2396, %v2403
    %v2435 = vadd.f32 %v2397, %v2403
    %v2436 = vadd.f32 %v2398, %v2403
    %v2437 = vmax.f32 %v2405, 0.0
    %v2438 = vmax.f32 %v2406, 0.0
    %v2439 = vmax.f32 %v2407, 0.0
    %v2440 = vmax.f32 %v2408, 0.0
    %v2441 = vmax.f32 %v2409, 0.0
    %v2442 = vmax.f32 %v2410, 0.0
    %v2443 = vmax.f32 %v2411, 0.0
    %v2444 = vmax.f32 %v2412, 0.0
    %v2445 = vmax.f32 %v2413, 0.0
    %v2446 = vmax.f32 %v2414, 0.0
    %v2447 = vmax.f32 %v2415, 0.0
    %v2448 = vmax.f32 %v2416, 0.0
    %v2449 = vmax.f32 %v2417, 0.0
    %v2450 = vmax.f32 %v2418, 0.0
    %v2451 = vmax.f32 %v2419, 0.0
    %v2452 = vmax.f32 %v2420, 0.0
    %v2453 = vmax.f32 %v2421, 0.0
    %v2454 = vmax.f32 %v2422, 0.0
    %v2455 = vmax.f32 %v2423, 0.0
    %v2456 = vmax.f32 %v2424, 0.0
    %v2457 = vmax.f32 %v2425, 0.0
    %v2458 = vmax.f32 %v2426, 0.0
    %v2459 = vmax.f32 %v2427, 0.0
    %v2460 = vmax.f32 %v2428, 0.0
    %v2461 = vmax.f32 %v2429, 0.0
    %v2462 = vmax.f32 %v2430, 0.0
    %v2463 = vmax.f32 %v2431, 0.0
    %v2464 = vmax.f32 %v2432, 0.0
    %v2465 = vmax.f32 %v2433, 0.0
    %v2466 = vmax.f32 %v2434, 0.0
    %v2467 = vmax.f32 %v2435, 0.0
    %v2468 = vmax.f32 %v2436, 0.0
    %v2469 = vadd.f32 %v2437, %v885
    %v2470 = vadd.f32 %v2438, %v886
    %v2471 = vadd.f32 %v2439, %v887
    %v2472 = vadd.f32 %v2440, %v888
    %v2473 = vadd.f32 %v2441, %v889
    %v2474 = vadd.f32 %v2442, %v890
    %v2475 = vadd.f32 %v2443, %v891
    %v2476 = vadd.f32 %v2444, %v892
    %v2477 = vadd.f32 %v2445, %v893
    %v2478 = vadd.f32 %v2446, %v894
    %v2479 = vadd.f32 %v2447, %v895
    %v2480 = vadd.f32 %v2448, %v896
    %v2481 = vadd.f32 %v2449, %v897
    %v2482 = vadd.f32 %v2450, %v898
    %v2483 = vadd.f32 %v2451, %v899
    %v2484 = vadd.f32 %v2452, %v900
    %v2485 = vadd.f32 %v2453, %v901
    %v2486 = vadd.f32 %v2454, %v902
    %v2487 = vadd.f32 %v2455, %v903
    %v2488 = vadd.f32 %v2456, %v904
    %v2489 = vadd.f32 %v2457, %v905
    %v2490 = vadd.f32 %v2458, %v906
    %v2491 = vadd.f32 %v2459, %v907
    %v2492 = vadd.f32 %v2460, %v908
    %v2493 = vadd.f32 %v2461, %v909
    %v2494 = vadd.f32 %v2462, %v910
    %v2495 = vadd.f32 %v2463, %v911
    %v2496 = vadd.f32 %v2464, %v912
    %v2497 = vadd.f32 %v2465, %v913
    %v2498 = vadd.f32 %v2466, %v914
    %v2499 = vadd.f32 %v2467, %v915
    %v2500 = vadd.f32 %v2468, %v916
    %v2501 = vmax.f32 %v2469, 0.0
    %v2502 = vmax.f32 %v2470, 0.0
    %v2503 = vmax.f32 %v2471, 0.0
    %v2504 = vmax.f32 %v2472, 0.0
    %v2505 = vmax.f32 %v2473, 0.0
    %v2506 = vmax.f32 %v2474, 0.0
    %v2507 = vmax.f32 %v2475, 0.0
    %v2508 = vmax.f32 %v2476, 0.0
    %v2509 = vmax.f32 %v2477, 0.0
    %v2510 = vmax.f32 %v2478, 0.0
    %v2511 = vmax.f32 %v2479, 0.0
    %v2512 = vmax.f32 %v2480, 0.0
    %v2513 = vmax.f32 %v2481, 0.0
    %v2514 = vmax.f32 %v2482, 0.0
    %v2515 = vmax.f32 %v2483, 0.0
    %v2516 = vmax.f32 %v2484, 0.0
    %v2517 = vmax.f32 %v2485, 0.0
    %v2518 = vmax.f32 %v2486, 0.0
    %v2519 = vmax.f32 %v2487, 0.0
    %v2520 = vmax.f32 %v2488, 0.0
    %v2521 = vmax.f32 %v2489, 0.0
    %v2522 = vmax.f32 %v2490, 0.0
    %v2523 = vmax.f32 %v2491, 0.0
    %v2524 = vmax.f32 %v2492, 0.0
    %v2525 = vmax.f32 %v2493, 0.0
    %v2526 = vmax.f32 %v2494, 0.0
    %v2527 = vmax.f32 %v2495, 0.0
    %v2528 = vmax.f32 %v2496, 0.0
    %v2529 = vmax.f32 %v2497, 0.0
    %v2530 = vmax.f32 %v2498, 0.0
    %v2531 = vmax.f32 %v2499, 0.0
    %v2532 = vmax.f32 %v2500, 0.0
    %v2533 = vpack.c.bf16 %v2502, %v2501
    %v2534 = vpack.c.bf16 %v2504, %v2503
    %v2535 = vpack.c.bf16 %v2506, %v2505
    %v2536 = vpack.c.bf16 %v2508, %v2507
    %v2537 = vpack.c.bf16 %v2510, %v2509
    %v2538 = vpack.c.bf16 %v2512, %v2511
    %v2539 = vpack.c.bf16 %v2514, %v2513
    %v2540 = vpack.c.bf16 %v2516, %v2515
    %v2541 = vpack.c.bf16 %v2518, %v2517
    %v2542 = vpack.c.bf16 %v2520, %v2519
    %v2543 = vpack.c.bf16 %v2522, %v2521
    %v2544 = vpack.c.bf16 %v2524, %v2523
    %v2545 = vpack.c.bf16 %v2526, %v2525
    %v2546 = vpack.c.bf16 %v2528, %v2527
    %v2547 = vpack.c.bf16 %v2530, %v2529
    %v2548 = vpack.c.bf16 %v2532, %v2531
    %s2549 = scalar_lea.vmem [#allocation2], 128
    %v2550 = vld [vmem:[%s2549] sm:$0xf]
    %v2551 = vld [vmem:[%s2549 + $0x4] sm:$0xf]
    %v2552 = vld [vmem:[%s2549 + $0x8] sm:$0xf]
    %v2553 = vld [vmem:[%s2549 + $0xc] sm:$0xf]
    %v2554 = vld [vmem:[%s2549 + $0x10] sm:$0xf]
    %v2555 = vld [vmem:[%s2549 + $0x14] sm:$0xf]
    %v2556 = vld [vmem:[%s2549 + $0x18] sm:$0xf]
    %v2557 = vld [vmem:[%s2549 + $0x1c] sm:$0xf]
    %v2558 = vld [vmem:[%s2549 + $0x20] sm:$0xf]
    %v2559 = vld [vmem:[%s2549 + $0x24] sm:$0xf]
    %v2560 = vld [vmem:[%s2549 + $0x28] sm:$0xf]
    %v2561 = vld [vmem:[%s2549 + $0x2c] sm:$0xf]
    %v2562 = vld [vmem:[%s2549 + $0x30] sm:$0xf]
    %v2563 = vld [vmem:[%s2549 + $0x34] sm:$0xf]
    %v2564 = vld [vmem:[%s2549 + $0x38] sm:$0xf]
    %v2565 = vld [vmem:[%s2549 + $0x3c] sm:$0xf]
    %s2566 = scalar_lea.vmem %s6, 2
    %v2567 = vld [vmem:[%s2566] sm:$0x1]
    %v2569 = vlaneseq
    %v2570 = vshrl.u32 %v2569, 7
    %v2571 = vsub.s32 0, %v2570
    %v2572 = vrot.slane %v2567, %v2571
    %v2590 = vunpack.c.l.b16 %v2550
    %v2591 = vunpack.c.l.b16 %v2551
    %v2592 = vunpack.c.l.b16 %v2552
    %v2593 = vunpack.c.l.b16 %v2553
    %v2594 = vunpack.c.l.b16 %v2554
    %v2595 = vunpack.c.l.b16 %v2555
    %v2596 = vunpack.c.l.b16 %v2556
    %v2597 = vunpack.c.l.b16 %v2557
    %v2598 = vunpack.c.l.b16 %v2558
    %v2599 = vunpack.c.l.b16 %v2559
    %v2600 = vunpack.c.l.b16 %v2560
    %v2601 = vunpack.c.l.b16 %v2561
    %v2602 = vunpack.c.l.b16 %v2562
    %v2603 = vunpack.c.l.b16 %v2563
    %v2604 = vunpack.c.l.b16 %v2564
    %v2605 = vunpack.c.l.b16 %v2565
    %v2606 = vpack.c.b16 %v2591, %v2590
    %v2607 = vpack.c.b16 %v2593, %v2592
    %v2608 = vpack.c.b16 %v2595, %v2594
    %v2609 = vpack.c.b16 %v2597, %v2596
    %v2610 = vpack.c.b16 %v2599, %v2598
    %v2611 = vpack.c.b16 %v2601, %v2600
    %v2612 = vpack.c.b16 %v2603, %v2602
    %v2613 = vpack.c.b16 %v2605, %v2604
    %2622 = vmatprep.subr.bf16.mxu0 0
    %2623 = vmatpush1.bf16.msra.mxu0 %v2606
    %2624 = vmatprep.subr.bf16.mxu0 0
    %2625 = vmatpush1.bf16.msra.mxu0 %v2607
    %2626 = vmatprep.subr.bf16.mxu0 0
    %2627 = vmatpush1.bf16.msra.mxu0 %v2608
    %2628 = vmatprep.subr.bf16.mxu0 0
    %2629 = vmatpush1.bf16.msra.mxu0 %v2609
    %2630 = vmatprep.subr.bf16.mxu0 0
    %2631 = vmatpush1.bf16.msra.mxu0 %v2610
    %2632 = vmatprep.subr.bf16.mxu0 0
    %2633 = vmatpush1.bf16.msra.mxu0 %v2611
    %2634 = vmatprep.subr.bf16.mxu0 0
    %2635 = vmatpush1.bf16.msra.mxu0 %v2612
    %2636 = vmatprep.subr.bf16.mxu0 0
    %2637 = vmatpush1.bf16.msra.mxu0 %v2613
    %2638 = vmatprep.subr.bf16.mxu0 0
    %2639 = vmatpush1.bf16.msra.mxu0 0
    %2640 = vmatprep.subr.bf16.mxu0 0
    %2641 = vmatpush1.bf16.msra.mxu0 0
    %2642 = vmatprep.subr.bf16.mxu0 0
    %2643 = vmatpush1.bf16.msra.mxu0 0
    %2644 = vmatprep.subr.bf16.mxu0 0
    %2645 = vmatpush1.bf16.msra.mxu0 0
    %2646 = vmatprep.subr.bf16.mxu0 0
    %2647 = vmatpush1.bf16.msra.mxu0 0
    %2648 = vmatprep.subr.bf16.mxu0 0
    %2649 = vmatpush1.bf16.msra.mxu0 0
    %2650 = vmatprep.subr.bf16.mxu0 0
    %2651 = vmatpush1.bf16.msra.mxu0 0
    %2652 = vmatprep.subr.bf16.mxu0 0
    %2653 = vmatpush1.bf16.msra.mxu0 0
    %2654 = vmatprep.mubr.bf16.mxu0 0
    %2655 = vmatmul.mubr.bf16.gmra.mrb[0].mxu0 %v2533
    %v2656 = vpop.f32.mrb[0].mxu0
    %v2657 = vadd.f32 %v2572, %v2656
    %v2658 = vpop.f32.mrb[0].mxu0
    %v2659 = vpop.f32.mrb[0].mxu0
    %v2660 = vadd.f32 %v2572, %v2659
    %v2661 = vpop.f32.mrb[0].mxu0
    %2662 = vmatprep.mubr.bf16.mxu0 0
    %2663 = vmatmul.mubr.bf16.gmra.mrb[0].mxu0 %v2534
    %v2664 = vpop.f32.mrb[0].mxu0
    %v2665 = vadd.f32 %v2572, %v2664
    %v2666 = vpop.f32.mrb[0].mxu0
    %v2667 = vpop.f32.mrb[0].mxu0
    %v2668 = vadd.f32 %v2572, %v2667
    %v2669 = vpop.f32.mrb[0].mxu0
    %2670 = vmatprep.mubr.bf16.mxu0 0
    %2671 = vmatmul.mubr.bf16.gmra.mrb[0].mxu0 %v2535
    %v2672 = vpop.f32.mrb[0].mxu0
    %v2673 = vadd.f32 %v2572, %v2672
    %v2674 = vpop.f32.mrb[0].mxu0
    %v2675 = vpop.f32.mrb[0].mxu0
    %v2676 = vadd.f32 %v2572, %v2675
    %v2677 = vpop.f32.mrb[0].mxu0
    %2678 = vmatprep.mubr.bf16.mxu0 0
    %2679 = vmatmul.mubr.bf16.gmra.mrb[0].mxu0 %v2536
    %v2680 = vpop.f32.mrb[0].mxu0
    %v2681 = vadd.f32 %v2572, %v2680
    %v2682 = vpop.f32.mrb[0].mxu0
    %v2683 = vpop.f32.mrb[0].mxu0
    %v2684 = vadd.f32 %v2572, %v2683
    %v2685 = vpop.f32.mrb[0].mxu0
    %2686 = vmatprep.mubr.bf16.mxu0 0
    %2687 = vmatmul.mubr.bf16.gmra.mrb[0].mxu0 %v2537
    %v2688 = vpop.f32.mrb[0].mxu0
    %v2689 = vadd.f32 %v2572, %v2688
    %v2690 = vpop.f32.mrb[0].mxu0
    %v2691 = vpop.f32.mrb[0].mxu0
    %v2692 = vadd.f32 %v2572, %v2691
    %v2693 = vpop.f32.mrb[0].mxu0
    %2694 = vmatprep.mubr.bf16.mxu0 0
    %2695 = vmatmul.mubr.bf16.gmra.mrb[0].mxu0 %v2538
    %v2696 = vpop.f32.mrb[0].mxu0
    %v2697 = vadd.f32 %v2572, %v2696
    %v2698 = vpop.f32.mrb[0].mxu0
    %v2699 = vpop.f32.mrb[0].mxu0
    %v2700 = vadd.f32 %v2572, %v2699
    %v2701 = vpop.f32.mrb[0].mxu0
    %2702 = vmatprep.mubr.bf16.mxu0 0
    %2703 = vmatmul.mubr.bf16.gmra.mrb[0].mxu0 %v2539
    %v2704 = vpop.f32.mrb[0].mxu0
    %v2705 = vadd.f32 %v2572, %v2704
    %v2706 = vpop.f32.mrb[0].mxu0
    %v2707 = vpop.f32.mrb[0].mxu0
    %v2708 = vadd.f32 %v2572, %v2707
    %v2709 = vpop.f32.mrb[0].mxu0
    %2710 = vmatprep.mubr.bf16.mxu0 0
    %2711 = vmatmul.mubr.bf16.gmra.mrb[0].mxu0 %v2540
    %v2712 = vpop.f32.mrb[0].mxu0
    %v2713 = vadd.f32 %v2572, %v2712
    %v2714 = vpop.f32.mrb[0].mxu0
    %v2715 = vpop.f32.mrb[0].mxu0
    %v2716 = vadd.f32 %v2572, %v2715
    %v2717 = vpop.f32.mrb[0].mxu0
    %2718 = vmatprep.mubr.bf16.mxu0 0
    %2719 = vmatmul.mubr.bf16.gmra.mrb[0].mxu0 %v2541
    %v2720 = vpop.f32.mrb[0].mxu0
    %v2721 = vadd.f32 %v2572, %v2720
    %v2722 = vpop.f32.mrb[0].mxu0
    %v2723 = vpop.f32.mrb[0].mxu0
    %v2724 = vadd.f32 %v2572, %v2723
    %v2725 = vpop.f32.mrb[0].mxu0
    %2726 = vmatprep.mubr.bf16.mxu0 0
    %2727 = vmatmul.mubr.bf16.gmra.mrb[0].mxu0 %v2542
    %v2728 = vpop.f32.mrb[0].mxu0
    %v2729 = vadd.f32 %v2572, %v2728
    %v2730 = vpop.f32.mrb[0].mxu0
    %v2731 = vpop.f32.mrb[0].mxu0
    %v2732 = vadd.f32 %v2572, %v2731
    %v2733 = vpop.f32.mrb[0].mxu0
    %2734 = vmatprep.mubr.bf16.mxu0 0
    %2735 = vmatmul.mubr.bf16.gmra.mrb[0].mxu0 %v2543
    %v2736 = vpop.f32.mrb[0].mxu0
    %v2737 = vadd.f32 %v2572, %v2736
    %v2738 = vpop.f32.mrb[0].mxu0
    %v2739 = vpop.f32.mrb[0].mxu0
    %v2740 = vadd.f32 %v2572, %v2739
    %v2741 = vpop.f32.mrb[0].mxu0
    %2742 = vmatprep.mubr.bf16.mxu0 0
    %2743 = vmatmul.mubr.bf16.gmra.mrb[0].mxu0 %v2544
    %v2744 = vpop.f32.mrb[0].mxu0
    %v2745 = vadd.f32 %v2572, %v2744
    %v2746 = vpop.f32.mrb[0].mxu0
    %v2747 = vpop.f32.mrb[0].mxu0
    %v2748 = vadd.f32 %v2572, %v2747
    %v2749 = vpop.f32.mrb[0].mxu0
    %2750 = vmatprep.mubr.bf16.mxu0 0
    %2751 = vmatmul.mubr.bf16.gmra.mrb[0].mxu0 %v2545
    %v2752 = vpop.f32.mrb[0].mxu0
    %v2753 = vadd.f32 %v2572, %v2752
    %v2754 = vpop.f32.mrb[0].mxu0
    %v2755 = vpop.f32.mrb[0].mxu0
    %v2756 = vadd.f32 %v2572, %v2755
    %v2757 = vpop.f32.mrb[0].mxu0
    %2758 = vmatprep.mubr.bf16.mxu0 0
    %2759 = vmatmul.mubr.bf16.gmra.mrb[0].mxu0 %v2546
    %v2760 = vpop.f32.mrb[0].mxu0
    %v2761 = vadd.f32 %v2572, %v2760
    %v2762 = vpop.f32.mrb[0].mxu0
    %v2763 = vpop.f32.mrb[0].mxu0
    %v2764 = vadd.f32 %v2572, %v2763
    %v2765 = vpop.f32.mrb[0].mxu0
    %2766 = vmatprep.mubr.bf16.mxu0 0
    %2767 = vmatmul.mubr.bf16.gmra.mrb[0].mxu0 %v2547
    %v2768 = vpop.f32.mrb[0].mxu0
    %v2769 = vadd.f32 %v2572, %v2768
    %v2770 = vpop.f32.mrb[0].mxu0
    %v2771 = vpop.f32.mrb[0].mxu0
    %v2772 = vadd.f32 %v2572, %v2771
    %v2773 = vpop.f32.mrb[0].mxu0
    %2774 = vmatprep.mubr.bf16.mxu0 0
    %2775 = vmatmul.mubr.bf16.gmra.mrb[0].mxu0 %v2548
    %v2776 = vpop.f32.mrb[0].mxu0
    %v2777 = vadd.f32 %v2572, %v2776
    %v2778 = vpop.f32.mrb[0].mxu0
    %v2779 = vpop.f32.mrb[0].mxu0
    %v2780 = vadd.f32 %v2572, %v2779
    %v2781 = vpop.f32.mrb[0].mxu0
    %2782 = vdwg.mxu0
    %s2783 = scalar_lea.vmem %s7, 2
    %v2784 = vld [vmem:[%s2783] sm:$0x1]
    %s2785 = scalar_lea.vmem %s8, 2
    %v2786 = vld [vmem:[%s2785] sm:$0x1]
    %2787 = vadd.xlane.f32.xlu0 %v2657
    %v2788 = vpop.xlane.xlu0 %2787
    %2789 = vadd.xlane.f32.xlu0 %v2660
    %v2790 = vpop.xlane.xlu0 %2789
    %2791 = vadd.xlane.f32.xlu0 %v2665
    %v2792 = vpop.xlane.xlu0 %2791
    %2793 = vadd.xlane.f32.xlu0 %v2668
    %v2794 = vpop.xlane.xlu0 %2793
    %2795 = vadd.xlane.f32.xlu0 %v2673
    %v2796 = vpop.xlane.xlu0 %2795
    %2797 = vadd.xlane.f32.xlu0 %v2676
    %v2798 = vpop.xlane.xlu0 %2797
    %2799 = vadd.xlane.f32.xlu0 %v2681
    %v2800 = vpop.xlane.xlu0 %2799
    %2801 = vadd.xlane.f32.xlu0 %v2684
    %v2802 = vpop.xlane.xlu0 %2801
    %2803 = vadd.xlane.f32.xlu0 %v2689
    %v2804 = vpop.xlane.xlu0 %2803
    %2805 = vadd.xlane.f32.xlu0 %v2692
    %v2806 = vpop.xlane.xlu0 %2805
    %2807 = vadd.xlane.f32.xlu0 %v2697
    %v2808 = vpop.xlane.xlu0 %2807
    %2809 = vadd.xlane.f32.xlu0 %v2700
    %v2810 = vpop.xlane.xlu0 %2809
    %2811 = vadd.xlane.f32.xlu0 %v2705
    %v2812 = vpop.xlane.xlu0 %2811
    %2813 = vadd.xlane.f32.xlu0 %v2708
    %v2814 = vpop.xlane.xlu0 %2813
    %2815 = vadd.xlane.f32.xlu0 %v2713
    %v2816 = vpop.xlane.xlu0 %2815
    %2817 = vadd.xlane.f32.xlu0 %v2716
    %v2818 = vpop.xlane.xlu0 %2817
    %2819 = vadd.xlane.f32.xlu0 %v2721
    %v2820 = vpop.xlane.xlu0 %2819
    %2821 = vadd.xlane.f32.xlu0 %v2724
    %v2822 = vpop.xlane.xlu0 %2821
    %2823 = vadd.xlane.f32.xlu0 %v2729
    %v2824 = vpop.xlane.xlu0 %2823
    %2825 = vadd.xlane.f32.xlu0 %v2732
    %v2826 = vpop.xlane.xlu0 %2825
    %2827 = vadd.xlane.f32.xlu0 %v2737
    %v2828 = vpop.xlane.xlu0 %2827
    %2829 = vadd.xlane.f32.xlu0 %v2740
    %v2830 = vpop.xlane.xlu0 %2829
    %2831 = vadd.xlane.f32.xlu0 %v2745
    %v2832 = vpop.xlane.xlu0 %2831
    %2833 = vadd.xlane.f32.xlu0 %v2748
    %v2834 = vpop.xlane.xlu0 %2833
    %2835 = vadd.xlane.f32.xlu0 %v2753
    %v2836 = vpop.xlane.xlu0 %2835
    %2837 = vadd.xlane.f32.xlu0 %v2756
    %v2838 = vpop.xlane.xlu0 %2837
    %2839 = vadd.xlane.f32.xlu0 %v2761
    %v2840 = vpop.xlane.xlu0 %2839
    %2841 = vadd.xlane.f32.xlu0 %v2764
    %v2842 = vpop.xlane.xlu0 %2841
    %2843 = vadd.xlane.f32.xlu0 %v2769
    %v2844 = vpop.xlane.xlu0 %2843
    %2845 = vadd.xlane.f32.xlu0 %v2772
    %v2846 = vpop.xlane.xlu0 %2845
    %2847 = vadd.xlane.f32.xlu0 %v2777
    %v2848 = vpop.xlane.xlu0 %2847
    %2849 = vadd.xlane.f32.xlu0 %v2780
    %v2850 = vpop.xlane.xlu0 %2849
    %v2851 = vmul.f32 %v2657, %v2657
    %v2852 = vmul.f32 %v2660, %v2660
    %v2853 = vmul.f32 %v2665, %v2665
    %v2854 = vmul.f32 %v2668, %v2668
    %v2855 = vmul.f32 %v2673, %v2673
    %v2856 = vmul.f32 %v2676, %v2676
    %v2857 = vmul.f32 %v2681, %v2681
    %v2858 = vmul.f32 %v2684, %v2684
    %v2859 = vmul.f32 %v2689, %v2689
    %v2860 = vmul.f32 %v2692, %v2692
    %v2861 = vmul.f32 %v2697, %v2697
    %v2862 = vmul.f32 %v2700, %v2700
    %v2863 = vmul.f32 %v2705, %v2705
    %v2864 = vmul.f32 %v2708, %v2708
    %v2865 = vmul.f32 %v2713, %v2713
    %v2866 = vmul.f32 %v2716, %v2716
    %v2867 = vmul.f32 %v2721, %v2721
    %v2868 = vmul.f32 %v2724, %v2724
    %v2869 = vmul.f32 %v2729, %v2729
    %v2870 = vmul.f32 %v2732, %v2732
    %v2871 = vmul.f32 %v2737, %v2737
    %v2872 = vmul.f32 %v2740, %v2740
    %v2873 = vmul.f32 %v2745, %v2745
    %v2874 = vmul.f32 %v2748, %v2748
    %v2875 = vmul.f32 %v2753, %v2753
    %v2876 = vmul.f32 %v2756, %v2756
    %v2877 = vmul.f32 %v2761, %v2761
    %v2878 = vmul.f32 %v2764, %v2764
    %v2879 = vmul.f32 %v2769, %v2769
    %v2880 = vmul.f32 %v2772, %v2772
    %v2881 = vmul.f32 %v2777, %v2777
    %v2882 = vmul.f32 %v2780, %v2780
    %2883 = vadd.xlane.f32.xlu0 %v2851
    %v2884 = vpop.xlane.xlu0 %2883
    %2885 = vadd.xlane.f32.xlu0 %v2852
    %v2886 = vpop.xlane.xlu0 %2885
    %2887 = vadd.xlane.f32.xlu0 %v2853
    %v2888 = vpop.xlane.xlu0 %2887
    %2889 = vadd.xlane.f32.xlu0 %v2854
    %v2890 = vpop.xlane.xlu0 %2889
    %2891 = vadd.xlane.f32.xlu0 %v2855
    %v2892 = vpop.xlane.xlu0 %2891
    %2893 = vadd.xlane.f32.xlu0 %v2856
    %v2894 = vpop.xlane.xlu0 %2893
    %2895 = vadd.xlane.f32.xlu0 %v2857
    %v2896 = vpop.xlane.xlu0 %2895
    %2897 = vadd.xlane.f32.xlu0 %v2858
    %v2898 = vpop.xlane.xlu0 %2897
    %2899 = vadd.xlane.f32.xlu0 %v2859
    %v2900 = vpop.xlane.xlu0 %2899
    %2901 = vadd.xlane.f32.xlu0 %v2860
    %v2902 = vpop.xlane.xlu0 %2901
    %2903 = vadd.xlane.f32.xlu0 %v2861
    %v2904 = vpop.xlane.xlu0 %2903
    %2905 = vadd.xlane.f32.xlu0 %v2862
    %v2906 = vpop.xlane.xlu0 %2905
    %2907 = vadd.xlane.f32.xlu0 %v2863
    %v2908 = vpop.xlane.xlu0 %2907
    %2909 = vadd.xlane.f32.xlu0 %v2864
    %v2910 = vpop.xlane.xlu0 %2909
    %2911 = vadd.xlane.f32.xlu0 %v2865
    %v2912 = vpop.xlane.xlu0 %2911
    %2913 = vadd.xlane.f32.xlu0 %v2866
    %v2914 = vpop.xlane.xlu0 %2913
    %2915 = vadd.xlane.f32.xlu0 %v2867
    %v2916 = vpop.xlane.xlu0 %2915
    %2917 = vadd.xlane.f32.xlu0 %v2868
    %v2918 = vpop.xlane.xlu0 %2917
    %2919 = vadd.xlane.f32.xlu0 %v2869
    %v2920 = vpop.xlane.xlu0 %2919
    %2921 = vadd.xlane.f32.xlu0 %v2870
    %v2922 = vpop.xlane.xlu0 %2921
    %2923 = vadd.xlane.f32.xlu0 %v2871
    %v2924 = vpop.xlane.xlu0 %2923
    %2925 = vadd.xlane.f32.xlu0 %v2872
    %v2926 = vpop.xlane.xlu0 %2925
    %2927 = vadd.xlane.f32.xlu0 %v2873
    %v2928 = vpop.xlane.xlu0 %2927
    %2929 = vadd.xlane.f32.xlu0 %v2874
    %v2930 = vpop.xlane.xlu0 %2929
    %2931 = vadd.xlane.f32.xlu0 %v2875
    %v2932 = vpop.xlane.xlu0 %2931
    %2933 = vadd.xlane.f32.xlu0 %v2876
    %v2934 = vpop.xlane.xlu0 %2933
    %2935 = vadd.xlane.f32.xlu0 %v2877
    %v2936 = vpop.xlane.xlu0 %2935
    %2937 = vadd.xlane.f32.xlu0 %v2878
    %v2938 = vpop.xlane.xlu0 %2937
    %2939 = vadd.xlane.f32.xlu0 %v2879
    %v2940 = vpop.xlane.xlu0 %2939
    %2941 = vadd.xlane.f32.xlu0 %v2880
    %v2942 = vpop.xlane.xlu0 %2941
    %2943 = vadd.xlane.f32.xlu0 %v2881
    %v2944 = vpop.xlane.xlu0 %2943
    %2945 = vadd.xlane.f32.xlu0 %v2882
    %v2946 = vpop.xlane.xlu0 %2945
    %v2947 = vmul.f32 %v2788, 0.0078125
    %v2948 = vmul.f32 %v2790, 0.0078125
    %v2949 = vmul.f32 %v2792, 0.0078125
    %v2950 = vmul.f32 %v2794, 0.0078125
    %v2951 = vmul.f32 %v2796, 0.0078125
    %v2952 = vmul.f32 %v2798, 0.0078125
    %v2953 = vmul.f32 %v2800, 0.0078125
    %v2954 = vmul.f32 %v2802, 0.0078125
    %v2955 = vmul.f32 %v2804, 0.0078125
    %v2956 = vmul.f32 %v2806, 0.0078125
    %v2957 = vmul.f32 %v2808, 0.0078125
    %v2958 = vmul.f32 %v2810, 0.0078125
    %v2959 = vmul.f32 %v2812, 0.0078125
    %v2960 = vmul.f32 %v2814, 0.0078125
    %v2961 = vmul.f32 %v2816, 0.0078125
    %v2962 = vmul.f32 %v2818, 0.0078125
    %v2963 = vmul.f32 %v2820, 0.0078125
    %v2964 = vmul.f32 %v2822, 0.0078125
    %v2965 = vmul.f32 %v2824, 0.0078125
    %v2966 = vmul.f32 %v2826, 0.0078125
    %v2967 = vmul.f32 %v2828, 0.0078125
    %v2968 = vmul.f32 %v2830, 0.0078125
    %v2969 = vmul.f32 %v2832, 0.0078125
    %v2970 = vmul.f32 %v2834, 0.0078125
    %v2971 = vmul.f32 %v2836, 0.0078125
    %v2972 = vmul.f32 %v2838, 0.0078125
    %v2973 = vmul.f32 %v2840, 0.0078125
    %v2974 = vmul.f32 %v2842, 0.0078125
    %v2975 = vmul.f32 %v2844, 0.0078125
    %v2976 = vmul.f32 %v2846, 0.0078125
    %v2977 = vmul.f32 %v2848, 0.0078125
    %v2978 = vmul.f32 %v2850, 0.0078125
    %v2979 = vmul.f32 %v2884, 0.0078125
    %v2980 = vmul.f32 %v2886, 0.0078125
    %v2981 = vmul.f32 %v2888, 0.0078125
    %v2982 = vmul.f32 %v2890, 0.0078125
    %v2983 = vmul.f32 %v2892, 0.0078125
    %v2984 = vmul.f32 %v2894, 0.0078125
    %v2985 = vmul.f32 %v2896, 0.0078125
    %v2986 = vmul.f32 %v2898, 0.0078125
    %v2987 = vmul.f32 %v2900, 0.0078125
    %v2988 = vmul.f32 %v2902, 0.0078125
    %v2989 = vmul.f32 %v2904, 0.0078125
    %v2990 = vmul.f32 %v2906, 0.0078125
    %v2991 = vmul.f32 %v2908, 0.0078125
    %v2992 = vmul.f32 %v2910, 0.0078125
    %v2993 = vmul.f32 %v2912, 0.0078125
    %v2994 = vmul.f32 %v2914, 0.0078125
    %v2995 = vmul.f32 %v2916, 0.0078125
    %v2996 = vmul.f32 %v2918, 0.0078125
    %v2997 = vmul.f32 %v2920, 0.0078125
    %v2998 = vmul.f32 %v2922, 0.0078125
    %v2999 = vmul.f32 %v2924, 0.0078125
    %v3000 = vmul.f32 %v2926, 0.0078125
    %v3001 = vmul.f32 %v2928, 0.0078125
    %v3002 = vmul.f32 %v2930, 0.0078125
    %v3003 = vmul.f32 %v2932, 0.0078125
    %v3004 = vmul.f32 %v2934, 0.0078125
    %v3005 = vmul.f32 %v2936, 0.0078125
    %v3006 = vmul.f32 %v2938, 0.0078125
    %v3007 = vmul.f32 %v2940, 0.0078125
    %v3008 = vmul.f32 %v2942, 0.0078125
    %v3009 = vmul.f32 %v2944, 0.0078125
    %v3010 = vmul.f32 %v2946, 0.0078125
    %v3011 = vmul.f32 %v2947, %v2947
    %v3012 = vmul.f32 %v2948, %v2948
    %v3013 = vmul.f32 %v2949, %v2949
    %v3014 = vmul.f32 %v2950, %v2950
    %v3015 = vmul.f32 %v2951, %v2951
    %v3016 = vmul.f32 %v2952, %v2952
    %v3017 = vmul.f32 %v2953, %v2953
    %v3018 = vmul.f32 %v2954, %v2954
    %v3019 = vmul.f32 %v2955, %v2955
    %v3020 = vmul.f32 %v2956, %v2956
    %v3021 = vmul.f32 %v2957, %v2957
    %v3022 = vmul.f32 %v2958, %v2958
    %v3023 = vmul.f32 %v2959, %v2959
    %v3024 = vmul.f32 %v2960, %v2960
    %v3025 = vmul.f32 %v2961, %v2961
    %v3026 = vmul.f32 %v2962, %v2962
    %v3027 = vmul.f32 %v2963, %v2963
    %v3028 = vmul.f32 %v2964, %v2964
    %v3029 = vmul.f32 %v2965, %v2965
    %v3030 = vmul.f32 %v2966, %v2966
    %v3031 = vmul.f32 %v2967, %v2967
    %v3032 = vmul.f32 %v2968, %v2968
    %v3033 = vmul.f32 %v2969, %v2969
    %v3034 = vmul.f32 %v2970, %v2970
    %v3035 = vmul.f32 %v2971, %v2971
    %v3036 = vmul.f32 %v2972, %v2972
    %v3037 = vmul.f32 %v2973, %v2973
    %v3038 = vmul.f32 %v2974, %v2974
    %v3039 = vmul.f32 %v2975, %v2975
    %v3040 = vmul.f32 %v2976, %v2976
    %v3041 = vmul.f32 %v2977, %v2977
    %v3042 = vmul.f32 %v2978, %v2978
    %v3043 = vsub.f32 %v2979, %v3011
    %v3044 = vsub.f32 %v2980, %v3012
    %v3045 = vsub.f32 %v2981, %v3013
    %v3046 = vsub.f32 %v2982, %v3014
    %v3047 = vsub.f32 %v2983, %v3015
    %v3048 = vsub.f32 %v2984, %v3016
    %v3049 = vsub.f32 %v2985, %v3017
    %v3050 = vsub.f32 %v2986, %v3018
    %v3051 = vsub.f32 %v2987, %v3019
    %v3052 = vsub.f32 %v2988, %v3020
    %v3053 = vsub.f32 %v2989, %v3021
    %v3054 = vsub.f32 %v2990, %v3022
    %v3055 = vsub.f32 %v2991, %v3023
    %v3056 = vsub.f32 %v2992, %v3024
    %v3057 = vsub.f32 %v2993, %v3025
    %v3058 = vsub.f32 %v2994, %v3026
    %v3059 = vsub.f32 %v2995, %v3027
    %v3060 = vsub.f32 %v2996, %v3028
    %v3061 = vsub.f32 %v2997, %v3029
    %v3062 = vsub.f32 %v2998, %v3030
    %v3063 = vsub.f32 %v2999, %v3031
    %v3064 = vsub.f32 %v3000, %v3032
    %v3065 = vsub.f32 %v3001, %v3033
    %v3066 = vsub.f32 %v3002, %v3034
    %v3067 = vsub.f32 %v3003, %v3035
    %v3068 = vsub.f32 %v3004, %v3036
    %v3069 = vsub.f32 %v3005, %v3037
    %v3070 = vsub.f32 %v3006, %v3038
    %v3071 = vsub.f32 %v3007, %v3039
    %v3072 = vsub.f32 %v3008, %v3040
    %v3073 = vsub.f32 %v3009, %v3041
    %v3074 = vsub.f32 %v3010, %v3042
    %v3075 = vadd.f32 %v3043, 1e-05
    %v3076 = vadd.f32 %v3044, 1e-05
    %v3077 = vadd.f32 %v3045, 1e-05
    %v3078 = vadd.f32 %v3046, 1e-05
    %v3079 = vadd.f32 %v3047, 1e-05
    %v3080 = vadd.f32 %v3048, 1e-05
    %v3081 = vadd.f32 %v3049, 1e-05
    %v3082 = vadd.f32 %v3050, 1e-05
    %v3083 = vadd.f32 %v3051, 1e-05
    %v3084 = vadd.f32 %v3052, 1e-05
    %v3085 = vadd.f32 %v3053, 1e-05
    %v3086 = vadd.f32 %v3054, 1e-05
    %v3087 = vadd.f32 %v3055, 1e-05
    %v3088 = vadd.f32 %v3056, 1e-05
    %v3089 = vadd.f32 %v3057, 1e-05
    %v3090 = vadd.f32 %v3058, 1e-05
    %v3091 = vadd.f32 %v3059, 1e-05
    %v3092 = vadd.f32 %v3060, 1e-05
    %v3093 = vadd.f32 %v3061, 1e-05
    %v3094 = vadd.f32 %v3062, 1e-05
    %v3095 = vadd.f32 %v3063, 1e-05
    %v3096 = vadd.f32 %v3064, 1e-05
    %v3097 = vadd.f32 %v3065, 1e-05
    %v3098 = vadd.f32 %v3066, 1e-05
    %v3099 = vadd.f32 %v3067, 1e-05
    %v3100 = vadd.f32 %v3068, 1e-05
    %v3101 = vadd.f32 %v3069, 1e-05
    %v3102 = vadd.f32 %v3070, 1e-05
    %v3103 = vadd.f32 %v3071, 1e-05
    %v3104 = vadd.f32 %v3072, 1e-05
    %v3105 = vadd.f32 %v3073, 1e-05
    %v3106 = vadd.f32 %v3074, 1e-05
    %v3107 = vrsqrt.pop %v3075
    %v3108 = vrsqrt.pop %v3076
    %v3109 = vrsqrt.pop %v3077
    %v3110 = vrsqrt.pop %v3078
    %v3111 = vrsqrt.pop %v3079
    %v3112 = vrsqrt.pop %v3080
    %v3113 = vrsqrt.pop %v3081
    %v3114 = vrsqrt.pop %v3082
    %v3115 = vrsqrt.pop %v3083
    %v3116 = vrsqrt.pop %v3084
    %v3117 = vrsqrt.pop %v3085
    %v3118 = vrsqrt.pop %v3086
    %v3119 = vrsqrt.pop %v3087
    %v3120 = vrsqrt.pop %v3088
    %v3121 = vrsqrt.pop %v3089
    %v3122 = vrsqrt.pop %v3090
    %v3123 = vrsqrt.pop %v3091
    %v3124 = vrsqrt.pop %v3092
    %v3125 = vrsqrt.pop %v3093
    %v3126 = vrsqrt.pop %v3094
    %v3127 = vrsqrt.pop %v3095
    %v3128 = vrsqrt.pop %v3096
    %v3129 = vrsqrt.pop %v3097
    %v3130 = vrsqrt.pop %v3098
    %v3131 = vrsqrt.pop %v3099
    %v3132 = vrsqrt.pop %v3100
    %v3133 = vrsqrt.pop %v3101
    %v3134 = vrsqrt.pop %v3102
    %v3135 = vrsqrt.pop %v3103
    %v3136 = vrsqrt.pop %v3104
    %v3137 = vrsqrt.pop %v3105
    %v3138 = vrsqrt.pop %v3106
    %v3139 = vsub.f32 %v2657, %v2947
    %v3140 = vsub.f32 %v2660, %v2948
    %v3141 = vsub.f32 %v2665, %v2949
    %v3142 = vsub.f32 %v2668, %v2950
    %v3143 = vsub.f32 %v2673, %v2951
    %v3144 = vsub.f32 %v2676, %v2952
    %v3145 = vsub.f32 %v2681, %v2953
    %v3146 = vsub.f32 %v2684, %v2954
    %v3147 = vsub.f32 %v2689, %v2955
    %v3148 = vsub.f32 %v2692, %v2956
    %v3149 = vsub.f32 %v2697, %v2957
    %v3150 = vsub.f32 %v2700, %v2958
    %v3151 = vsub.f32 %v2705, %v2959
    %v3152 = vsub.f32 %v2708, %v2960
    %v3153 = vsub.f32 %v2713, %v2961
    %v3154 = vsub.f32 %v2716, %v2962
    %v3155 = vsub.f32 %v2721, %v2963
    %v3156 = vsub.f32 %v2724, %v2964
    %v3157 = vsub.f32 %v2729, %v2965
    %v3158 = vsub.f32 %v2732, %v2966
    %v3159 = vsub.f32 %v2737, %v2967
    %v3160 = vsub.f32 %v2740, %v2968
    %v3161 = vsub.f32 %v2745, %v2969
    %v3162 = vsub.f32 %v2748, %v2970
    %v3163 = vsub.f32 %v2753, %v2971
    %v3164 = vsub.f32 %v2756, %v2972
    %v3165 = vsub.f32 %v2761, %v2973
    %v3166 = vsub.f32 %v2764, %v2974
    %v3167 = vsub.f32 %v2769, %v2975
    %v3168 = vsub.f32 %v2772, %v2976
    %v3169 = vsub.f32 %v2777, %v2977
    %v3170 = vsub.f32 %v2780, %v2978
    %v3172 = vlaneseq
    %v3173 = vshrl.u32 %v3172, 7
    %v3174 = vsub.s32 0, %v3173
    %v3175 = vrot.slane %v2784, %v3174
    %v3177 = vmul.f32 %v3107, %v3175
    %v3178 = vmul.f32 %v3108, %v3175
    %v3179 = vmul.f32 %v3109, %v3175
    %v3180 = vmul.f32 %v3110, %v3175
    %v3181 = vmul.f32 %v3111, %v3175
    %v3182 = vmul.f32 %v3112, %v3175
    %v3183 = vmul.f32 %v3113, %v3175
    %v3184 = vmul.f32 %v3114, %v3175
    %v3185 = vmul.f32 %v3115, %v3175
    %v3186 = vmul.f32 %v3116, %v3175
    %v3187 = vmul.f32 %v3117, %v3175
    %v3188 = vmul.f32 %v3118, %v3175
    %v3189 = vmul.f32 %v3119, %v3175
    %v3190 = vmul.f32 %v3120, %v3175
    %v3191 = vmul.f32 %v3121, %v3175
    %v3192 = vmul.f32 %v3122, %v3175
    %v3193 = vmul.f32 %v3123, %v3175
    %v3194 = vmul.f32 %v3124, %v3175
    %v3195 = vmul.f32 %v3125, %v3175
    %v3196 = vmul.f32 %v3126, %v3175
    %v3197 = vmul.f32 %v3127, %v3175
    %v3198 = vmul.f32 %v3128, %v3175
    %v3199 = vmul.f32 %v3129, %v3175
    %v3200 = vmul.f32 %v3130, %v3175
    %v3201 = vmul.f32 %v3131, %v3175
    %v3202 = vmul.f32 %v3132, %v3175
    %v3203 = vmul.f32 %v3133, %v3175
    %v3204 = vmul.f32 %v3134, %v3175
    %v3205 = vmul.f32 %v3135, %v3175
    %v3206 = vmul.f32 %v3136, %v3175
    %v3207 = vmul.f32 %v3137, %v3175
    %v3208 = vmul.f32 %v3138, %v3175
    %v3209 = vmul.f32 %v3139, %v3177
    %v3210 = vmul.f32 %v3140, %v3178
    %v3211 = vmul.f32 %v3141, %v3179
    %v3212 = vmul.f32 %v3142, %v3180
    %v3213 = vmul.f32 %v3143, %v3181
    %v3214 = vmul.f32 %v3144, %v3182
    %v3215 = vmul.f32 %v3145, %v3183
    %v3216 = vmul.f32 %v3146, %v3184
    %v3217 = vmul.f32 %v3147, %v3185
    %v3218 = vmul.f32 %v3148, %v3186
    %v3219 = vmul.f32 %v3149, %v3187
    %v3220 = vmul.f32 %v3150, %v3188
    %v3221 = vmul.f32 %v3151, %v3189
    %v3222 = vmul.f32 %v3152, %v3190
    %v3223 = vmul.f32 %v3153, %v3191
    %v3224 = vmul.f32 %v3154, %v3192
    %v3225 = vmul.f32 %v3155, %v3193
    %v3226 = vmul.f32 %v3156, %v3194
    %v3227 = vmul.f32 %v3157, %v3195
    %v3228 = vmul.f32 %v3158, %v3196
    %v3229 = vmul.f32 %v3159, %v3197
    %v3230 = vmul.f32 %v3160, %v3198
    %v3231 = vmul.f32 %v3161, %v3199
    %v3232 = vmul.f32 %v3162, %v3200
    %v3233 = vmul.f32 %v3163, %v3201
    %v3234 = vmul.f32 %v3164, %v3202
    %v3235 = vmul.f32 %v3165, %v3203
    %v3236 = vmul.f32 %v3166, %v3204
    %v3237 = vmul.f32 %v3167, %v3205
    %v3238 = vmul.f32 %v3168, %v3206
    %v3239 = vmul.f32 %v3169, %v3207
    %v3240 = vmul.f32 %v3170, %v3208
    %v3242 = vlaneseq
    %v3243 = vshrl.u32 %v3242, 7
    %v3244 = vsub.s32 0, %v3243
    %v3245 = vrot.slane %v2786, %v3244
    %v3247 = vadd.f32 %v3209, %v3245
    %v3248 = vadd.f32 %v3210, %v3245
    %v3249 = vadd.f32 %v3211, %v3245
    %v3250 = vadd.f32 %v3212, %v3245
    %v3251 = vadd.f32 %v3213, %v3245
    %v3252 = vadd.f32 %v3214, %v3245
    %v3253 = vadd.f32 %v3215, %v3245
    %v3254 = vadd.f32 %v3216, %v3245
    %v3255 = vadd.f32 %v3217, %v3245
    %v3256 = vadd.f32 %v3218, %v3245
    %v3257 = vadd.f32 %v3219, %v3245
    %v3258 = vadd.f32 %v3220, %v3245
    %v3259 = vadd.f32 %v3221, %v3245
    %v3260 = vadd.f32 %v3222, %v3245
    %v3261 = vadd.f32 %v3223, %v3245
    %v3262 = vadd.f32 %v3224, %v3245
    %v3263 = vadd.f32 %v3225, %v3245
    %v3264 = vadd.f32 %v3226, %v3245
    %v3265 = vadd.f32 %v3227, %v3245
    %v3266 = vadd.f32 %v3228, %v3245
    %v3267 = vadd.f32 %v3229, %v3245
    %v3268 = vadd.f32 %v3230, %v3245
    %v3269 = vadd.f32 %v3231, %v3245
    %v3270 = vadd.f32 %v3232, %v3245
    %v3271 = vadd.f32 %v3233, %v3245
    %v3272 = vadd.f32 %v3234, %v3245
    %v3273 = vadd.f32 %v3235, %v3245
    %v3274 = vadd.f32 %v3236, %v3245
    %v3275 = vadd.f32 %v3237, %v3245
    %v3276 = vadd.f32 %v3238, %v3245
    %v3277 = vadd.f32 %v3239, %v3245
    %v3278 = vadd.f32 %v3240, %v3245
    %v3279 = vmax.f32 %v3247, 0.0
    %v3280 = vmax.f32 %v3248, 0.0
    %v3281 = vmax.f32 %v3249, 0.0
    %v3282 = vmax.f32 %v3250, 0.0
    %v3283 = vmax.f32 %v3251, 0.0
    %v3284 = vmax.f32 %v3252, 0.0
    %v3285 = vmax.f32 %v3253, 0.0
    %v3286 = vmax.f32 %v3254, 0.0
    %v3287 = vmax.f32 %v3255, 0.0
    %v3288 = vmax.f32 %v3256, 0.0
    %v3289 = vmax.f32 %v3257, 0.0
    %v3290 = vmax.f32 %v3258, 0.0
    %v3291 = vmax.f32 %v3259, 0.0
    %v3292 = vmax.f32 %v3260, 0.0
    %v3293 = vmax.f32 %v3261, 0.0
    %v3294 = vmax.f32 %v3262, 0.0
    %v3295 = vmax.f32 %v3263, 0.0
    %v3296 = vmax.f32 %v3264, 0.0
    %v3297 = vmax.f32 %v3265, 0.0
    %v3298 = vmax.f32 %v3266, 0.0
    %v3299 = vmax.f32 %v3267, 0.0
    %v3300 = vmax.f32 %v3268, 0.0
    %v3301 = vmax.f32 %v3269, 0.0
    %v3302 = vmax.f32 %v3270, 0.0
    %v3303 = vmax.f32 %v3271, 0.0
    %v3304 = vmax.f32 %v3272, 0.0
    %v3305 = vmax.f32 %v3273, 0.0
    %v3306 = vmax.f32 %v3274, 0.0
    %v3307 = vmax.f32 %v3275, 0.0
    %v3308 = vmax.f32 %v3276, 0.0
    %v3309 = vmax.f32 %v3277, 0.0
    %v3310 = vmax.f32 %v3278, 0.0
    %v3311 = vpack.c.bf16 %v3280, %v3279
    %v3312 = vpack.c.bf16 %v3282, %v3281
    %v3313 = vpack.c.bf16 %v3284, %v3283
    %v3314 = vpack.c.bf16 %v3286, %v3285
    %v3315 = vpack.c.bf16 %v3288, %v3287
    %v3316 = vpack.c.bf16 %v3290, %v3289
    %v3317 = vpack.c.bf16 %v3292, %v3291
    %v3318 = vpack.c.bf16 %v3294, %v3293
    %v3319 = vpack.c.bf16 %v3296, %v3295
    %v3320 = vpack.c.bf16 %v3298, %v3297
    %v3321 = vpack.c.bf16 %v3300, %v3299
    %v3322 = vpack.c.bf16 %v3302, %v3301
    %v3323 = vpack.c.bf16 %v3304, %v3303
    %v3324 = vpack.c.bf16 %v3306, %v3305
    %v3325 = vpack.c.bf16 %v3308, %v3307
    %v3326 = vpack.c.bf16 %v3310, %v3309
    %s3327 = scalar_lea.vmem [#allocation2], 192
    %v3328 = vld [vmem:[%s3327] sm:$0xf]
    %v3329 = vld [vmem:[%s3327 + $0x4] sm:$0xf]
    %v3330 = vld [vmem:[%s3327 + $0x8] sm:$0xf]
    %v3331 = vld [vmem:[%s3327 + $0xc] sm:$0xf]
    %v3332 = vld [vmem:[%s3327 + $0x10] sm:$0xf]
    %v3333 = vld [vmem:[%s3327 + $0x14] sm:$0xf]
    %v3334 = vld [vmem:[%s3327 + $0x18] sm:$0xf]
    %v3335 = vld [vmem:[%s3327 + $0x1c] sm:$0xf]
    %v3336 = vld [vmem:[%s3327 + $0x20] sm:$0xf]
    %v3337 = vld [vmem:[%s3327 + $0x24] sm:$0xf]
    %v3338 = vld [vmem:[%s3327 + $0x28] sm:$0xf]
    %v3339 = vld [vmem:[%s3327 + $0x2c] sm:$0xf]
    %v3340 = vld [vmem:[%s3327 + $0x30] sm:$0xf]
    %v3341 = vld [vmem:[%s3327 + $0x34] sm:$0xf]
    %v3342 = vld [vmem:[%s3327 + $0x38] sm:$0xf]
    %v3343 = vld [vmem:[%s3327 + $0x3c] sm:$0xf]
    %s3344 = scalar_lea.vmem %s6, 3
    %v3345 = vld [vmem:[%s3344] sm:$0x1]
    %v3347 = vlaneseq
    %v3348 = vshrl.u32 %v3347, 7
    %v3349 = vsub.s32 0, %v3348
    %v3350 = vrot.slane %v3345, %v3349
    %v3368 = vunpack.c.l.b16 %v3328
    %v3369 = vunpack.c.l.b16 %v3329
    %v3370 = vunpack.c.l.b16 %v3330
    %v3371 = vunpack.c.l.b16 %v3331
    %v3372 = vunpack.c.l.b16 %v3332
    %v3373 = vunpack.c.l.b16 %v3333
    %v3374 = vunpack.c.l.b16 %v3334
    %v3375 = vunpack.c.l.b16 %v3335
    %v3376 = vunpack.c.l.b16 %v3336
    %v3377 = vunpack.c.l.b16 %v3337
    %v3378 = vunpack.c.l.b16 %v3338
    %v3379 = vunpack.c.l.b16 %v3339
    %v3380 = vunpack.c.l.b16 %v3340
    %v3381 = vunpack.c.l.b16 %v3341
    %v3382 = vunpack.c.l.b16 %v3342
    %v3383 = vunpack.c.l.b16 %v3343
    %v3384 = vpack.c.b16 %v3369, %v3368
    %v3385 = vpack.c.b16 %v3371, %v3370
    %v3386 = vpack.c.b16 %v3373, %v3372
    %v3387 = vpack.c.b16 %v3375, %v3374
    %v3388 = vpack.c.b16 %v3377, %v3376
    %v3389 = vpack.c.b16 %v3379, %v3378
    %v3390 = vpack.c.b16 %v3381, %v3380
    %v3391 = vpack.c.b16 %v3383, %v3382
    %3400 = vmatprep.subr.bf16.mxu0 0
    %3401 = vmatpush1.bf16.msra.mxu0 %v3384
    %3402 = vmatprep.subr.bf16.mxu0 0
    %3403 = vmatpush1.bf16.msra.mxu0 %v3385
    %3404 = vmatprep.subr.bf16.mxu0 0
    %3405 = vmatpush1.bf16.msra.mxu0 %v3386
    %3406 = vmatprep.subr.bf16.mxu0 0
    %3407 = vmatpush1.bf16.msra.mxu0 %v3387
    %3408 = vmatprep.subr.bf16.mxu0 0
    %3409 = vmatpush1.bf16.msra.mxu0 %v3388
    %3410 = vmatprep.subr.bf16.mxu0 0
    %3411 = vmatpush1.bf16.msra.mxu0 %v3389
    %3412 = vmatprep.subr.bf16.mxu0 0
    %3413 = vmatpush1.bf16.msra.mxu0 %v3390
    %3414 = vmatprep.subr.bf16.mxu0 0
    %3415 = vmatpush1.bf16.msra.mxu0 %v3391
    %3416 = vmatprep.subr.bf16.mxu0 0
    %3417 = vmatpush1.bf16.msra.mxu0 0
    %3418 = vmatprep.subr.bf16.mxu0 0
    %3419 = vmatpush1.bf16.msra.mxu0 0
    %3420 = vmatprep.subr.bf16.mxu0 0
    %3421 = vmatpush1.bf16.msra.mxu0 0
    %3422 = vmatprep.subr.bf16.mxu0 0
    %3423 = vmatpush1.bf16.msra.mxu0 0
    %3424 = vmatprep.subr.bf16.mxu0 0
    %3425 = vmatpush1.bf16.msra.mxu0 0
    %3426 = vmatprep.subr.bf16.mxu0 0
    %3427 = vmatpush1.bf16.msra.mxu0 0
    %3428 = vmatprep.subr.bf16.mxu0 0
    %3429 = vmatpush1.bf16.msra.mxu0 0
    %3430 = vmatprep.subr.bf16.mxu0 0
    %3431 = vmatpush1.bf16.msra.mxu0 0
    %3432 = vmatprep.mubr.bf16.mxu0 0
    %3433 = vmatmul.mubr.bf16.gmra.mrb[0].mxu0 %v3311
    %v3434 = vpop.f32.mrb[0].mxu0
    %v3435 = vadd.f32 %v3350, %v3434
    %v3436 = vpop.f32.mrb[0].mxu0
    %v3437 = vpop.f32.mrb[0].mxu0
    %v3438 = vadd.f32 %v3350, %v3437
    %v3439 = vpop.f32.mrb[0].mxu0
    %3440 = vmatprep.mubr.bf16.mxu0 0
    %3441 = vmatmul.mubr.bf16.gmra.mrb[0].mxu0 %v3312
    %v3442 = vpop.f32.mrb[0].mxu0
    %v3443 = vadd.f32 %v3350, %v3442
    %v3444 = vpop.f32.mrb[0].mxu0
    %v3445 = vpop.f32.mrb[0].mxu0
    %v3446 = vadd.f32 %v3350, %v3445
    %v3447 = vpop.f32.mrb[0].mxu0
    %3448 = vmatprep.mubr.bf16.mxu0 0
    %3449 = vmatmul.mubr.bf16.gmra.mrb[0].mxu0 %v3313
    %v3450 = vpop.f32.mrb[0].mxu0
    %v3451 = vadd.f32 %v3350, %v3450
    %v3452 = vpop.f32.mrb[0].mxu0
    %v3453 = vpop.f32.mrb[0].mxu0
    %v3454 = vadd.f32 %v3350, %v3453
    %v3455 = vpop.f32.mrb[0].mxu0
    %3456 = vmatprep.mubr.bf16.mxu0 0
    %3457 = vmatmul.mubr.bf16.gmra.mrb[0].mxu0 %v3314
    %v3458 = vpop.f32.mrb[0].mxu0
    %v3459 = vadd.f32 %v3350, %v3458
    %v3460 = vpop.f32.mrb[0].mxu0
    %v3461 = vpop.f32.mrb[0].mxu0
    %v3462 = vadd.f32 %v3350, %v3461
    %v3463 = vpop.f32.mrb[0].mxu0
    %3464 = vmatprep.mubr.bf16.mxu0 0
    %3465 = vmatmul.mubr.bf16.gmra.mrb[0].mxu0 %v3315
    %v3466 = vpop.f32.mrb[0].mxu0
    %v3467 = vadd.f32 %v3350, %v3466
    %v3468 = vpop.f32.mrb[0].mxu0
    %v3469 = vpop.f32.mrb[0].mxu0
    %v3470 = vadd.f32 %v3350, %v3469
    %v3471 = vpop.f32.mrb[0].mxu0
    %3472 = vmatprep.mubr.bf16.mxu0 0
    %3473 = vmatmul.mubr.bf16.gmra.mrb[0].mxu0 %v3316
    %v3474 = vpop.f32.mrb[0].mxu0
    %v3475 = vadd.f32 %v3350, %v3474
    %v3476 = vpop.f32.mrb[0].mxu0
    %v3477 = vpop.f32.mrb[0].mxu0
    %v3478 = vadd.f32 %v3350, %v3477
    %v3479 = vpop.f32.mrb[0].mxu0
    %3480 = vmatprep.mubr.bf16.mxu0 0
    %3481 = vmatmul.mubr.bf16.gmra.mrb[0].mxu0 %v3317
    %v3482 = vpop.f32.mrb[0].mxu0
    %v3483 = vadd.f32 %v3350, %v3482
    %v3484 = vpop.f32.mrb[0].mxu0
    %v3485 = vpop.f32.mrb[0].mxu0
    %v3486 = vadd.f32 %v3350, %v3485
    %v3487 = vpop.f32.mrb[0].mxu0
    %3488 = vmatprep.mubr.bf16.mxu0 0
    %3489 = vmatmul.mubr.bf16.gmra.mrb[0].mxu0 %v3318
    %v3490 = vpop.f32.mrb[0].mxu0
    %v3491 = vadd.f32 %v3350, %v3490
    %v3492 = vpop.f32.mrb[0].mxu0
    %v3493 = vpop.f32.mrb[0].mxu0
    %v3494 = vadd.f32 %v3350, %v3493
    %v3495 = vpop.f32.mrb[0].mxu0
    %3496 = vmatprep.mubr.bf16.mxu0 0
    %3497 = vmatmul.mubr.bf16.gmra.mrb[0].mxu0 %v3319
    %v3498 = vpop.f32.mrb[0].mxu0
    %v3499 = vadd.f32 %v3350, %v3498
    %v3500 = vpop.f32.mrb[0].mxu0
    %v3501 = vpop.f32.mrb[0].mxu0
    %v3502 = vadd.f32 %v3350, %v3501
    %v3503 = vpop.f32.mrb[0].mxu0
    %3504 = vmatprep.mubr.bf16.mxu0 0
    %3505 = vmatmul.mubr.bf16.gmra.mrb[0].mxu0 %v3320
    %v3506 = vpop.f32.mrb[0].mxu0
    %v3507 = vadd.f32 %v3350, %v3506
    %v3508 = vpop.f32.mrb[0].mxu0
    %v3509 = vpop.f32.mrb[0].mxu0
    %v3510 = vadd.f32 %v3350, %v3509
    %v3511 = vpop.f32.mrb[0].mxu0
    %3512 = vmatprep.mubr.bf16.mxu0 0
    %3513 = vmatmul.mubr.bf16.gmra.mrb[0].mxu0 %v3321
    %v3514 = vpop.f32.mrb[0].mxu0
    %v3515 = vadd.f32 %v3350, %v3514
    %v3516 = vpop.f32.mrb[0].mxu0
    %v3517 = vpop.f32.mrb[0].mxu0
    %v3518 = vadd.f32 %v3350, %v3517
    %v3519 = vpop.f32.mrb[0].mxu0
    %3520 = vmatprep.mubr.bf16.mxu0 0
    %3521 = vmatmul.mubr.bf16.gmra.mrb[0].mxu0 %v3322
    %v3522 = vpop.f32.mrb[0].mxu0
    %v3523 = vadd.f32 %v3350, %v3522
    %v3524 = vpop.f32.mrb[0].mxu0
    %v3525 = vpop.f32.mrb[0].mxu0
    %v3526 = vadd.f32 %v3350, %v3525
    %v3527 = vpop.f32.mrb[0].mxu0
    %3528 = vmatprep.mubr.bf16.mxu0 0
    %3529 = vmatmul.mubr.bf16.gmra.mrb[0].mxu0 %v3323
    %v3530 = vpop.f32.mrb[0].mxu0
    %v3531 = vadd.f32 %v3350, %v3530
    %v3532 = vpop.f32.mrb[0].mxu0
    %v3533 = vpop.f32.mrb[0].mxu0
    %v3534 = vadd.f32 %v3350, %v3533
    %v3535 = vpop.f32.mrb[0].mxu0
    %3536 = vmatprep.mubr.bf16.mxu0 0
    %3537 = vmatmul.mubr.bf16.gmra.mrb[0].mxu0 %v3324
    %v3538 = vpop.f32.mrb[0].mxu0
    %v3539 = vadd.f32 %v3350, %v3538
    %v3540 = vpop.f32.mrb[0].mxu0
    %v3541 = vpop.f32.mrb[0].mxu0
    %v3542 = vadd.f32 %v3350, %v3541
    %v3543 = vpop.f32.mrb[0].mxu0
    %3544 = vmatprep.mubr.bf16.mxu0 0
    %3545 = vmatmul.mubr.bf16.gmra.mrb[0].mxu0 %v3325
    %v3546 = vpop.f32.mrb[0].mxu0
    %v3547 = vadd.f32 %v3350, %v3546
    %v3548 = vpop.f32.mrb[0].mxu0
    %v3549 = vpop.f32.mrb[0].mxu0
    %v3550 = vadd.f32 %v3350, %v3549
    %v3551 = vpop.f32.mrb[0].mxu0
    %3552 = vmatprep.mubr.bf16.mxu0 0
    %3553 = vmatmul.mubr.bf16.gmra.mrb[0].mxu0 %v3326
    %v3554 = vpop.f32.mrb[0].mxu0
    %v3555 = vadd.f32 %v3350, %v3554
    %v3556 = vpop.f32.mrb[0].mxu0
    %v3557 = vpop.f32.mrb[0].mxu0
    %v3558 = vadd.f32 %v3350, %v3557
    %v3559 = vpop.f32.mrb[0].mxu0
    %3560 = vdwg.mxu0
    %s3561 = scalar_lea.vmem %s7, 3
    %v3562 = vld [vmem:[%s3561] sm:$0x1]
    %s3563 = scalar_lea.vmem %s8, 3
    %v3564 = vld [vmem:[%s3563] sm:$0x1]
    %3565 = vadd.xlane.f32.xlu0 %v3435
    %v3566 = vpop.xlane.xlu0 %3565
    %3567 = vadd.xlane.f32.xlu0 %v3438
    %v3568 = vpop.xlane.xlu0 %3567
    %3569 = vadd.xlane.f32.xlu0 %v3443
    %v3570 = vpop.xlane.xlu0 %3569
    %3571 = vadd.xlane.f32.xlu0 %v3446
    %v3572 = vpop.xlane.xlu0 %3571
    %3573 = vadd.xlane.f32.xlu0 %v3451
    %v3574 = vpop.xlane.xlu0 %3573
    %3575 = vadd.xlane.f32.xlu0 %v3454
    %v3576 = vpop.xlane.xlu0 %3575
    %3577 = vadd.xlane.f32.xlu0 %v3459
    %v3578 = vpop.xlane.xlu0 %3577
    %3579 = vadd.xlane.f32.xlu0 %v3462
    %v3580 = vpop.xlane.xlu0 %3579
    %3581 = vadd.xlane.f32.xlu0 %v3467
    %v3582 = vpop.xlane.xlu0 %3581
    %3583 = vadd.xlane.f32.xlu0 %v3470
    %v3584 = vpop.xlane.xlu0 %3583
    %3585 = vadd.xlane.f32.xlu0 %v3475
    %v3586 = vpop.xlane.xlu0 %3585
    %3587 = vadd.xlane.f32.xlu0 %v3478
    %v3588 = vpop.xlane.xlu0 %3587
    %3589 = vadd.xlane.f32.xlu0 %v3483
    %v3590 = vpop.xlane.xlu0 %3589
    %3591 = vadd.xlane.f32.xlu0 %v3486
    %v3592 = vpop.xlane.xlu0 %3591
    %3593 = vadd.xlane.f32.xlu0 %v3491
    %v3594 = vpop.xlane.xlu0 %3593
    %3595 = vadd.xlane.f32.xlu0 %v3494
    %v3596 = vpop.xlane.xlu0 %3595
    %3597 = vadd.xlane.f32.xlu0 %v3499
    %v3598 = vpop.xlane.xlu0 %3597
    %3599 = vadd.xlane.f32.xlu0 %v3502
    %v3600 = vpop.xlane.xlu0 %3599
    %3601 = vadd.xlane.f32.xlu0 %v3507
    %v3602 = vpop.xlane.xlu0 %3601
    %3603 = vadd.xlane.f32.xlu0 %v3510
    %v3604 = vpop.xlane.xlu0 %3603
    %3605 = vadd.xlane.f32.xlu0 %v3515
    %v3606 = vpop.xlane.xlu0 %3605
    %3607 = vadd.xlane.f32.xlu0 %v3518
    %v3608 = vpop.xlane.xlu0 %3607
    %3609 = vadd.xlane.f32.xlu0 %v3523
    %v3610 = vpop.xlane.xlu0 %3609
    %3611 = vadd.xlane.f32.xlu0 %v3526
    %v3612 = vpop.xlane.xlu0 %3611
    %3613 = vadd.xlane.f32.xlu0 %v3531
    %v3614 = vpop.xlane.xlu0 %3613
    %3615 = vadd.xlane.f32.xlu0 %v3534
    %v3616 = vpop.xlane.xlu0 %3615
    %3617 = vadd.xlane.f32.xlu0 %v3539
    %v3618 = vpop.xlane.xlu0 %3617
    %3619 = vadd.xlane.f32.xlu0 %v3542
    %v3620 = vpop.xlane.xlu0 %3619
    %3621 = vadd.xlane.f32.xlu0 %v3547
    %v3622 = vpop.xlane.xlu0 %3621
    %3623 = vadd.xlane.f32.xlu0 %v3550
    %v3624 = vpop.xlane.xlu0 %3623
    %3625 = vadd.xlane.f32.xlu0 %v3555
    %v3626 = vpop.xlane.xlu0 %3625
    %3627 = vadd.xlane.f32.xlu0 %v3558
    %v3628 = vpop.xlane.xlu0 %3627
    %v3629 = vmul.f32 %v3435, %v3435
    %v3630 = vmul.f32 %v3438, %v3438
    %v3631 = vmul.f32 %v3443, %v3443
    %v3632 = vmul.f32 %v3446, %v3446
    %v3633 = vmul.f32 %v3451, %v3451
    %v3634 = vmul.f32 %v3454, %v3454
    %v3635 = vmul.f32 %v3459, %v3459
    %v3636 = vmul.f32 %v3462, %v3462
    %v3637 = vmul.f32 %v3467, %v3467
    %v3638 = vmul.f32 %v3470, %v3470
    %v3639 = vmul.f32 %v3475, %v3475
    %v3640 = vmul.f32 %v3478, %v3478
    %v3641 = vmul.f32 %v3483, %v3483
    %v3642 = vmul.f32 %v3486, %v3486
    %v3643 = vmul.f32 %v3491, %v3491
    %v3644 = vmul.f32 %v3494, %v3494
    %v3645 = vmul.f32 %v3499, %v3499
    %v3646 = vmul.f32 %v3502, %v3502
    %v3647 = vmul.f32 %v3507, %v3507
    %v3648 = vmul.f32 %v3510, %v3510
    %v3649 = vmul.f32 %v3515, %v3515
    %v3650 = vmul.f32 %v3518, %v3518
    %v3651 = vmul.f32 %v3523, %v3523
    %v3652 = vmul.f32 %v3526, %v3526
    %v3653 = vmul.f32 %v3531, %v3531
    %v3654 = vmul.f32 %v3534, %v3534
    %v3655 = vmul.f32 %v3539, %v3539
    %v3656 = vmul.f32 %v3542, %v3542
    %v3657 = vmul.f32 %v3547, %v3547
    %v3658 = vmul.f32 %v3550, %v3550
    %v3659 = vmul.f32 %v3555, %v3555
    %v3660 = vmul.f32 %v3558, %v3558
    %3661 = vadd.xlane.f32.xlu0 %v3629
    %v3662 = vpop.xlane.xlu0 %3661
    %3663 = vadd.xlane.f32.xlu0 %v3630
    %v3664 = vpop.xlane.xlu0 %3663
    %3665 = vadd.xlane.f32.xlu0 %v3631
    %v3666 = vpop.xlane.xlu0 %3665
    %3667 = vadd.xlane.f32.xlu0 %v3632
    %v3668 = vpop.xlane.xlu0 %3667
    %3669 = vadd.xlane.f32.xlu0 %v3633
    %v3670 = vpop.xlane.xlu0 %3669
    %3671 = vadd.xlane.f32.xlu0 %v3634
    %v3672 = vpop.xlane.xlu0 %3671
    %3673 = vadd.xlane.f32.xlu0 %v3635
    %v3674 = vpop.xlane.xlu0 %3673
    %3675 = vadd.xlane.f32.xlu0 %v3636
    %v3676 = vpop.xlane.xlu0 %3675
    %3677 = vadd.xlane.f32.xlu0 %v3637
    %v3678 = vpop.xlane.xlu0 %3677
    %3679 = vadd.xlane.f32.xlu0 %v3638
    %v3680 = vpop.xlane.xlu0 %3679
    %3681 = vadd.xlane.f32.xlu0 %v3639
    %v3682 = vpop.xlane.xlu0 %3681
    %3683 = vadd.xlane.f32.xlu0 %v3640
    %v3684 = vpop.xlane.xlu0 %3683
    %3685 = vadd.xlane.f32.xlu0 %v3641
    %v3686 = vpop.xlane.xlu0 %3685
    %3687 = vadd.xlane.f32.xlu0 %v3642
    %v3688 = vpop.xlane.xlu0 %3687
    %3689 = vadd.xlane.f32.xlu0 %v3643
    %v3690 = vpop.xlane.xlu0 %3689
    %3691 = vadd.xlane.f32.xlu0 %v3644
    %v3692 = vpop.xlane.xlu0 %3691
    %3693 = vadd.xlane.f32.xlu0 %v3645
    %v3694 = vpop.xlane.xlu0 %3693
    %3695 = vadd.xlane.f32.xlu0 %v3646
    %v3696 = vpop.xlane.xlu0 %3695
    %3697 = vadd.xlane.f32.xlu0 %v3647
    %v3698 = vpop.xlane.xlu0 %3697
    %3699 = vadd.xlane.f32.xlu0 %v3648
    %v3700 = vpop.xlane.xlu0 %3699
    %3701 = vadd.xlane.f32.xlu0 %v3649
    %v3702 = vpop.xlane.xlu0 %3701
    %3703 = vadd.xlane.f32.xlu0 %v3650
    %v3704 = vpop.xlane.xlu0 %3703
    %3705 = vadd.xlane.f32.xlu0 %v3651
    %v3706 = vpop.xlane.xlu0 %3705
    %3707 = vadd.xlane.f32.xlu0 %v3652
    %v3708 = vpop.xlane.xlu0 %3707
    %3709 = vadd.xlane.f32.xlu0 %v3653
    %v3710 = vpop.xlane.xlu0 %3709
    %3711 = vadd.xlane.f32.xlu0 %v3654
    %v3712 = vpop.xlane.xlu0 %3711
    %3713 = vadd.xlane.f32.xlu0 %v3655
    %v3714 = vpop.xlane.xlu0 %3713
    %3715 = vadd.xlane.f32.xlu0 %v3656
    %v3716 = vpop.xlane.xlu0 %3715
    %3717 = vadd.xlane.f32.xlu0 %v3657
    %v3718 = vpop.xlane.xlu0 %3717
    %3719 = vadd.xlane.f32.xlu0 %v3658
    %v3720 = vpop.xlane.xlu0 %3719
    %3721 = vadd.xlane.f32.xlu0 %v3659
    %v3722 = vpop.xlane.xlu0 %3721
    %3723 = vadd.xlane.f32.xlu0 %v3660
    %v3724 = vpop.xlane.xlu0 %3723
    %v3725 = vmul.f32 %v3566, 0.0078125
    %v3726 = vmul.f32 %v3568, 0.0078125
    %v3727 = vmul.f32 %v3570, 0.0078125
    %v3728 = vmul.f32 %v3572, 0.0078125
    %v3729 = vmul.f32 %v3574, 0.0078125
    %v3730 = vmul.f32 %v3576, 0.0078125
    %v3731 = vmul.f32 %v3578, 0.0078125
    %v3732 = vmul.f32 %v3580, 0.0078125
    %v3733 = vmul.f32 %v3582, 0.0078125
    %v3734 = vmul.f32 %v3584, 0.0078125
    %v3735 = vmul.f32 %v3586, 0.0078125
    %v3736 = vmul.f32 %v3588, 0.0078125
    %v3737 = vmul.f32 %v3590, 0.0078125
    %v3738 = vmul.f32 %v3592, 0.0078125
    %v3739 = vmul.f32 %v3594, 0.0078125
    %v3740 = vmul.f32 %v3596, 0.0078125
    %v3741 = vmul.f32 %v3598, 0.0078125
    %v3742 = vmul.f32 %v3600, 0.0078125
    %v3743 = vmul.f32 %v3602, 0.0078125
    %v3744 = vmul.f32 %v3604, 0.0078125
    %v3745 = vmul.f32 %v3606, 0.0078125
    %v3746 = vmul.f32 %v3608, 0.0078125
    %v3747 = vmul.f32 %v3610, 0.0078125
    %v3748 = vmul.f32 %v3612, 0.0078125
    %v3749 = vmul.f32 %v3614, 0.0078125
    %v3750 = vmul.f32 %v3616, 0.0078125
    %v3751 = vmul.f32 %v3618, 0.0078125
    %v3752 = vmul.f32 %v3620, 0.0078125
    %v3753 = vmul.f32 %v3622, 0.0078125
    %v3754 = vmul.f32 %v3624, 0.0078125
    %v3755 = vmul.f32 %v3626, 0.0078125
    %v3756 = vmul.f32 %v3628, 0.0078125
    %v3757 = vmul.f32 %v3662, 0.0078125
    %v3758 = vmul.f32 %v3664, 0.0078125
    %v3759 = vmul.f32 %v3666, 0.0078125
    %v3760 = vmul.f32 %v3668, 0.0078125
    %v3761 = vmul.f32 %v3670, 0.0078125
    %v3762 = vmul.f32 %v3672, 0.0078125
    %v3763 = vmul.f32 %v3674, 0.0078125
    %v3764 = vmul.f32 %v3676, 0.0078125
    %v3765 = vmul.f32 %v3678, 0.0078125
    %v3766 = vmul.f32 %v3680, 0.0078125
    %v3767 = vmul.f32 %v3682, 0.0078125
    %v3768 = vmul.f32 %v3684, 0.0078125
    %v3769 = vmul.f32 %v3686, 0.0078125
    %v3770 = vmul.f32 %v3688, 0.0078125
    %v3771 = vmul.f32 %v3690, 0.0078125
    %v3772 = vmul.f32 %v3692, 0.0078125
    %v3773 = vmul.f32 %v3694, 0.0078125
    %v3774 = vmul.f32 %v3696, 0.0078125
    %v3775 = vmul.f32 %v3698, 0.0078125
    %v3776 = vmul.f32 %v3700, 0.0078125
    %v3777 = vmul.f32 %v3702, 0.0078125
    %v3778 = vmul.f32 %v3704, 0.0078125
    %v3779 = vmul.f32 %v3706, 0.0078125
    %v3780 = vmul.f32 %v3708, 0.0078125
    %v3781 = vmul.f32 %v3710, 0.0078125
    %v3782 = vmul.f32 %v3712, 0.0078125
    %v3783 = vmul.f32 %v3714, 0.0078125
    %v3784 = vmul.f32 %v3716, 0.0078125
    %v3785 = vmul.f32 %v3718, 0.0078125
    %v3786 = vmul.f32 %v3720, 0.0078125
    %v3787 = vmul.f32 %v3722, 0.0078125
    %v3788 = vmul.f32 %v3724, 0.0078125
    %v3789 = vmul.f32 %v3725, %v3725
    %v3790 = vmul.f32 %v3726, %v3726
    %v3791 = vmul.f32 %v3727, %v3727
    %v3792 = vmul.f32 %v3728, %v3728
    %v3793 = vmul.f32 %v3729, %v3729
    %v3794 = vmul.f32 %v3730, %v3730
    %v3795 = vmul.f32 %v3731, %v3731
    %v3796 = vmul.f32 %v3732, %v3732
    %v3797 = vmul.f32 %v3733, %v3733
    %v3798 = vmul.f32 %v3734, %v3734
    %v3799 = vmul.f32 %v3735, %v3735
    %v3800 = vmul.f32 %v3736, %v3736
    %v3801 = vmul.f32 %v3737, %v3737
    %v3802 = vmul.f32 %v3738, %v3738
    %v3803 = vmul.f32 %v3739, %v3739
    %v3804 = vmul.f32 %v3740, %v3740
    %v3805 = vmul.f32 %v3741, %v3741
    %v3806 = vmul.f32 %v3742, %v3742
    %v3807 = vmul.f32 %v3743, %v3743
    %v3808 = vmul.f32 %v3744, %v3744
    %v3809 = vmul.f32 %v3745, %v3745
    %v3810 = vmul.f32 %v3746, %v3746
    %v3811 = vmul.f32 %v3747, %v3747
    %v3812 = vmul.f32 %v3748, %v3748
    %v3813 = vmul.f32 %v3749, %v3749
    %v3814 = vmul.f32 %v3750, %v3750
    %v3815 = vmul.f32 %v3751, %v3751
    %v3816 = vmul.f32 %v3752, %v3752
    %v3817 = vmul.f32 %v3753, %v3753
    %v3818 = vmul.f32 %v3754, %v3754
    %v3819 = vmul.f32 %v3755, %v3755
    %v3820 = vmul.f32 %v3756, %v3756
    %v3821 = vsub.f32 %v3757, %v3789
    %v3822 = vsub.f32 %v3758, %v3790
    %v3823 = vsub.f32 %v3759, %v3791
    %v3824 = vsub.f32 %v3760, %v3792
    %v3825 = vsub.f32 %v3761, %v3793
    %v3826 = vsub.f32 %v3762, %v3794
    %v3827 = vsub.f32 %v3763, %v3795
    %v3828 = vsub.f32 %v3764, %v3796
    %v3829 = vsub.f32 %v3765, %v3797
    %v3830 = vsub.f32 %v3766, %v3798
    %v3831 = vsub.f32 %v3767, %v3799
    %v3832 = vsub.f32 %v3768, %v3800
    %v3833 = vsub.f32 %v3769, %v3801
    %v3834 = vsub.f32 %v3770, %v3802
    %v3835 = vsub.f32 %v3771, %v3803
    %v3836 = vsub.f32 %v3772, %v3804
    %v3837 = vsub.f32 %v3773, %v3805
    %v3838 = vsub.f32 %v3774, %v3806
    %v3839 = vsub.f32 %v3775, %v3807
    %v3840 = vsub.f32 %v3776, %v3808
    %v3841 = vsub.f32 %v3777, %v3809
    %v3842 = vsub.f32 %v3778, %v3810
    %v3843 = vsub.f32 %v3779, %v3811
    %v3844 = vsub.f32 %v3780, %v3812
    %v3845 = vsub.f32 %v3781, %v3813
    %v3846 = vsub.f32 %v3782, %v3814
    %v3847 = vsub.f32 %v3783, %v3815
    %v3848 = vsub.f32 %v3784, %v3816
    %v3849 = vsub.f32 %v3785, %v3817
    %v3850 = vsub.f32 %v3786, %v3818
    %v3851 = vsub.f32 %v3787, %v3819
    %v3852 = vsub.f32 %v3788, %v3820
    %v3853 = vadd.f32 %v3821, 1e-05
    %v3854 = vadd.f32 %v3822, 1e-05
    %v3855 = vadd.f32 %v3823, 1e-05
    %v3856 = vadd.f32 %v3824, 1e-05
    %v3857 = vadd.f32 %v3825, 1e-05
    %v3858 = vadd.f32 %v3826, 1e-05
    %v3859 = vadd.f32 %v3827, 1e-05
    %v3860 = vadd.f32 %v3828, 1e-05
    %v3861 = vadd.f32 %v3829, 1e-05
    %v3862 = vadd.f32 %v3830, 1e-05
    %v3863 = vadd.f32 %v3831, 1e-05
    %v3864 = vadd.f32 %v3832, 1e-05
    %v3865 = vadd.f32 %v3833, 1e-05
    %v3866 = vadd.f32 %v3834, 1e-05
    %v3867 = vadd.f32 %v3835, 1e-05
    %v3868 = vadd.f32 %v3836, 1e-05
    %v3869 = vadd.f32 %v3837, 1e-05
    %v3870 = vadd.f32 %v3838, 1e-05
    %v3871 = vadd.f32 %v3839, 1e-05
    %v3872 = vadd.f32 %v3840, 1e-05
    %v3873 = vadd.f32 %v3841, 1e-05
    %v3874 = vadd.f32 %v3842, 1e-05
    %v3875 = vadd.f32 %v3843, 1e-05
    %v3876 = vadd.f32 %v3844, 1e-05
    %v3877 = vadd.f32 %v3845, 1e-05
    %v3878 = vadd.f32 %v3846, 1e-05
    %v3879 = vadd.f32 %v3847, 1e-05
    %v3880 = vadd.f32 %v3848, 1e-05
    %v3881 = vadd.f32 %v3849, 1e-05
    %v3882 = vadd.f32 %v3850, 1e-05
    %v3883 = vadd.f32 %v3851, 1e-05
    %v3884 = vadd.f32 %v3852, 1e-05
    %v3885 = vrsqrt.pop %v3853
    %v3886 = vrsqrt.pop %v3854
    %v3887 = vrsqrt.pop %v3855
    %v3888 = vrsqrt.pop %v3856
    %v3889 = vrsqrt.pop %v3857
    %v3890 = vrsqrt.pop %v3858
    %v3891 = vrsqrt.pop %v3859
    %v3892 = vrsqrt.pop %v3860
    %v3893 = vrsqrt.pop %v3861
    %v3894 = vrsqrt.pop %v3862
    %v3895 = vrsqrt.pop %v3863
    %v3896 = vrsqrt.pop %v3864
    %v3897 = vrsqrt.pop %v3865
    %v3898 = vrsqrt.pop %v3866
    %v3899 = vrsqrt.pop %v3867
    %v3900 = vrsqrt.pop %v3868
    %v3901 = vrsqrt.pop %v3869
    %v3902 = vrsqrt.pop %v3870
    %v3903 = vrsqrt.pop %v3871
    %v3904 = vrsqrt.pop %v3872
    %v3905 = vrsqrt.pop %v3873
    %v3906 = vrsqrt.pop %v3874
    %v3907 = vrsqrt.pop %v3875
    %v3908 = vrsqrt.pop %v3876
    %v3909 = vrsqrt.pop %v3877
    %v3910 = vrsqrt.pop %v3878
    %v3911 = vrsqrt.pop %v3879
    %v3912 = vrsqrt.pop %v3880
    %v3913 = vrsqrt.pop %v3881
    %v3914 = vrsqrt.pop %v3882
    %v3915 = vrsqrt.pop %v3883
    %v3916 = vrsqrt.pop %v3884
    %v3917 = vsub.f32 %v3435, %v3725
    %v3918 = vsub.f32 %v3438, %v3726
    %v3919 = vsub.f32 %v3443, %v3727
    %v3920 = vsub.f32 %v3446, %v3728
    %v3921 = vsub.f32 %v3451, %v3729
    %v3922 = vsub.f32 %v3454, %v3730
    %v3923 = vsub.f32 %v3459, %v3731
    %v3924 = vsub.f32 %v3462, %v3732
    %v3925 = vsub.f32 %v3467, %v3733
    %v3926 = vsub.f32 %v3470, %v3734
    %v3927 = vsub.f32 %v3475, %v3735
    %v3928 = vsub.f32 %v3478, %v3736
    %v3929 = vsub.f32 %v3483, %v3737
    %v3930 = vsub.f32 %v3486, %v3738
    %v3931 = vsub.f32 %v3491, %v3739
    %v3932 = vsub.f32 %v3494, %v3740
    %v3933 = vsub.f32 %v3499, %v3741
    %v3934 = vsub.f32 %v3502, %v3742
    %v3935 = vsub.f32 %v3507, %v3743
    %v3936 = vsub.f32 %v3510, %v3744
    %v3937 = vsub.f32 %v3515, %v3745
    %v3938 = vsub.f32 %v3518, %v3746
    %v3939 = vsub.f32 %v3523, %v3747
    %v3940 = vsub.f32 %v3526, %v3748
    %v3941 = vsub.f32 %v3531, %v3749
    %v3942 = vsub.f32 %v3534, %v3750
    %v3943 = vsub.f32 %v3539, %v3751
    %v3944 = vsub.f32 %v3542, %v3752
    %v3945 = vsub.f32 %v3547, %v3753
    %v3946 = vsub.f32 %v3550, %v3754
    %v3947 = vsub.f32 %v3555, %v3755
    %v3948 = vsub.f32 %v3558, %v3756
    %v3950 = vlaneseq
    %v3951 = vshrl.u32 %v3950, 7
    %v3952 = vsub.s32 0, %v3951
    %v3953 = vrot.slane %v3562, %v3952
    %v3955 = vmul.f32 %v3885, %v3953
    %v3956 = vmul.f32 %v3886, %v3953
    %v3957 = vmul.f32 %v3887, %v3953
    %v3958 = vmul.f32 %v3888, %v3953
    %v3959 = vmul.f32 %v3889, %v3953
    %v3960 = vmul.f32 %v3890, %v3953
    %v3961 = vmul.f32 %v3891, %v3953
    %v3962 = vmul.f32 %v3892, %v3953
    %v3963 = vmul.f32 %v3893, %v3953
    %v3964 = vmul.f32 %v3894, %v3953
    %v3965 = vmul.f32 %v3895, %v3953
    %v3966 = vmul.f32 %v3896, %v3953
    %v3967 = vmul.f32 %v3897, %v3953
    %v3968 = vmul.f32 %v3898, %v3953
    %v3969 = vmul.f32 %v3899, %v3953
    %v3970 = vmul.f32 %v3900, %v3953
    %v3971 = vmul.f32 %v3901, %v3953
    %v3972 = vmul.f32 %v3902, %v3953
    %v3973 = vmul.f32 %v3903, %v3953
    %v3974 = vmul.f32 %v3904, %v3953
    %v3975 = vmul.f32 %v3905, %v3953
    %v3976 = vmul.f32 %v3906, %v3953
    %v3977 = vmul.f32 %v3907, %v3953
    %v3978 = vmul.f32 %v3908, %v3953
    %v3979 = vmul.f32 %v3909, %v3953
    %v3980 = vmul.f32 %v3910, %v3953
    %v3981 = vmul.f32 %v3911, %v3953
    %v3982 = vmul.f32 %v3912, %v3953
    %v3983 = vmul.f32 %v3913, %v3953
    %v3984 = vmul.f32 %v3914, %v3953
    %v3985 = vmul.f32 %v3915, %v3953
    %v3986 = vmul.f32 %v3916, %v3953
    %v3987 = vmul.f32 %v3917, %v3955
    %v3988 = vmul.f32 %v3918, %v3956
    %v3989 = vmul.f32 %v3919, %v3957
    %v3990 = vmul.f32 %v3920, %v3958
    %v3991 = vmul.f32 %v3921, %v3959
    %v3992 = vmul.f32 %v3922, %v3960
    %v3993 = vmul.f32 %v3923, %v3961
    %v3994 = vmul.f32 %v3924, %v3962
    %v3995 = vmul.f32 %v3925, %v3963
    %v3996 = vmul.f32 %v3926, %v3964
    %v3997 = vmul.f32 %v3927, %v3965
    %v3998 = vmul.f32 %v3928, %v3966
    %v3999 = vmul.f32 %v3929, %v3967
    %v4000 = vmul.f32 %v3930, %v3968
    %v4001 = vmul.f32 %v3931, %v3969
    %v4002 = vmul.f32 %v3932, %v3970
    %v4003 = vmul.f32 %v3933, %v3971
    %v4004 = vmul.f32 %v3934, %v3972
    %v4005 = vmul.f32 %v3935, %v3973
    %v4006 = vmul.f32 %v3936, %v3974
    %v4007 = vmul.f32 %v3937, %v3975
    %v4008 = vmul.f32 %v3938, %v3976
    %v4009 = vmul.f32 %v3939, %v3977
    %v4010 = vmul.f32 %v3940, %v3978
    %v4011 = vmul.f32 %v3941, %v3979
    %v4012 = vmul.f32 %v3942, %v3980
    %v4013 = vmul.f32 %v3943, %v3981
    %v4014 = vmul.f32 %v3944, %v3982
    %v4015 = vmul.f32 %v3945, %v3983
    %v4016 = vmul.f32 %v3946, %v3984
    %v4017 = vmul.f32 %v3947, %v3985
    %v4018 = vmul.f32 %v3948, %v3986
    %v4020 = vlaneseq
    %v4021 = vshrl.u32 %v4020, 7
    %v4022 = vsub.s32 0, %v4021
    %v4023 = vrot.slane %v3564, %v4022
    %v4025 = vadd.f32 %v3987, %v4023
    %v4026 = vadd.f32 %v3988, %v4023
    %v4027 = vadd.f32 %v3989, %v4023
    %v4028 = vadd.f32 %v3990, %v4023
    %v4029 = vadd.f32 %v3991, %v4023
    %v4030 = vadd.f32 %v3992, %v4023
    %v4031 = vadd.f32 %v3993, %v4023
    %v4032 = vadd.f32 %v3994, %v4023
    %v4033 = vadd.f32 %v3995, %v4023
    %v4034 = vadd.f32 %v3996, %v4023
    %v4035 = vadd.f32 %v3997, %v4023
    %v4036 = vadd.f32 %v3998, %v4023
    %v4037 = vadd.f32 %v3999, %v4023
    %v4038 = vadd.f32 %v4000, %v4023
    %v4039 = vadd.f32 %v4001, %v4023
    %v4040 = vadd.f32 %v4002, %v4023
    %v4041 = vadd.f32 %v4003, %v4023
    %v4042 = vadd.f32 %v4004, %v4023
    %v4043 = vadd.f32 %v4005, %v4023
    %v4044 = vadd.f32 %v4006, %v4023
    %v4045 = vadd.f32 %v4007, %v4023
    %v4046 = vadd.f32 %v4008, %v4023
    %v4047 = vadd.f32 %v4009, %v4023
    %v4048 = vadd.f32 %v4010, %v4023
    %v4049 = vadd.f32 %v4011, %v4023
    %v4050 = vadd.f32 %v4012, %v4023
    %v4051 = vadd.f32 %v4013, %v4023
    %v4052 = vadd.f32 %v4014, %v4023
    %v4053 = vadd.f32 %v4015, %v4023
    %v4054 = vadd.f32 %v4016, %v4023
    %v4055 = vadd.f32 %v4017, %v4023
    %v4056 = vadd.f32 %v4018, %v4023
    %v4057 = vmax.f32 %v4025, 0.0
    %v4058 = vmax.f32 %v4026, 0.0
    %v4059 = vmax.f32 %v4027, 0.0
    %v4060 = vmax.f32 %v4028, 0.0
    %v4061 = vmax.f32 %v4029, 0.0
    %v4062 = vmax.f32 %v4030, 0.0
    %v4063 = vmax.f32 %v4031, 0.0
    %v4064 = vmax.f32 %v4032, 0.0
    %v4065 = vmax.f32 %v4033, 0.0
    %v4066 = vmax.f32 %v4034, 0.0
    %v4067 = vmax.f32 %v4035, 0.0
    %v4068 = vmax.f32 %v4036, 0.0
    %v4069 = vmax.f32 %v4037, 0.0
    %v4070 = vmax.f32 %v4038, 0.0
    %v4071 = vmax.f32 %v4039, 0.0
    %v4072 = vmax.f32 %v4040, 0.0
    %v4073 = vmax.f32 %v4041, 0.0
    %v4074 = vmax.f32 %v4042, 0.0
    %v4075 = vmax.f32 %v4043, 0.0
    %v4076 = vmax.f32 %v4044, 0.0
    %v4077 = vmax.f32 %v4045, 0.0
    %v4078 = vmax.f32 %v4046, 0.0
    %v4079 = vmax.f32 %v4047, 0.0
    %v4080 = vmax.f32 %v4048, 0.0
    %v4081 = vmax.f32 %v4049, 0.0
    %v4082 = vmax.f32 %v4050, 0.0
    %v4083 = vmax.f32 %v4051, 0.0
    %v4084 = vmax.f32 %v4052, 0.0
    %v4085 = vmax.f32 %v4053, 0.0
    %v4086 = vmax.f32 %v4054, 0.0
    %v4087 = vmax.f32 %v4055, 0.0
    %v4088 = vmax.f32 %v4056, 0.0
    %v4089 = vadd.f32 %v4057, %v2501
    %v4090 = vadd.f32 %v4058, %v2502
    %v4091 = vadd.f32 %v4059, %v2503
    %v4092 = vadd.f32 %v4060, %v2504
    %v4093 = vadd.f32 %v4061, %v2505
    %v4094 = vadd.f32 %v4062, %v2506
    %v4095 = vadd.f32 %v4063, %v2507
    %v4096 = vadd.f32 %v4064, %v2508
    %v4097 = vadd.f32 %v4065, %v2509
    %v4098 = vadd.f32 %v4066, %v2510
    %v4099 = vadd.f32 %v4067, %v2511
    %v4100 = vadd.f32 %v4068, %v2512
    %v4101 = vadd.f32 %v4069, %v2513
    %v4102 = vadd.f32 %v4070, %v2514
    %v4103 = vadd.f32 %v4071, %v2515
    %v4104 = vadd.f32 %v4072, %v2516
    %v4105 = vadd.f32 %v4073, %v2517
    %v4106 = vadd.f32 %v4074, %v2518
    %v4107 = vadd.f32 %v4075, %v2519
    %v4108 = vadd.f32 %v4076, %v2520
    %v4109 = vadd.f32 %v4077, %v2521
    %v4110 = vadd.f32 %v4078, %v2522
    %v4111 = vadd.f32 %v4079, %v2523
    %v4112 = vadd.f32 %v4080, %v2524
    %v4113 = vadd.f32 %v4081, %v2525
    %v4114 = vadd.f32 %v4082, %v2526
    %v4115 = vadd.f32 %v4083, %v2527
    %v4116 = vadd.f32 %v4084, %v2528
    %v4117 = vadd.f32 %v4085, %v2529
    %v4118 = vadd.f32 %v4086, %v2530
    %v4119 = vadd.f32 %v4087, %v2531
    %v4120 = vadd.f32 %v4088, %v2532
    %v4121 = vmax.f32 %v4089, 0.0
    %v4122 = vmax.f32 %v4090, 0.0
    %v4123 = vmax.f32 %v4091, 0.0
    %v4124 = vmax.f32 %v4092, 0.0
    %v4125 = vmax.f32 %v4093, 0.0
    %v4126 = vmax.f32 %v4094, 0.0
    %v4127 = vmax.f32 %v4095, 0.0
    %v4128 = vmax.f32 %v4096, 0.0
    %v4129 = vmax.f32 %v4097, 0.0
    %v4130 = vmax.f32 %v4098, 0.0
    %v4131 = vmax.f32 %v4099, 0.0
    %v4132 = vmax.f32 %v4100, 0.0
    %v4133 = vmax.f32 %v4101, 0.0
    %v4134 = vmax.f32 %v4102, 0.0
    %v4135 = vmax.f32 %v4103, 0.0
    %v4136 = vmax.f32 %v4104, 0.0
    %v4137 = vmax.f32 %v4105, 0.0
    %v4138 = vmax.f32 %v4106, 0.0
    %v4139 = vmax.f32 %v4107, 0.0
    %v4140 = vmax.f32 %v4108, 0.0
    %v4141 = vmax.f32 %v4109, 0.0
    %v4142 = vmax.f32 %v4110, 0.0
    %v4143 = vmax.f32 %v4111, 0.0
    %v4144 = vmax.f32 %v4112, 0.0
    %v4145 = vmax.f32 %v4113, 0.0
    %v4146 = vmax.f32 %v4114, 0.0
    %v4147 = vmax.f32 %v4115, 0.0
    %v4148 = vmax.f32 %v4116, 0.0
    %v4149 = vmax.f32 %v4117, 0.0
    %v4150 = vmax.f32 %v4118, 0.0
    %v4151 = vmax.f32 %v4119, 0.0
    %v4152 = vmax.f32 %v4120, 0.0
    %v4153 = vpack.c.bf16 %v4122, %v4121
    %v4154 = vpack.c.bf16 %v4124, %v4123
    %v4155 = vpack.c.bf16 %v4126, %v4125
    %v4156 = vpack.c.bf16 %v4128, %v4127
    %v4157 = vpack.c.bf16 %v4130, %v4129
    %v4158 = vpack.c.bf16 %v4132, %v4131
    %v4159 = vpack.c.bf16 %v4134, %v4133
    %v4160 = vpack.c.bf16 %v4136, %v4135
    %v4161 = vpack.c.bf16 %v4138, %v4137
    %v4162 = vpack.c.bf16 %v4140, %v4139
    %v4163 = vpack.c.bf16 %v4142, %v4141
    %v4164 = vpack.c.bf16 %v4144, %v4143
    %v4165 = vpack.c.bf16 %v4146, %v4145
    %v4166 = vpack.c.bf16 %v4148, %v4147
    %v4167 = vpack.c.bf16 %v4150, %v4149
    %v4168 = vpack.c.bf16 %v4152, %v4151
    %v4169 = vld [vmem:[%s9] sm:$0xf]
    %v4170 = vld [vmem:[%s9 + $0x4] sm:$0xf]
    %v4171 = vld [vmem:[%s9 + $0x8] sm:$0xf]
    %v4172 = vld [vmem:[%s9 + $0xc] sm:$0xf]
    %v4173 = vld [vmem:[%s9 + $0x10] sm:$0xf]
    %v4174 = vld [vmem:[%s9 + $0x14] sm:$0xf]
    %v4175 = vld [vmem:[%s9 + $0x18] sm:$0xf]
    %v4176 = vld [vmem:[%s9 + $0x1c] sm:$0xf]
    %v4177 = vld [vmem:[%s9 + $0x20] sm:$0xf]
    %v4178 = vld [vmem:[%s9 + $0x24] sm:$0xf]
    %v4179 = vld [vmem:[%s9 + $0x28] sm:$0xf]
    %v4180 = vld [vmem:[%s9 + $0x2c] sm:$0xf]
    %v4181 = vld [vmem:[%s9 + $0x30] sm:$0xf]
    %v4182 = vld [vmem:[%s9 + $0x34] sm:$0xf]
    %v4183 = vld [vmem:[%s9 + $0x38] sm:$0xf]
    %v4184 = vld [vmem:[%s9 + $0x3c] sm:$0xf]
    %v4185 = vld [vmem:[%s10] sm:$0x1]
    %v4187 = vlaneseq
    %v4188 = vshrl.u32 %v4187, 7
    %v4189 = vsub.s32 0, %v4188
    %v4190 = vrot.slane %v4185, %v4189
    %v4208 = vunpack.c.l.b16 %v4169
    %v4209 = vunpack.c.l.b16 %v4170
    %v4210 = vunpack.c.l.b16 %v4171
    %v4211 = vunpack.c.l.b16 %v4172
    %v4212 = vunpack.c.l.b16 %v4173
    %v4213 = vunpack.c.l.b16 %v4174
    %v4214 = vunpack.c.l.b16 %v4175
    %v4215 = vunpack.c.l.b16 %v4176
    %v4216 = vunpack.c.l.b16 %v4177
    %v4217 = vunpack.c.l.b16 %v4178
    %v4218 = vunpack.c.l.b16 %v4179
    %v4219 = vunpack.c.l.b16 %v4180
    %v4220 = vunpack.c.l.b16 %v4181
    %v4221 = vunpack.c.l.b16 %v4182
    %v4222 = vunpack.c.l.b16 %v4183
    %v4223 = vunpack.c.l.b16 %v4184
    %v4224 = vpack.c.b16 %v4209, %v4208
    %v4225 = vpack.c.b16 %v4211, %v4210
    %v4226 = vpack.c.b16 %v4213, %v4212
    %v4227 = vpack.c.b16 %v4215, %v4214
    %v4228 = vpack.c.b16 %v4217, %v4216
    %v4229 = vpack.c.b16 %v4219, %v4218
    %v4230 = vpack.c.b16 %v4221, %v4220
    %v4231 = vpack.c.b16 %v4223, %v4222
    %4240 = vmatprep.subr.bf16.mxu0 0
    %4241 = vmatpush1.bf16.msra.mxu0 %v4224
    %4242 = vmatprep.subr.bf16.mxu0 0
    %4243 = vmatpush1.bf16.msra.mxu0 %v4225
    %4244 = vmatprep.subr.bf16.mxu0 0
    %4245 = vmatpush1.bf16.msra.mxu0 %v4226
    %4246 = vmatprep.subr.bf16.mxu0 0
    %4247 = vmatpush1.bf16.msra.mxu0 %v4227
    %4248 = vmatprep.subr.bf16.mxu0 0
    %4249 = vmatpush1.bf16.msra.mxu0 %v4228
    %4250 = vmatprep.subr.bf16.mxu0 0
    %4251 = vmatpush1.bf16.msra.mxu0 %v4229
    %4252 = vmatprep.subr.bf16.mxu0 0
    %4253 = vmatpush1.bf16.msra.mxu0 %v4230
    %4254 = vmatprep.subr.bf16.mxu0 0
    %4255 = vmatpush1.bf16.msra.mxu0 %v4231
    %4256 = vmatprep.subr.bf16.mxu0 0
    %4257 = vmatpush1.bf16.msra.mxu0 0
    %4258 = vmatprep.subr.bf16.mxu0 0
    %4259 = vmatpush1.bf16.msra.mxu0 0
    %4260 = vmatprep.subr.bf16.mxu0 0
    %4261 = vmatpush1.bf16.msra.mxu0 0
    %4262 = vmatprep.subr.bf16.mxu0 0
    %4263 = vmatpush1.bf16.msra.mxu0 0
    %4264 = vmatprep.subr.bf16.mxu0 0
    %4265 = vmatpush1.bf16.msra.mxu0 0
    %4266 = vmatprep.subr.bf16.mxu0 0
    %4267 = vmatpush1.bf16.msra.mxu0 0
    %4268 = vmatprep.subr.bf16.mxu0 0
    %4269 = vmatpush1.bf16.msra.mxu0 0
    %4270 = vmatprep.subr.bf16.mxu0 0
    %4271 = vmatpush1.bf16.msra.mxu0 0
    %4272 = vmatprep.mubr.bf16.mxu0 0
    %4273 = vmatmul.mubr.bf16.gmra.mrb[0].mxu0 %v4153
    %v4274 = vpop.f32.mrb[0].mxu0
    %v4275 = vadd.f32 %v4190, %v4274
    %v4276 = vpop.f32.mrb[0].mxu0
    %v4277 = vpop.f32.mrb[0].mxu0
    %v4278 = vadd.f32 %v4190, %v4277
    %v4279 = vpop.f32.mrb[0].mxu0
    %4280 = vmatprep.mubr.bf16.mxu0 0
    %4281 = vmatmul.mubr.bf16.gmra.mrb[0].mxu0 %v4154
    %v4282 = vpop.f32.mrb[0].mxu0
    %v4283 = vadd.f32 %v4190, %v4282
    %v4284 = vpop.f32.mrb[0].mxu0
    %v4285 = vpop.f32.mrb[0].mxu0
    %v4286 = vadd.f32 %v4190, %v4285
    %v4287 = vpop.f32.mrb[0].mxu0
    %4288 = vmatprep.mubr.bf16.mxu0 0
    %4289 = vmatmul.mubr.bf16.gmra.mrb[0].mxu0 %v4155
    %v4290 = vpop.f32.mrb[0].mxu0
    %v4291 = vadd.f32 %v4190, %v4290
    %v4292 = vpop.f32.mrb[0].mxu0
    %v4293 = vpop.f32.mrb[0].mxu0
    %v4294 = vadd.f32 %v4190, %v4293
    %v4295 = vpop.f32.mrb[0].mxu0
    %4296 = vmatprep.mubr.bf16.mxu0 0
    %4297 = vmatmul.mubr.bf16.gmra.mrb[0].mxu0 %v4156
    %v4298 = vpop.f32.mrb[0].mxu0
    %v4299 = vadd.f32 %v4190, %v4298
    %v4300 = vpop.f32.mrb[0].mxu0
    %v4301 = vpop.f32.mrb[0].mxu0
    %v4302 = vadd.f32 %v4190, %v4301
    %v4303 = vpop.f32.mrb[0].mxu0
    %4304 = vmatprep.mubr.bf16.mxu0 0
    %4305 = vmatmul.mubr.bf16.gmra.mrb[0].mxu0 %v4157
    %v4306 = vpop.f32.mrb[0].mxu0
    %v4307 = vadd.f32 %v4190, %v4306
    %v4308 = vpop.f32.mrb[0].mxu0
    %v4309 = vpop.f32.mrb[0].mxu0
    %v4310 = vadd.f32 %v4190, %v4309
    %v4311 = vpop.f32.mrb[0].mxu0
    %4312 = vmatprep.mubr.bf16.mxu0 0
    %4313 = vmatmul.mubr.bf16.gmra.mrb[0].mxu0 %v4158
    %v4314 = vpop.f32.mrb[0].mxu0
    %v4315 = vadd.f32 %v4190, %v4314
    %v4316 = vpop.f32.mrb[0].mxu0
    %v4317 = vpop.f32.mrb[0].mxu0
    %v4318 = vadd.f32 %v4190, %v4317
    %v4319 = vpop.f32.mrb[0].mxu0
    %4320 = vmatprep.mubr.bf16.mxu0 0
    %4321 = vmatmul.mubr.bf16.gmra.mrb[0].mxu0 %v4159
    %v4322 = vpop.f32.mrb[0].mxu0
    %v4323 = vadd.f32 %v4190, %v4322
    %v4324 = vpop.f32.mrb[0].mxu0
    %v4325 = vpop.f32.mrb[0].mxu0
    %v4326 = vadd.f32 %v4190, %v4325
    %v4327 = vpop.f32.mrb[0].mxu0
    %4328 = vmatprep.mubr.bf16.mxu0 0
    %4329 = vmatmul.mubr.bf16.gmra.mrb[0].mxu0 %v4160
    %v4330 = vpop.f32.mrb[0].mxu0
    %v4331 = vadd.f32 %v4190, %v4330
    %v4332 = vpop.f32.mrb[0].mxu0
    %v4333 = vpop.f32.mrb[0].mxu0
    %v4334 = vadd.f32 %v4190, %v4333
    %v4335 = vpop.f32.mrb[0].mxu0
    %4336 = vmatprep.mubr.bf16.mxu0 0
    %4337 = vmatmul.mubr.bf16.gmra.mrb[0].mxu0 %v4161
    %v4338 = vpop.f32.mrb[0].mxu0
    %v4339 = vadd.f32 %v4190, %v4338
    %v4340 = vpop.f32.mrb[0].mxu0
    %v4341 = vpop.f32.mrb[0].mxu0
    %v4342 = vadd.f32 %v4190, %v4341
    %v4343 = vpop.f32.mrb[0].mxu0
    %4344 = vmatprep.mubr.bf16.mxu0 0
    %4345 = vmatmul.mubr.bf16.gmra.mrb[0].mxu0 %v4162
    %v4346 = vpop.f32.mrb[0].mxu0
    %v4347 = vadd.f32 %v4190, %v4346
    %v4348 = vpop.f32.mrb[0].mxu0
    %v4349 = vpop.f32.mrb[0].mxu0
    %v4350 = vadd.f32 %v4190, %v4349
    %v4351 = vpop.f32.mrb[0].mxu0
    %4352 = vmatprep.mubr.bf16.mxu0 0
    %4353 = vmatmul.mubr.bf16.gmra.mrb[0].mxu0 %v4163
    %v4354 = vpop.f32.mrb[0].mxu0
    %v4355 = vadd.f32 %v4190, %v4354
    %v4356 = vpop.f32.mrb[0].mxu0
    %v4357 = vpop.f32.mrb[0].mxu0
    %v4358 = vadd.f32 %v4190, %v4357
    %v4359 = vpop.f32.mrb[0].mxu0
    %4360 = vmatprep.mubr.bf16.mxu0 0
    %4361 = vmatmul.mubr.bf16.gmra.mrb[0].mxu0 %v4164
    %v4362 = vpop.f32.mrb[0].mxu0
    %v4363 = vadd.f32 %v4190, %v4362
    %v4364 = vpop.f32.mrb[0].mxu0
    %v4365 = vpop.f32.mrb[0].mxu0
    %v4366 = vadd.f32 %v4190, %v4365
    %v4367 = vpop.f32.mrb[0].mxu0
    %4368 = vmatprep.mubr.bf16.mxu0 0
    %4369 = vmatmul.mubr.bf16.gmra.mrb[0].mxu0 %v4165
    %v4370 = vpop.f32.mrb[0].mxu0
    %v4371 = vadd.f32 %v4190, %v4370
    %v4372 = vpop.f32.mrb[0].mxu0
    %v4373 = vpop.f32.mrb[0].mxu0
    %v4374 = vadd.f32 %v4190, %v4373
    %v4375 = vpop.f32.mrb[0].mxu0
    %4376 = vmatprep.mubr.bf16.mxu0 0
    %4377 = vmatmul.mubr.bf16.gmra.mrb[0].mxu0 %v4166
    %v4378 = vpop.f32.mrb[0].mxu0
    %v4379 = vadd.f32 %v4190, %v4378
    %v4380 = vpop.f32.mrb[0].mxu0
    %v4381 = vpop.f32.mrb[0].mxu0
    %v4382 = vadd.f32 %v4190, %v4381
    %v4383 = vpop.f32.mrb[0].mxu0
    %4384 = vmatprep.mubr.bf16.mxu0 0
    %4385 = vmatmul.mubr.bf16.gmra.mrb[0].mxu0 %v4167
    %v4386 = vpop.f32.mrb[0].mxu0
    %v4387 = vadd.f32 %v4190, %v4386
    %v4388 = vpop.f32.mrb[0].mxu0
    %v4389 = vpop.f32.mrb[0].mxu0
    %v4390 = vadd.f32 %v4190, %v4389
    %v4391 = vpop.f32.mrb[0].mxu0
    %4392 = vmatprep.mubr.bf16.mxu0 0
    %4393 = vmatmul.mubr.bf16.gmra.mrb[0].mxu0 %v4168
    %v4394 = vpop.f32.mrb[0].mxu0
    %v4395 = vadd.f32 %v4190, %v4394
    %v4396 = vpop.f32.mrb[0].mxu0
    %v4397 = vpop.f32.mrb[0].mxu0
    %v4398 = vadd.f32 %v4190, %v4397
    %v4399 = vpop.f32.mrb[0].mxu0
    %4400 = vdwg.mxu0
    %4401 = vst [vmem:[#allocation5] sm:$0xff] %v4275
    %4402 = vst [vmem:[#allocation5 + $0x8] sm:$0xff] %v4278
    %4403 = vst [vmem:[#allocation5 + $0x10] sm:$0xff] %v4283
    %4404 = vst [vmem:[#allocation5 + $0x18] sm:$0xff] %v4286
    %4405 = vst [vmem:[#allocation5 + $0x20] sm:$0xff] %v4291
    %4406 = vst [vmem:[#allocation5 + $0x28] sm:$0xff] %v4294
    %4407 = vst [vmem:[#allocation5 + $0x30] sm:$0xff] %v4299
    %4408 = vst [vmem:[#allocation5 + $0x38] sm:$0xff] %v4302
    %4409 = vst [vmem:[#allocation5 + $0x40] sm:$0xff] %v4307
    %4410 = vst [vmem:[#allocation5 + $0x48] sm:$0xff] %v4310
    %4411 = vst [vmem:[#allocation5 + $0x50] sm:$0xff] %v4315
    %4412 = vst [vmem:[#allocation5 + $0x58] sm:$0xff] %v4318
    %4413 = vst [vmem:[#allocation5 + $0x60] sm:$0xff] %v4323
    %4414 = vst [vmem:[#allocation5 + $0x68] sm:$0xff] %v4326
    %4415 = vst [vmem:[#allocation5 + $0x70] sm:$0xff] %v4331
    %4416 = vst [vmem:[#allocation5 + $0x78] sm:$0xff] %v4334
    %4417 = vst [vmem:[#allocation5 + $0x80] sm:$0xff] %v4339
    %4418 = vst [vmem:[#allocation5 + $0x88] sm:$0xff] %v4342
    %4419 = vst [vmem:[#allocation5 + $0x90] sm:$0xff] %v4347
    %4420 = vst [vmem:[#allocation5 + $0x98] sm:$0xff] %v4350
    %4421 = vst [vmem:[#allocation5 + $0xa0] sm:$0xff] %v4355
    %4422 = vst [vmem:[#allocation5 + $0xa8] sm:$0xff] %v4358
    %4423 = vst [vmem:[#allocation5 + $0xb0] sm:$0xff] %v4363
    %4424 = vst [vmem:[#allocation5 + $0xb8] sm:$0xff] %v4366
    %4425 = vst [vmem:[#allocation5 + $0xc0] sm:$0xff] %v4371
    %4426 = vst [vmem:[#allocation5 + $0xc8] sm:$0xff] %v4374
    %4427 = vst [vmem:[#allocation5 + $0xd0] sm:$0xff] %v4379
    %4428 = vst [vmem:[#allocation5 + $0xd8] sm:$0xff] %v4382
    %4429 = vst [vmem:[#allocation5 + $0xe0] sm:$0xff] %v4387
    %4430 = vst [vmem:[#allocation5 + $0xe8] sm:$0xff] %v4390
    %4431 = vst [vmem:[#allocation5 + $0xf0] sm:$0xff] %v4395
    %4432 = vst [vmem:[#allocation5 + $0xf8] sm:$0xff] %v4398
    // Predicated region
    $region50: #{tpu_custom_call.1} parent=1 // pred_check
      _
    $region51: #{tpu_custom_call.1} parent=1 // pred_check_branch
      %4434 = sbr.rel (0) target = $region53
    $region52: #{tpu_custom_call.1} parent=1 // pred_region
      %s4436 = ssub.s32 4096, 4096
      %4437 = vsyncadd [#allocation4], %s4436
      %s4438 = sshll.u32 [#allocation5], 4
      %s4439 = int_to_ptr.vmem [resolvable:$true] %s4438
      %4444 = dma.vmem_to_hbm [thread:$0]  %s4439, 4096, %s11, [#allocation4], 128, 128, 8
    $region53: #{tpu_custom_call.1} parent=1 // pred_fallthru
      _
    // Predicated region
    $region54: #{tpu_custom_call.1} parent=1 // pred_check
      _
    $region55: #{tpu_custom_call.1} parent=1 // pred_check_branch
      %4446 = sbr.rel (0) target = $region57
    $region56: #{tpu_custom_call.1} parent=1 // pred_region
      %4447 = dma.done [#allocation4], 4096
    $region57: #{tpu_custom_call.1} parent=1 // pred_fallthru
      _
    %4448 = vsyncpa [#allocation3], 1
    %4449 = vsyncpa [#allocation4], 1

</llo_original>
